<compile_context>
chip_gen: v7x
topology: tpu7x:2x2x1
jax: 0.10.0
libtpu: 0.0.40
codegen_flags: <defaults>
</compile_context>

<pallas_src>
import functools

import jax
import jax.numpy as jnp
from jax.experimental import pallas as pl
from jax.experimental.pallas import tpu as pltpu


def _make_conv_bn_relu_kernel(kh, kw, stride, dilation, oh, ow, c, o_pad):
    ohw = oh * ow

    def kernel(x_ref, w_ref, shift_ref, o_ref):
        # x_ref:     (Hp, Wp, C)        padded NHWC input, one batch element (bf16)
        # w_ref:     (KH*KW, C, O_pad)  conv weights with BN scale folded (bf16)
        # shift_ref: (1, O_pad)         BN shift (f32)
        # o_ref:     (O_pad, OH*OW)     channel-major (NCHW-flat) output (f32)
        acc = jnp.zeros((ohw, o_pad), jnp.float32)
        for r in range(kh):
            for s in range(kw):
                h0 = r * dilation
                w0 = s * dilation
                if stride == 1:
                    hs = pl.ds(h0, oh)
                    ws = pl.ds(w0, ow)
                else:
                    hs = pl.ds(h0, oh, stride)
                    ws = pl.ds(w0, ow, stride)
                patch = x_ref[hs, ws, :].reshape(ohw, c)            # (OH*OW, C)
                acc = acc + jnp.dot(patch, w_ref[r * kw + s],
                                    preferred_element_type=jnp.float32)
        y = jnp.maximum(acc + shift_ref[...], 0.0)                  # BN shift + ReLU
        o_ref[...] = y.T.astype(o_ref.dtype)                        # -> channel-major

    return kernel


@functools.partial(jax.jit, static_argnames=("stride", "padding", "dilation"))
def basic_conv2d(x, weight, gamma, beta, running_mean, running_var,
                 stride=1, padding=0, dilation=1, eps=1e-5):
    """Eval-mode BasicConv2d.forward: ReLU(BN(Conv2d(x, bias=False))).  x: NCHW f32."""
    n, c, h, w = x.shape
    o, c_w, kh, kw = weight.shape
    assert c_w == c
    oh = (h + 2 * padding - dilation * (kh - 1) - 1) // stride + 1
    ow = (w + 2 * padding - dilation * (kw - 1) - 1) // stride + 1
    hp, wp = h + 2 * padding, w + 2 * padding
    o_pad = ((o + 127) // 128) * 128

    f32 = jnp.float32
    # Fold BatchNorm (eval) into per-channel scale/shift; scale goes into the weights.
    inv_std = jax.lax.rsqrt(running_var.astype(f32) + eps)
    scale = gamma.astype(f32) * inv_std                                   # (O,)
    shift = beta.astype(f32) - running_mean.astype(f32) * scale           # (O,)

    # Weights (O, C, KH, KW) -> (KH*KW, C, O_pad), BN scale folded, bf16 for the MXU.
    w_mat = jnp.transpose(weight.astype(f32), (2, 3, 1, 0)).reshape(kh * kw, c, o)
    w_mat = w_mat * scale[None, None, :]
    w_mat = jnp.pad(w_mat, ((0, 0), (0, 0), (0, o_pad - o))).astype(jnp.bfloat16)
    shift_p = jnp.pad(shift, (0, o_pad - o)).reshape(1, o_pad)

    # Activations: NCHW -> NHWC, spatial zero-pad, bf16 (fused into one XLA pass).
    xp = jnp.transpose(x, (0, 2, 3, 1))
    xp = jnp.pad(xp, ((0, 0), (padding, padding), (padding, padding), (0, 0)))
    xp = xp.astype(jnp.bfloat16)

    kernel = _make_conv_bn_relu_kernel(kh, kw, stride, dilation, oh, ow, c, o_pad)

    out = pl.pallas_call(
        kernel,
        out_shape=jax.ShapeDtypeStruct((n, o_pad, oh * ow), jnp.float32),
        grid=(n,),
        in_specs=[
            pl.BlockSpec((None, hp, wp, c), lambda i: (i, 0, 0, 0)),      # padded NHWC image
            pl.BlockSpec((kh * kw, c, o_pad), lambda i: (0, 0, 0)),       # folded weights
            pl.BlockSpec((1, o_pad), lambda i: (0, 0)),                   # BN shift
        ],
        out_specs=pl.BlockSpec((None, o_pad, oh * ow), lambda i: (i, 0, 0)),
        compiler_params=pltpu.CompilerParams(
            dimension_semantics=("parallel",),
            vmem_limit_bytes=64 * 1024 * 1024,
        ),
    )(xp, w_mat, shift_p)

    # Already channel-major: (N, O_pad, OH*OW) -> slice padded channels -> NCHW.
    return out[:, :o, :].reshape(n, o, oh, ow)


if __name__ == "__main__":
    # BasicConv2d(in_planes=4, out_planes=8, kernel_size=3, stride=1, padding=1)
    key = jax.random.PRNGKey(0)
    k_x, k_w, k_b, k_m, k_v = jax.random.split(key, 5)

    N, C, H, W = 2, 4, 16, 16
    O, KH, KW = 8, 3, 3
    stride, padding, dilation = 1, 1, 1

    x = jax.random.normal(k_x, (N, C, H, W), dtype=jnp.float32)
    weight = jax.random.normal(k_w, (O, C, KH, KW), dtype=jnp.float32) * 0.1
    gamma = jnp.ones((O,), jnp.float32)
    beta = jax.random.normal(k_b, (O,), dtype=jnp.float32) * 0.05
    running_mean = jax.random.normal(k_m, (O,), dtype=jnp.float32) * 0.01
    running_var = jnp.abs(jax.random.normal(k_v, (O,), dtype=jnp.float32)) * 0.1 + 1.0
    # TODO(synk): training-mode BatchNorm (batch statistics + running-stat update)
    # is not implemented; eval-mode (running stats) semantics are used.

    y = basic_conv2d(x, weight, gamma, beta, running_mean, running_var,
                     stride=stride, padding=padding, dilation=dilation)
    jax.block_until_ready(y)
    assert y.shape == (N, O, H, W), y.shape

    # Pure-JAX reference (f32 conv) for a sanity check; tolerance covers bf16 inputs.
    ref = jax.lax.conv_general_dilated(
        x, weight, window_strides=(stride, stride),
        padding=[(padding, padding), (padding, padding)],
        rhs_dilation=(dilation, dilation),
        dimension_numbers=("NCHW", "OIHW", "NCHW"),
        precision=jax.lax.Precision.HIGHEST)
    inv_std = jax.lax.rsqrt(running_var + 1e-5)
    ref = (ref - running_mean[None, :, None, None]) * (gamma * inv_std)[None, :, None, None] \
          + beta[None, :, None, None]
    ref = jnp.maximum(ref, 0.0)
    err = float(jnp.max(jnp.abs(y - ref)))
    assert err < 5e-2, f"max abs err {err}"
    print("KERNEL_OK")
</pallas_src>

<mosaic_0001>
module attributes {stable_mosaic.version = 11 : i64} {
  func.func @kernel(%arg0: i32, %arg1: memref<1x18x18x4xbf16, #tpu.memory_space<vmem>>, %arg2: memref<9x4x128xbf16, #tpu.memory_space<vmem>>, %arg3: memref<1x128xf32, #tpu.memory_space<vmem>>, %arg4: memref<1x128x256xf32, #tpu.memory_space<vmem>>) attributes {dimension_semantics = [#tpu.dimension_semantics<parallel>], iteration_bounds = array<i64: 2>, scalar_prefetch = 0 : i64, scratch_operands = 0 : i64, tpu.core_type = #tpu.core_type<tc>, window_params = [{transform_indices = @transform_0, window_bounds = array<i64: 1, 18, 18, 4>}, {pipeline_mode = #tpu.pipeline_mode<synchronous>, transform_indices = @transform_1, window_bounds = array<i64: 9, 4, 128>}, {pipeline_mode = #tpu.pipeline_mode<synchronous>, transform_indices = @transform_2, window_bounds = array<i64: 1, 128>}, {transform_indices = @transform_3, window_bounds = array<i64: 1, 128, 256>}]} {
    %cst = arith.constant 0.000000e+00 : f32
    %0 = vector.broadcast %cst : f32 to vector<256x128xf32>
    %c0 = arith.constant 0 : index
    %c0_0 = arith.constant 0 : index
    %c0_1 = arith.constant 0 : index
    %c0_2 = arith.constant 0 : index
    %1 = vector.load %arg1[%c0, %c0_0, %c0_1, %c0_2] : memref<1x18x18x4xbf16, #tpu.memory_space<vmem>>, vector<1x16x16x4xbf16>
    %2 = vector.shape_cast %1 : vector<1x16x16x4xbf16> to vector<16x16x4xbf16>
    %3 = vector.shape_cast %2 : vector<16x16x4xbf16> to vector<256x4xbf16>
    %c0_3 = arith.constant 0 : index
    %c0_4 = arith.constant 0 : index
    %c0_5 = arith.constant 0 : index
    %4 = vector.load %arg2[%c0_3, %c0_4, %c0_5] : memref<9x4x128xbf16, #tpu.memory_space<vmem>>, vector<1x4x128xbf16>
    %5 = vector.shape_cast %4 : vector<1x4x128xbf16> to vector<4x128xbf16>
    %cst_6 = arith.constant dense<0.000000e+00> : vector<256x128xf32>
    %6 = tpu.matmul %3, %5, %cst_6 {dimension_numbers = #tpu.dot_dimension_numbers<[1], [0], [0], [1], [0, 0, 1, 1], [], []>} : vector<256x4xbf16>, vector<4x128xbf16>, vector<256x128xf32> -> vector<256x128xf32>
    %7 = arith.addf %0, %6 : vector<256x128xf32>
    %c0_7 = arith.constant 0 : index
    %c0_8 = arith.constant 0 : index
    %c1 = arith.constant 1 : index
    %c0_9 = arith.constant 0 : index
    %8 = vector.load %arg1[%c0_7, %c0_8, %c1, %c0_9] : memref<1x18x18x4xbf16, #tpu.memory_space<vmem>>, vector<1x16x16x4xbf16>
    %9 = vector.shape_cast %8 : vector<1x16x16x4xbf16> to vector<16x16x4xbf16>
    %10 = vector.shape_cast %9 : vector<16x16x4xbf16> to vector<256x4xbf16>
    %c1_10 = arith.constant 1 : index
    %c0_11 = arith.constant 0 : index
    %c0_12 = arith.constant 0 : index
    %11 = vector.load %arg2[%c1_10, %c0_11, %c0_12] : memref<9x4x128xbf16, #tpu.memory_space<vmem>>, vector<1x4x128xbf16>
    %12 = vector.shape_cast %11 : vector<1x4x128xbf16> to vector<4x128xbf16>
    %cst_13 = arith.constant dense<0.000000e+00> : vector<256x128xf32>
    %13 = tpu.matmul %10, %12, %cst_13 {dimension_numbers = #tpu.dot_dimension_numbers<[1], [0], [0], [1], [0, 0, 1, 1], [], []>} : vector<256x4xbf16>, vector<4x128xbf16>, vector<256x128xf32> -> vector<256x128xf32>
    %14 = arith.addf %7, %13 : vector<256x128xf32>
    %c0_14 = arith.constant 0 : index
    %c0_15 = arith.constant 0 : index
    %c2 = arith.constant 2 : index
    %c0_16 = arith.constant 0 : index
    %15 = vector.load %arg1[%c0_14, %c0_15, %c2, %c0_16] : memref<1x18x18x4xbf16, #tpu.memory_space<vmem>>, vector<1x16x16x4xbf16>
    %16 = vector.shape_cast %15 : vector<1x16x16x4xbf16> to vector<16x16x4xbf16>
    %17 = vector.shape_cast %16 : vector<16x16x4xbf16> to vector<256x4xbf16>
    %c2_17 = arith.constant 2 : index
    %c0_18 = arith.constant 0 : index
    %c0_19 = arith.constant 0 : index
    %18 = vector.load %arg2[%c2_17, %c0_18, %c0_19] : memref<9x4x128xbf16, #tpu.memory_space<vmem>>, vector<1x4x128xbf16>
    %19 = vector.shape_cast %18 : vector<1x4x128xbf16> to vector<4x128xbf16>
    %cst_20 = arith.constant dense<0.000000e+00> : vector<256x128xf32>
    %20 = tpu.matmul %17, %19, %cst_20 {dimension_numbers = #tpu.dot_dimension_numbers<[1], [0], [0], [1], [0, 0, 1, 1], [], []>} : vector<256x4xbf16>, vector<4x128xbf16>, vector<256x128xf32> -> vector<256x128xf32>
    %21 = arith.addf %14, %20 : vector<256x128xf32>
    %c0_21 = arith.constant 0 : index
    %c1_22 = arith.constant 1 : index
    %c0_23 = arith.constant 0 : index
    %c0_24 = arith.constant 0 : index
    %22 = vector.load %arg1[%c0_21, %c1_22, %c0_23, %c0_24] : memref<1x18x18x4xbf16, #tpu.memory_space<vmem>>, vector<1x16x16x4xbf16>
    %23 = vector.shape_cast %22 : vector<1x16x16x4xbf16> to vector<16x16x4xbf16>
    %24 = vector.shape_cast %23 : vector<16x16x4xbf16> to vector<256x4xbf16>
    %c3 = arith.constant 3 : index
    %c0_25 = arith.constant 0 : index
    %c0_26 = arith.constant 0 : index
    %25 = vector.load %arg2[%c3, %c0_25, %c0_26] : memref<9x4x128xbf16, #tpu.memory_space<vmem>>, vector<1x4x128xbf16>
    %26 = vector.shape_cast %25 : vector<1x4x128xbf16> to vector<4x128xbf16>
    %cst_27 = arith.constant dense<0.000000e+00> : vector<256x128xf32>
    %27 = tpu.matmul %24, %26, %cst_27 {dimension_numbers = #tpu.dot_dimension_numbers<[1], [0], [0], [1], [0, 0, 1, 1], [], []>} : vector<256x4xbf16>, vector<4x128xbf16>, vector<256x128xf32> -> vector<256x128xf32>
    %28 = arith.addf %21, %27 : vector<256x128xf32>
    %c0_28 = arith.constant 0 : index
    %c1_29 = arith.constant 1 : index
    %c1_30 = arith.constant 1 : index
    %c0_31 = arith.constant 0 : index
    %29 = vector.load %arg1[%c0_28, %c1_29, %c1_30, %c0_31] : memref<1x18x18x4xbf16, #tpu.memory_space<vmem>>, vector<1x16x16x4xbf16>
    %30 = vector.shape_cast %29 : vector<1x16x16x4xbf16> to vector<16x16x4xbf16>
    %31 = vector.shape_cast %30 : vector<16x16x4xbf16> to vector<256x4xbf16>
    %c4 = arith.constant 4 : index
    %c0_32 = arith.constant 0 : index
    %c0_33 = arith.constant 0 : index
    %32 = vector.load %arg2[%c4, %c0_32, %c0_33] : memref<9x4x128xbf16, #tpu.memory_space<vmem>>, vector<1x4x128xbf16>
    %33 = vector.shape_cast %32 : vector<1x4x128xbf16> to vector<4x128xbf16>
    %cst_34 = arith.constant dense<0.000000e+00> : vector<256x128xf32>
    %34 = tpu.matmul %31, %33, %cst_34 {dimension_numbers = #tpu.dot_dimension_numbers<[1], [0], [0], [1], [0, 0, 1, 1], [], []>} : vector<256x4xbf16>, vector<4x128xbf16>, vector<256x128xf32> -> vector<256x128xf32>
    %35 = arith.addf %28, %34 : vector<256x128xf32>
    %c0_35 = arith.constant 0 : index
    %c1_36 = arith.constant 1 : index
    %c2_37 = arith.constant 2 : index
    %c0_38 = arith.constant 0 : index
    %36 = vector.load %arg1[%c0_35, %c1_36, %c2_37, %c0_38] : memref<1x18x18x4xbf16, #tpu.memory_space<vmem>>, vector<1x16x16x4xbf16>
    %37 = vector.shape_cast %36 : vector<1x16x16x4xbf16> to vector<16x16x4xbf16>
    %38 = vector.shape_cast %37 : vector<16x16x4xbf16> to vector<256x4xbf16>
    %c5 = arith.constant 5 : index
    %c0_39 = arith.constant 0 : index
    %c0_40 = arith.constant 0 : index
    %39 = vector.load %arg2[%c5, %c0_39, %c0_40] : memref<9x4x128xbf16, #tpu.memory_space<vmem>>, vector<1x4x128xbf16>
    %40 = vector.shape_cast %39 : vector<1x4x128xbf16> to vector<4x128xbf16>
    %cst_41 = arith.constant dense<0.000000e+00> : vector<256x128xf32>
    %41 = tpu.matmul %38, %40, %cst_41 {dimension_numbers = #tpu.dot_dimension_numbers<[1], [0], [0], [1], [0, 0, 1, 1], [], []>} : vector<256x4xbf16>, vector<4x128xbf16>, vector<256x128xf32> -> vector<256x128xf32>
    %42 = arith.addf %35, %41 : vector<256x128xf32>
    %c0_42 = arith.constant 0 : index
    %c2_43 = arith.constant 2 : index
    %c0_44 = arith.constant 0 : index
    %c0_45 = arith.constant 0 : index
    %43 = vector.load %arg1[%c0_42, %c2_43, %c0_44, %c0_45] : memref<1x18x18x4xbf16, #tpu.memory_space<vmem>>, vector<1x16x16x4xbf16>
    %44 = vector.shape_cast %43 : vector<1x16x16x4xbf16> to vector<16x16x4xbf16>
    %45 = vector.shape_cast %44 : vector<16x16x4xbf16> to vector<256x4xbf16>
    %c6 = arith.constant 6 : index
    %c0_46 = arith.constant 0 : index
    %c0_47 = arith.constant 0 : index
    %46 = vector.load %arg2[%c6, %c0_46, %c0_47] : memref<9x4x128xbf16, #tpu.memory_space<vmem>>, vector<1x4x128xbf16>
    %47 = vector.shape_cast %46 : vector<1x4x128xbf16> to vector<4x128xbf16>
    %cst_48 = arith.constant dense<0.000000e+00> : vector<256x128xf32>
    %48 = tpu.matmul %45, %47, %cst_48 {dimension_numbers = #tpu.dot_dimension_numbers<[1], [0], [0], [1], [0, 0, 1, 1], [], []>} : vector<256x4xbf16>, vector<4x128xbf16>, vector<256x128xf32> -> vector<256x128xf32>
    %49 = arith.addf %42, %48 : vector<256x128xf32>
    %c0_49 = arith.constant 0 : index
    %c2_50 = arith.constant 2 : index
    %c1_51 = arith.constant 1 : index
    %c0_52 = arith.constant 0 : index
    %50 = vector.load %arg1[%c0_49, %c2_50, %c1_51, %c0_52] : memref<1x18x18x4xbf16, #tpu.memory_space<vmem>>, vector<1x16x16x4xbf16>
    %51 = vector.shape_cast %50 : vector<1x16x16x4xbf16> to vector<16x16x4xbf16>
    %52 = vector.shape_cast %51 : vector<16x16x4xbf16> to vector<256x4xbf16>
    %c7 = arith.constant 7 : index
    %c0_53 = arith.constant 0 : index
    %c0_54 = arith.constant 0 : index
    %53 = vector.load %arg2[%c7, %c0_53, %c0_54] : memref<9x4x128xbf16, #tpu.memory_space<vmem>>, vector<1x4x128xbf16>
    %54 = vector.shape_cast %53 : vector<1x4x128xbf16> to vector<4x128xbf16>
    %cst_55 = arith.constant dense<0.000000e+00> : vector<256x128xf32>
    %55 = tpu.matmul %52, %54, %cst_55 {dimension_numbers = #tpu.dot_dimension_numbers<[1], [0], [0], [1], [0, 0, 1, 1], [], []>} : vector<256x4xbf16>, vector<4x128xbf16>, vector<256x128xf32> -> vector<256x128xf32>
    %56 = arith.addf %49, %55 : vector<256x128xf32>
    %c0_56 = arith.constant 0 : index
    %c2_57 = arith.constant 2 : index
    %c2_58 = arith.constant 2 : index
    %c0_59 = arith.constant 0 : index
    %57 = vector.load %arg1[%c0_56, %c2_57, %c2_58, %c0_59] : memref<1x18x18x4xbf16, #tpu.memory_space<vmem>>, vector<1x16x16x4xbf16>
    %58 = vector.shape_cast %57 : vector<1x16x16x4xbf16> to vector<16x16x4xbf16>
    %59 = vector.shape_cast %58 : vector<16x16x4xbf16> to vector<256x4xbf16>
    %c8 = arith.constant 8 : index
    %c0_60 = arith.constant 0 : index
    %c0_61 = arith.constant 0 : index
    %60 = vector.load %arg2[%c8, %c0_60, %c0_61] : memref<9x4x128xbf16, #tpu.memory_space<vmem>>, vector<1x4x128xbf16>
    %61 = vector.shape_cast %60 : vector<1x4x128xbf16> to vector<4x128xbf16>
    %cst_62 = arith.constant dense<0.000000e+00> : vector<256x128xf32>
    %62 = tpu.matmul %59, %61, %cst_62 {dimension_numbers = #tpu.dot_dimension_numbers<[1], [0], [0], [1], [0, 0, 1, 1], [], []>} : vector<256x4xbf16>, vector<4x128xbf16>, vector<256x128xf32> -> vector<256x128xf32>
    %63 = arith.addf %56, %62 : vector<256x128xf32>
    %c0_63 = arith.constant 0 : index
    %c0_64 = arith.constant 0 : index
    %64 = vector.load %arg3[%c0_63, %c0_64] : memref<1x128xf32, #tpu.memory_space<vmem>>, vector<1x128xf32>
    %65 = vector.broadcast %64 : vector<1x128xf32> to vector<256x128xf32>
    %66 = arith.addf %63, %65 : vector<256x128xf32>
    %cst_65 = arith.constant 0.000000e+00 : f32
    %67 = vector.broadcast %cst_65 : f32 to vector<256x128xf32>
    %68 = arith.maximumf %66, %67 : vector<256x128xf32>
    %69 = tpu.transpose %68, [1, 0] : vector<256x128xf32> -> vector<128x256xf32>
    %c0_66 = arith.constant 0 : index
    %c0_67 = arith.constant 0 : index
    %c0_68 = arith.constant 0 : index
    %70 = vector.load %arg4[%c0_66, %c0_67, %c0_68] : memref<1x128x256xf32, #tpu.memory_space<vmem>>, vector<1x128x256xf32>
    %71 = vector.shape_cast %70 : vector<1x128x256xf32> to vector<128x256xf32>
    %72 = vector.shape_cast %69 : vector<128x256xf32> to vector<1x128x256xf32>
    tpu.vector_store %arg4[%c0_66, %c0_67, %c0_68], %72 {strides = array<i32>} : memref<1x128x256xf32, #tpu.memory_space<vmem>>, vector<1x128x256xf32>,
    return
  }
  func.func @transform_0(%arg0: i32) -> (i32, i32, i32, i32) {
    %c0_i32 = arith.constant 0 : i32
    %c0_i32_0 = arith.constant 0 : i32
    %c0_i32_1 = arith.constant 0 : i32
    %c0_i32_2 = arith.constant 0 : i32
    return %arg0, %c0_i32, %c0_i32_0, %c0_i32_1 : i32, i32, i32, i32
  }
  func.func @transform_1(%arg0: i32) -> (i32, i32, i32) {
    %c0_i32 = arith.constant 0 : i32
    %c0_i32_0 = arith.constant 0 : i32
    %c0_i32_1 = arith.constant 0 : i32
    %c0_i32_2 = arith.constant 0 : i32
    return %c0_i32, %c0_i32_0, %c0_i32_1 : i32, i32, i32
  }
  func.func @transform_2(%arg0: i32) -> (i32, i32) {
    %c0_i32 = arith.constant 0 : i32
    %c0_i32_0 = arith.constant 0 : i32
    %c0_i32_1 = arith.constant 0 : i32
    return %c0_i32, %c0_i32_0 : i32, i32
  }
  func.func @transform_3(%arg0: i32) -> (i32, i32, i32) {
    %c0_i32 = arith.constant 0 : i32
    %c0_i32_0 = arith.constant 0 : i32
    %c0_i32_1 = arith.constant 0 : i32
    return %arg0, %c0_i32, %c0_i32_0 : i32, i32, i32
  }
}

</mosaic_0001>

<llo_original>
// kernel: basic_conv2d.1
$region0: #{basic_conv2d.1}
  #allocation0 [shape = 'u32[]', space=smem, size = 0x4, offset = 0x4, fixed_abs, tag = 'smem constant byte address 0x4 - core index']
  #allocation1 [shape = 'u32[144,128]{1,0:T(1,128)}', space=vmem, size = 0x12000, scoped, tag = 'internal scratch']
  %s0 = inlined_call_operand.hbm [shape: bf16[2,18,18,4], index: 0, kind: input, shape index: {}]
  %s1 = inlined_call_operand.hbm [shape: bf16[9,4,128], index: 1, kind: input, shape index: {}]
  %s2 = inlined_call_operand.hbm [shape: f32[1,128], index: 2, kind: input, shape index: {}]
  %s3 = inlined_call_operand.hbm [shape: f32[2,128,256], index: 3, kind: output, shape index: {}]
  %s4 = sld [smem:[#allocation0]]
  $region57: #{basic_conv2d.1} parent=0
    _
  %s6 = ssub.s32 1, %s4
  %s7 = scalar_select 0, %s6, %s4
  $region1: #{basic_conv2d.1} parent=0
    #allocation2 [shape = 'u8[221184]{0}', space=vmem, size = 0x36000, scoped, tag = 'input window, operand 0']
    #allocation3 [shape = 's32[2]{0}', space=sflag, size = 0x8, scoped, tag = 'scoped memory for basic_conv2d.1']
    #allocation4 [shape = 's32[2]{0}', space=sflag, size = 0x8, scoped, tag = 'scoped memory for basic_conv2d.1']
    #allocation5 [shape = 'u8[9216]{0}', space=vmem, size = 0x2400, scoped, tag = 'input window, operand 1, single buffered']
    #allocation6 [shape = 's32[1]{0}', space=sflag, size = 0x4, scoped, tag = 'scoped memory for basic_conv2d.1']
    #allocation7 [shape = 'u8[512]{0}', space=vmem, size = 0x400, scoped, tag = 'input window, operand 2, single buffered']
    #allocation8 [shape = 'u8[262144]{0}', space=vmem, size = 0x40000, scoped, tag = 'output window, operand 0']
    %8 = vsyncpa [#allocation3], 0
    %s9 = scalar_lea.sflag [#allocation3], 1
    %10 = vsyncpa %s9, 0
    %11 = vsyncpa [#allocation6], 0
    %12 = vsyncpa [#allocation4], 0
    %s13 = scalar_lea.sflag [#allocation4], 1
    %14 = vsyncpa %s13, 0
    loop: start=0, step=1, limit=4
    $region2: #{basic_conv2d.1} parent=1 // loop_pre_header
      _
    $region3: #{basic_conv2d.1} parent=1 // loop_header
      %s16 = sphi 0, %s20
      %p17 = scmp.ge.s32.totalorder %s16, 4
      %s26 = sphi 0, %s28
      %s29 = sphi 0, %s26
      %s30 = sphi 0, %s29
      %s46 = sphi 0, %s30
      %s50 = sphi 0, %s50
      %s52 = sphi 0, %s50
      %s53 = sphi 0, %s52
      %s67 = sphi 0, %s53
      %s71 = sphi 0, %s71
      %s73 = sphi 0, %s71
      %s74 = sphi 0, %s73
      %s88 = sphi 0, %s74
      %s94 = sphi 0, %s96
      %s97 = sphi 0, %s94
      %s98 = sphi 0, %s97
      %s114 = sphi 0, %s98
    $region4: #{basic_conv2d.1} parent=1 // loop_header_branch
      %19 = sbr.rel (%p17) target = $region8
    $region5: #{basic_conv2d.1} parent=1 // loop_body
      %s21 = ssub.s32 %s16, 1
      %s22 = ssub.s32 %s16, 2
      %s23 = sadd.s32 %s16, 1
      %s24 = ssub.s32 %s16, %s23
      %p25 = scmp.eq.s32.totalorder %s24, 0
      %s27 = sadd.s32 %s26, 1
      %s28 = scalar_select %p25, %s26, %s27
      %p31 = pneg %p25
      %p32 = scmp.eq.s32.totalorder %s16, 1
      %p33 = por %p31, %p32
      %p34 = scmp.ne.s32.totalorder %s26, %s29
      %p35 = scmp.eq.s32.totalorder %s16, 0
      %p36 = por %p34, %p35
      %p37 = scmp.ne.s32.totalorder %s26, %s29
      %p38 = scmp.eq.s32.totalorder %s21, 1
      %p39 = por %p37, %p38
      %p40 = scmp.ne.s32.totalorder %s29, %s30
      %p41 = scmp.eq.s32.totalorder %s21, 0
      %p42 = por %p40, %p41
      %p43 = scmp.ne.s32.totalorder %s29, %s30
      %p44 = scmp.eq.s32.totalorder %s22, 1
      %p45 = por %p43, %p44
      %p47 = scmp.ne.s32.totalorder %s30, %s46
      %p48 = scmp.eq.s32.totalorder %s22, 0
      %p49 = por %p47, %p48
      %s51 = sadd.s32 %s50, 1
      %p54 = scmp.eq.s32.totalorder %s16, 1
      %p55 = scmp.ne.s32.totalorder %s50, %s52
      %p56 = scmp.eq.s32.totalorder %s16, 0
      %p57 = por %p55, %p56
      %p58 = scmp.ne.s32.totalorder %s50, %s52
      %p59 = scmp.eq.s32.totalorder %s21, 1
      %p60 = por %p58, %p59
      %p61 = scmp.ne.s32.totalorder %s52, %s53
      %p62 = scmp.eq.s32.totalorder %s21, 0
      %p63 = por %p61, %p62
      %p64 = scmp.ne.s32.totalorder %s52, %s53
      %p65 = scmp.eq.s32.totalorder %s22, 1
      %p66 = por %p64, %p65
      %p68 = scmp.ne.s32.totalorder %s53, %s67
      %p69 = scmp.eq.s32.totalorder %s22, 0
      %p70 = por %p68, %p69
      %s72 = sadd.s32 %s71, 1
      %p75 = scmp.eq.s32.totalorder %s16, 1
      %p76 = scmp.ne.s32.totalorder %s71, %s73
      %p77 = scmp.eq.s32.totalorder %s16, 0
      %p78 = por %p76, %p77
      %p79 = scmp.ne.s32.totalorder %s71, %s73
      %p80 = scmp.eq.s32.totalorder %s21, 1
      %p81 = por %p79, %p80
      %p82 = scmp.ne.s32.totalorder %s73, %s74
      %p83 = scmp.eq.s32.totalorder %s21, 0
      %p84 = por %p82, %p83
      %p85 = scmp.ne.s32.totalorder %s73, %s74
      %p86 = scmp.eq.s32.totalorder %s22, 1
      %p87 = por %p85, %p86
      %p89 = scmp.ne.s32.totalorder %s74, %s88
      %p90 = scmp.eq.s32.totalorder %s22, 0
      %p91 = por %p89, %p90
      %s92 = ssub.s32 %s16, %s23
      %p93 = scmp.eq.s32.totalorder %s92, 0
      %s95 = sadd.s32 %s94, 1
      %s96 = scalar_select %p93, %s94, %s95
      %p99 = pneg %p93
      %p100 = scmp.eq.s32.totalorder %s16, 1
      %p101 = por %p99, %p100
      %p102 = scmp.ne.s32.totalorder %s94, %s97
      %p103 = scmp.eq.s32.totalorder %s16, 0
      %p104 = por %p102, %p103
      %p105 = scmp.ne.s32.totalorder %s94, %s97
      %p106 = scmp.eq.s32.totalorder %s21, 1
      %p107 = por %p105, %p106
      %p108 = scmp.ne.s32.totalorder %s97, %s98
      %p109 = scmp.eq.s32.totalorder %s21, 0
      %p110 = por %p108, %p109
      %p111 = scmp.ne.s32.totalorder %s97, %s98
      %p112 = scmp.eq.s32.totalorder %s22, 1
      %p113 = por %p111, %p112
      %p115 = scmp.ne.s32.totalorder %s98, %s114
      %p116 = scmp.eq.s32.totalorder %s22, 0
      %p117 = por %p115, %p116
      %p118 = scmp.le.s32.totalorder 1, %s16
      %p119 = scmp.lt.s32.totalorder %s16, 3
      %p120 = pnand %p118, %p119
      %p121 = pneg %p120
      // Predicated region
      $region9: #{basic_conv2d.1} parent=5 // pred_check
        _
      $region10: #{basic_conv2d.1} parent=5 // pred_check_branch
        %123 = sbr.rel (%p120) target = $region12
      $region11: #{basic_conv2d.1} parent=5 // pred_region
        %s124 = ssub.s32 %s16, 1
        // Predicated region
        $region13: #{basic_conv2d.1} parent=11 // pred_check
          %p125 = pneg %p63
        $region14: #{basic_conv2d.1} parent=11 // pred_check_branch
          %127 = sbr.rel (%p125) target = $region16
        $region15: #{basic_conv2d.1} parent=11 // pred_region
          %s129 = ssub.s32 288, 288
          %130 = vsyncadd [#allocation6], %s129
          %s131 = sshll.u32 [#allocation5], 4
          %s132 = int_to_ptr.vmem [resolvable:$true] %s131
          %137 = dma.hbm_to_vmem [thread:$0]  %s1, 288, %s132, [#allocation6], 32, 32, 2
        $region16: #{basic_conv2d.1} parent=11 // pred_fallthru
          _
        // Predicated region
        $region17: #{basic_conv2d.1} parent=11 // pred_check
          %p138 = pneg %p84
        $region18: #{basic_conv2d.1} parent=11 // pred_check_branch
          %140 = sbr.rel (%p138) target = $region20
        $region19: #{basic_conv2d.1} parent=11 // pred_region
          %s142 = ssub.s32 16, 16
          %143 = vsyncadd [#allocation6], %s142
          %s145 = sshll.u32 [#allocation7], 4
          %s146 = int_to_ptr.vmem [resolvable:$true] %s145
          %148 = dma.hbm_to_vmem [thread:$0]  %s2, 16, %s146, [#allocation6]
        $region20: #{basic_conv2d.1} parent=11 // pred_fallthru
          _
      $region12: #{basic_conv2d.1} parent=5 // pred_fallthru
        _
      %p149 = scmp.lt.s32.totalorder %s16, 2
      // Predicated region
      $region21: #{basic_conv2d.1} parent=5 // pred_check
        %p150 = pneg %p149
      $region22: #{basic_conv2d.1} parent=5 // pred_check_branch
        %152 = sbr.rel (%p150) target = $region24
      $region23: #{basic_conv2d.1} parent=5 // pred_region
        // Predicated region
        $region25: #{basic_conv2d.1} parent=23 // pred_check
          %p153 = pneg %p36
        $region26: #{basic_conv2d.1} parent=23 // pred_check_branch
          %155 = sbr.rel (%p153) target = $region28
        $region27: #{basic_conv2d.1} parent=23 // pred_region
          %s156 = sand.u32 %s26, 1
          %s157 = scalar_lea.sflag [#allocation3], %s156
          %s158 = sand.u32 %s26, 1
          %s159 = smul.addr %s158, 216
          %s160 = scalar_lea.vmem [#allocation2], %s159
          %s162 = ssub.s32 3456, 3456
          %163 = vsyncadd %s157, %s162
          %s164 = smul.addr %s16, 54
          %s165 = smul.addr %s164, 64
          %s166 = scalar_lea.hbm %s0, %s165
          %s167 = sshll.u32 %s160, 4
          %s168 = int_to_ptr.vmem [resolvable:$true] %s167
          %173 = dma.hbm_to_vmem [thread:$0]  %s166, 3456, %s168, %s157, 64, 64, 4
        $region28: #{basic_conv2d.1} parent=23 // pred_fallthru
          _
      $region24: #{basic_conv2d.1} parent=5 // pred_fallthru
        _
      %p174 = scmp.le.s32.totalorder 1, %s16
      %p175 = scmp.lt.s32.totalorder %s16, 3
      %p176 = pnand %p174, %p175
      %p177 = pneg %p176
      // Predicated region
      $region29: #{basic_conv2d.1} parent=5 // pred_check
        _
      $region30: #{basic_conv2d.1} parent=5 // pred_check_branch
        %179 = sbr.rel (%p176) target = $region32
      $region31: #{basic_conv2d.1} parent=5 // pred_region
        %s180 = ssub.s32 %s16, 1
        %s181 = sand.u32 %s29, 1
        %s182 = scalar_lea.sflag [#allocation3], %s181
        %s183 = sand.u32 %s29, 1
        %s184 = smul.addr %s183, 216
        %s185 = scalar_lea.vmem [#allocation2], %s184
        // Predicated region
        $region33: #{basic_conv2d.1} parent=31 // pred_check
          %p186 = pneg %p42
        $region34: #{basic_conv2d.1} parent=31 // pred_check_branch
          %188 = sbr.rel (%p186) target = $region36
        $region35: #{basic_conv2d.1} parent=31 // pred_region
          %189 = dma.done %s182, 3456
        $region36: #{basic_conv2d.1} parent=31 // pred_fallthru
          _
        // Predicated region
        $region37: #{basic_conv2d.1} parent=31 // pred_check
          %p190 = pneg %p63
        $region38: #{basic_conv2d.1} parent=31 // pred_check_branch
          %192 = sbr.rel (%p190) target = $region40
        $region39: #{basic_conv2d.1} parent=31 // pred_region
          %193 = dma.done [#allocation6], 288
        $region40: #{basic_conv2d.1} parent=31 // pred_fallthru
          _
        // Predicated region
        $region41: #{basic_conv2d.1} parent=31 // pred_check
          %p194 = pneg %p84
        $region42: #{basic_conv2d.1} parent=31 // pred_check_branch
          %196 = sbr.rel (%p194) target = $region44
        $region43: #{basic_conv2d.1} parent=31 // pred_region
          %197 = dma.done [#allocation6], 16
        $region44: #{basic_conv2d.1} parent=31 // pred_fallthru
          _
        %s198 = sand.u32 %s29, 1
        %s199 = scalar_lea.sflag [#allocation3], %s198
        %s200 = sand.u32 %s29, 1
        %s201 = smul.addr %s200, 216
        %s202 = scalar_lea.vmem [#allocation2], %s201
        %p203 = pneg %p42
        %p204 = pneg %p39
        %p205 = pneg %p63
        %p206 = pneg %p60
        %p207 = pneg %p84
        %p208 = pneg %p81
        %p209 = pneg %p110
        %p210 = pneg %p107
        %s211 = sand.u32 %s97, 1
        %s212 = scalar_lea.sflag [#allocation4], %s211
        %s213 = sand.u32 %s97, 1
        %s214 = smul.addr %s213, 256
        %s215 = scalar_lea.vmem [#allocation8], %s214
        %v217 = vld [vmem:[%s185] sm:$0xf]
        %v218 = vld [vmem:[%s185 + $0x4] sm:$0xf]
        %v219 = vld [vmem:[%s185 + $0xc] sm:$0xf]
        %v220 = vld [vmem:[%s185 + $0x10] sm:$0xf]
        %v221 = vld [vmem:[%s185 + $0x18] sm:$0xf]
        %v222 = vld [vmem:[%s185 + $0x1c] sm:$0xf]
        %v223 = vld [vmem:[%s185 + $0x24] sm:$0xf]
        %v224 = vld [vmem:[%s185 + $0x28] sm:$0xf]
        %v225 = vld [vmem:[%s185 + $0x30] sm:$0xf]
        %v226 = vld [vmem:[%s185 + $0x34] sm:$0xf]
        %v227 = vld [vmem:[%s185 + $0x3c] sm:$0xf]
        %v228 = vld [vmem:[%s185 + $0x40] sm:$0xf]
        %v229 = vld [vmem:[%s185 + $0x48] sm:$0xf]
        %v230 = vld [vmem:[%s185 + $0x4c] sm:$0xf]
        %v231 = vld [vmem:[%s185 + $0x54] sm:$0xf]
        %v232 = vld [vmem:[%s185 + $0x58] sm:$0xf]
        %v233 = vld [vmem:[%s185 + $0x60] sm:$0xf]
        %v234 = vld [vmem:[%s185 + $0x64] sm:$0xf]
        %v235 = vld [vmem:[%s185 + $0x6c] sm:$0xf]
        %v236 = vld [vmem:[%s185 + $0x70] sm:$0xf]
        %v237 = vld [vmem:[%s185 + $0x78] sm:$0xf]
        %v238 = vld [vmem:[%s185 + $0x7c] sm:$0xf]
        %v239 = vld [vmem:[%s185 + $0x84] sm:$0xf]
        %v240 = vld [vmem:[%s185 + $0x88] sm:$0xf]
        %v241 = vld [vmem:[%s185 + $0x90] sm:$0xf]
        %v242 = vld [vmem:[%s185 + $0x94] sm:$0xf]
        %v243 = vld [vmem:[%s185 + $0x9c] sm:$0xf]
        %v244 = vld [vmem:[%s185 + $0xa0] sm:$0xf]
        %v245 = vld [vmem:[%s185 + $0xa8] sm:$0xf]
        %v246 = vld [vmem:[%s185 + $0xac] sm:$0xf]
        %v247 = vld [vmem:[%s185 + $0xb4] sm:$0xf]
        %v248 = vld [vmem:[%s185 + $0xb8] sm:$0xf]
        %v249 = vld [vmem:[#allocation5] sm:$0x3]
        %v250 = vld [vmem:[%s185 + $0x8] sm:$0x1]
        %v251 = vld [vmem:[%s185 + $0x14] sm:$0x1]
        %v252 = vld [vmem:[%s185 + $0x20] sm:$0x1]
        %v253 = vld [vmem:[%s185 + $0x2c] sm:$0x1]
        %v254 = vld [vmem:[%s185 + $0x38] sm:$0x1]
        %v255 = vld [vmem:[%s185 + $0x44] sm:$0x1]
        %v256 = vld [vmem:[%s185 + $0x50] sm:$0x1]
        %v257 = vld [vmem:[%s185 + $0x5c] sm:$0x1]
        %v258 = vld [vmem:[%s185 + $0x68] sm:$0x1]
        %v259 = vld [vmem:[%s185 + $0x74] sm:$0x1]
        %v260 = vld [vmem:[%s185 + $0x80] sm:$0x1]
        %v261 = vld [vmem:[%s185 + $0x8c] sm:$0x1]
        %v262 = vld [vmem:[%s185 + $0x98] sm:$0x1]
        %v263 = vld [vmem:[%s185 + $0xa4] sm:$0x1]
        %v264 = vld [vmem:[%s185 + $0xb0] sm:$0x1]
        %v265 = vld [vmem:[%s185 + $0xbc] sm:$0x1]
        %vm266 = vsmask.f32 3328
        %vm267 = vsmask.f32 7440
        %vm268 = vmor %vm266, %vm267
        %v270 = vshrl.u32 %v217, 16
        %v272 = vrot.slane %v270, 4
        %v273 = vshll.u32 %v217, 16
        %v275 = vrot.slane %v273, 5
        %v276 = vor.u32 %v272, %v275
        %v277 = vrot.slane %v276, 4
        %v279 = vshll.u32 %v218, 16
        %v281 = vrot.slane %v279, 5
        %v282 = vsel %vm268, %v277, %v281
        %v283 = vshrl.u32 %v218, 16
        %v285 = vrot.slane %v283, 4
        %v286 = vor.u32 %v285, %v281
        %v287 = vrot.slane %v286, 4
        %v289 = vshll.u32 %v250, 16
        %v291 = vrot.slane %v289, 5
        %v292 = vsel %vm268, %v287, %v291
        %v294 = vshrl.u32 %v219, 16
        %v296 = vrot.slane %v294, 4
        %v297 = vshll.u32 %v219, 16
        %v299 = vrot.slane %v297, 5
        %v300 = vor.u32 %v296, %v299
        %v301 = vrot.slane %v300, 4
        %v303 = vshll.u32 %v220, 16
        %v305 = vrot.slane %v303, 5
        %v306 = vsel %vm268, %v301, %v305
        %v307 = vshrl.u32 %v220, 16
        %v309 = vrot.slane %v307, 4
        %v310 = vor.u32 %v309, %v305
        %v311 = vrot.slane %v310, 4
        %v313 = vshll.u32 %v251, 16
        %v315 = vrot.slane %v313, 5
        %v316 = vsel %vm268, %v311, %v315
        %v318 = vshrl.u32 %v221, 16
        %v320 = vrot.slane %v318, 4
        %v321 = vshll.u32 %v221, 16
        %v323 = vrot.slane %v321, 5
        %v324 = vor.u32 %v320, %v323
        %v325 = vrot.slane %v324, 4
        %v327 = vshll.u32 %v222, 16
        %v329 = vrot.slane %v327, 5
        %v330 = vsel %vm268, %v325, %v329
        %v331 = vshrl.u32 %v222, 16
        %v333 = vrot.slane %v331, 4
        %v334 = vor.u32 %v333, %v329
        %v335 = vrot.slane %v334, 4
        %v337 = vshll.u32 %v252, 16
        %v339 = vrot.slane %v337, 5
        %v340 = vsel %vm268, %v335, %v339
        %v342 = vshrl.u32 %v223, 16
        %v344 = vrot.slane %v342, 4
        %v345 = vshll.u32 %v223, 16
        %v347 = vrot.slane %v345, 5
        %v348 = vor.u32 %v344, %v347
        %v349 = vrot.slane %v348, 4
        %v351 = vshll.u32 %v224, 16
        %v353 = vrot.slane %v351, 5
        %v354 = vsel %vm268, %v349, %v353
        %v355 = vshrl.u32 %v224, 16
        %v357 = vrot.slane %v355, 4
        %v358 = vor.u32 %v357, %v353
        %v359 = vrot.slane %v358, 4
        %v361 = vshll.u32 %v253, 16
        %v363 = vrot.slane %v361, 5
        %v364 = vsel %vm268, %v359, %v363
        %v366 = vshrl.u32 %v225, 16
        %v368 = vrot.slane %v366, 4
        %v369 = vshll.u32 %v225, 16
        %v371 = vrot.slane %v369, 5
        %v372 = vor.u32 %v368, %v371
        %v373 = vrot.slane %v372, 4
        %v375 = vshll.u32 %v226, 16
        %v377 = vrot.slane %v375, 5
        %v378 = vsel %vm268, %v373, %v377
        %v379 = vshrl.u32 %v226, 16
        %v381 = vrot.slane %v379, 4
        %v382 = vor.u32 %v381, %v377
        %v383 = vrot.slane %v382, 4
        %v385 = vshll.u32 %v254, 16
        %v387 = vrot.slane %v385, 5
        %v388 = vsel %vm268, %v383, %v387
        %v390 = vshrl.u32 %v227, 16
        %v392 = vrot.slane %v390, 4
        %v393 = vshll.u32 %v227, 16
        %v395 = vrot.slane %v393, 5
        %v396 = vor.u32 %v392, %v395
        %v397 = vrot.slane %v396, 4
        %v399 = vshll.u32 %v228, 16
        %v401 = vrot.slane %v399, 5
        %v402 = vsel %vm268, %v397, %v401
        %v403 = vshrl.u32 %v228, 16
        %v405 = vrot.slane %v403, 4
        %v406 = vor.u32 %v405, %v401
        %v407 = vrot.slane %v406, 4
        %v409 = vshll.u32 %v255, 16
        %v411 = vrot.slane %v409, 5
        %v412 = vsel %vm268, %v407, %v411
        %v414 = vshrl.u32 %v229, 16
        %v416 = vrot.slane %v414, 4
        %v417 = vshll.u32 %v229, 16
        %v419 = vrot.slane %v417, 5
        %v420 = vor.u32 %v416, %v419
        %v421 = vrot.slane %v420, 4
        %v423 = vshll.u32 %v230, 16
        %v425 = vrot.slane %v423, 5
        %v426 = vsel %vm268, %v421, %v425
        %v427 = vshrl.u32 %v230, 16
        %v429 = vrot.slane %v427, 4
        %v430 = vor.u32 %v429, %v425
        %v431 = vrot.slane %v430, 4
        %v433 = vshll.u32 %v256, 16
        %v435 = vrot.slane %v433, 5
        %v436 = vsel %vm268, %v431, %v435
        %v438 = vshrl.u32 %v231, 16
        %v440 = vrot.slane %v438, 4
        %v441 = vshll.u32 %v231, 16
        %v443 = vrot.slane %v441, 5
        %v444 = vor.u32 %v440, %v443
        %v445 = vrot.slane %v444, 4
        %v447 = vshll.u32 %v232, 16
        %v449 = vrot.slane %v447, 5
        %v450 = vsel %vm268, %v445, %v449
        %v451 = vshrl.u32 %v232, 16
        %v453 = vrot.slane %v451, 4
        %v454 = vor.u32 %v453, %v449
        %v455 = vrot.slane %v454, 4
        %v457 = vshll.u32 %v257, 16
        %v459 = vrot.slane %v457, 5
        %v460 = vsel %vm268, %v455, %v459
        %v462 = vshrl.u32 %v233, 16
        %v464 = vrot.slane %v462, 4
        %v465 = vshll.u32 %v233, 16
        %v467 = vrot.slane %v465, 5
        %v468 = vor.u32 %v464, %v467
        %v469 = vrot.slane %v468, 4
        %v471 = vshll.u32 %v234, 16
        %v473 = vrot.slane %v471, 5
        %v474 = vsel %vm268, %v469, %v473
        %v475 = vshrl.u32 %v234, 16
        %v477 = vrot.slane %v475, 4
        %v478 = vor.u32 %v477, %v473
        %v479 = vrot.slane %v478, 4
        %v481 = vshll.u32 %v258, 16
        %v483 = vrot.slane %v481, 5
        %v484 = vsel %vm268, %v479, %v483
        %v486 = vshrl.u32 %v235, 16
        %v488 = vrot.slane %v486, 4
        %v489 = vshll.u32 %v235, 16
        %v491 = vrot.slane %v489, 5
        %v492 = vor.u32 %v488, %v491
        %v493 = vrot.slane %v492, 4
        %v495 = vshll.u32 %v236, 16
        %v497 = vrot.slane %v495, 5
        %v498 = vsel %vm268, %v493, %v497
        %v499 = vshrl.u32 %v236, 16
        %v501 = vrot.slane %v499, 4
        %v502 = vor.u32 %v501, %v497
        %v503 = vrot.slane %v502, 4
        %v505 = vshll.u32 %v259, 16
        %v507 = vrot.slane %v505, 5
        %v508 = vsel %vm268, %v503, %v507
        %v510 = vshrl.u32 %v237, 16
        %v512 = vrot.slane %v510, 4
        %v513 = vshll.u32 %v237, 16
        %v515 = vrot.slane %v513, 5
        %v516 = vor.u32 %v512, %v515
        %v517 = vrot.slane %v516, 4
        %v519 = vshll.u32 %v238, 16
        %v521 = vrot.slane %v519, 5
        %v522 = vsel %vm268, %v517, %v521
        %v523 = vshrl.u32 %v238, 16
        %v525 = vrot.slane %v523, 4
        %v526 = vor.u32 %v525, %v521
        %v527 = vrot.slane %v526, 4
        %v529 = vshll.u32 %v260, 16
        %v531 = vrot.slane %v529, 5
        %v532 = vsel %vm268, %v527, %v531
        %v534 = vshrl.u32 %v239, 16
        %v536 = vrot.slane %v534, 4
        %v537 = vshll.u32 %v239, 16
        %v539 = vrot.slane %v537, 5
        %v540 = vor.u32 %v536, %v539
        %v541 = vrot.slane %v540, 4
        %v543 = vshll.u32 %v240, 16
        %v545 = vrot.slane %v543, 5
        %v546 = vsel %vm268, %v541, %v545
        %v547 = vshrl.u32 %v240, 16
        %v549 = vrot.slane %v547, 4
        %v550 = vor.u32 %v549, %v545
        %v551 = vrot.slane %v550, 4
        %v553 = vshll.u32 %v261, 16
        %v555 = vrot.slane %v553, 5
        %v556 = vsel %vm268, %v551, %v555
        %v558 = vshrl.u32 %v241, 16
        %v560 = vrot.slane %v558, 4
        %v561 = vshll.u32 %v241, 16
        %v563 = vrot.slane %v561, 5
        %v564 = vor.u32 %v560, %v563
        %v565 = vrot.slane %v564, 4
        %v567 = vshll.u32 %v242, 16
        %v569 = vrot.slane %v567, 5
        %v570 = vsel %vm268, %v565, %v569
        %v571 = vshrl.u32 %v242, 16
        %v573 = vrot.slane %v571, 4
        %v574 = vor.u32 %v573, %v569
        %v575 = vrot.slane %v574, 4
        %v577 = vshll.u32 %v262, 16
        %v579 = vrot.slane %v577, 5
        %v580 = vsel %vm268, %v575, %v579
        %v582 = vshrl.u32 %v243, 16
        %v584 = vrot.slane %v582, 4
        %v585 = vshll.u32 %v243, 16
        %v587 = vrot.slane %v585, 5
        %v588 = vor.u32 %v584, %v587
        %v589 = vrot.slane %v588, 4
        %v591 = vshll.u32 %v244, 16
        %v593 = vrot.slane %v591, 5
        %v594 = vsel %vm268, %v589, %v593
        %v595 = vshrl.u32 %v244, 16
        %v597 = vrot.slane %v595, 4
        %v598 = vor.u32 %v597, %v593
        %v599 = vrot.slane %v598, 4
        %v601 = vshll.u32 %v263, 16
        %v603 = vrot.slane %v601, 5
        %v604 = vsel %vm268, %v599, %v603
        %v606 = vshrl.u32 %v245, 16
        %v608 = vrot.slane %v606, 4
        %v609 = vshll.u32 %v245, 16
        %v611 = vrot.slane %v609, 5
        %v612 = vor.u32 %v608, %v611
        %v613 = vrot.slane %v612, 4
        %v615 = vshll.u32 %v246, 16
        %v617 = vrot.slane %v615, 5
        %v618 = vsel %vm268, %v613, %v617
        %v619 = vshrl.u32 %v246, 16
        %v621 = vrot.slane %v619, 4
        %v622 = vor.u32 %v621, %v617
        %v623 = vrot.slane %v622, 4
        %v625 = vshll.u32 %v264, 16
        %v627 = vrot.slane %v625, 5
        %v628 = vsel %vm268, %v623, %v627
        %v630 = vshrl.u32 %v247, 16
        %v632 = vrot.slane %v630, 4
        %v633 = vshll.u32 %v247, 16
        %v635 = vrot.slane %v633, 5
        %v636 = vor.u32 %v632, %v635
        %v637 = vrot.slane %v636, 4
        %v639 = vshll.u32 %v248, 16
        %v641 = vrot.slane %v639, 5
        %v642 = vsel %vm268, %v637, %v641
        %v643 = vshrl.u32 %v248, 16
        %v645 = vrot.slane %v643, 4
        %v646 = vor.u32 %v645, %v641
        %v647 = vrot.slane %v646, 4
        %v649 = vshll.u32 %v265, 16
        %v651 = vrot.slane %v649, 5
        %v652 = vsel %vm268, %v647, %v651
        %s653 = scalar_lea.vmem [#allocation5], 2
        %v654 = vld [vmem:[%s653] sm:$0x3]
        %v655 = vunpack.c.l.b16 %v282
        %v656 = vunpack.c.l.b16 %v292
        %v657 = vunpack.c.l.b16 %v306
        %v658 = vunpack.c.l.b16 %v316
        %v659 = vunpack.c.l.b16 %v330
        %v660 = vunpack.c.l.b16 %v340
        %v661 = vunpack.c.l.b16 %v354
        %v662 = vunpack.c.l.b16 %v364
        %v663 = vunpack.c.l.b16 %v378
        %v664 = vunpack.c.l.b16 %v388
        %v665 = vunpack.c.l.b16 %v402
        %v666 = vunpack.c.l.b16 %v412
        %v667 = vunpack.c.l.b16 %v426
        %v668 = vunpack.c.l.b16 %v436
        %v669 = vunpack.c.l.b16 %v450
        %v670 = vunpack.c.l.b16 %v460
        %v671 = vunpack.c.l.b16 %v474
        %v672 = vunpack.c.l.b16 %v484
        %v673 = vunpack.c.l.b16 %v498
        %v674 = vunpack.c.l.b16 %v508
        %v675 = vunpack.c.l.b16 %v522
        %v676 = vunpack.c.l.b16 %v532
        %v677 = vunpack.c.l.b16 %v546
        %v678 = vunpack.c.l.b16 %v556
        %v679 = vunpack.c.l.b16 %v570
        %v680 = vunpack.c.l.b16 %v580
        %v681 = vunpack.c.l.b16 %v594
        %v682 = vunpack.c.l.b16 %v604
        %v683 = vunpack.c.l.b16 %v618
        %v684 = vunpack.c.l.b16 %v628
        %v685 = vunpack.c.l.b16 %v642
        %v686 = vunpack.c.l.b16 %v652
        %v687 = vpack.c.b16 %v656, %v655
        %v688 = vpack.c.b16 %v658, %v657
        %v689 = vpack.c.b16 %v660, %v659
        %v690 = vpack.c.b16 %v662, %v661
        %v691 = vpack.c.b16 %v664, %v663
        %v692 = vpack.c.b16 %v666, %v665
        %v693 = vpack.c.b16 %v668, %v667
        %v694 = vpack.c.b16 %v670, %v669
        %v695 = vpack.c.b16 %v672, %v671
        %v696 = vpack.c.b16 %v674, %v673
        %v697 = vpack.c.b16 %v676, %v675
        %v698 = vpack.c.b16 %v678, %v677
        %v699 = vpack.c.b16 %v680, %v679
        %v700 = vpack.c.b16 %v682, %v681
        %v701 = vpack.c.b16 %v684, %v683
        %v702 = vpack.c.b16 %v686, %v685
        %vm703 = vcmask 31744
        %v705 = vsel %vm703, %v687, 0
        %v708 = vsel %vm703, %v688, 0
        %v711 = vsel %vm703, %v689, 0
        %v714 = vsel %vm703, %v690, 0
        %v717 = vsel %vm703, %v691, 0
        %v720 = vsel %vm703, %v692, 0
        %v723 = vsel %vm703, %v693, 0
        %v726 = vsel %vm703, %v694, 0
        %v729 = vsel %vm703, %v695, 0
        %v732 = vsel %vm703, %v696, 0
        %v735 = vsel %vm703, %v697, 0
        %v738 = vsel %vm703, %v698, 0
        %v741 = vsel %vm703, %v699, 0
        %v744 = vsel %vm703, %v700, 0
        %v747 = vsel %vm703, %v701, 0
        %v750 = vsel %vm703, %v702, 0
        %vm752 = vcmask 1041408
        %v754 = vsel %vm752, %v654, 0
        %756 = vmatprep.subr.bf16.mxu0 0
        %757 = vmatpush1.bf16.msra.mxu0 %v754
        %758 = vmatprep.subr.bf16.mxu0 0
        %759 = vmatpush1.bf16.msra.mxu0 0
        %760 = vmatprep.subr.bf16.mxu0 0
        %761 = vmatpush1.bf16.msra.mxu0 0
        %762 = vmatprep.subr.bf16.mxu0 0
        %763 = vmatpush1.bf16.msra.mxu0 0
        %764 = vmatprep.subr.bf16.mxu0 0
        %765 = vmatpush1.bf16.msra.mxu0 0
        %766 = vmatprep.subr.bf16.mxu0 0
        %767 = vmatpush1.bf16.msra.mxu0 0
        %768 = vmatprep.subr.bf16.mxu0 0
        %769 = vmatpush1.bf16.msra.mxu0 0
        %770 = vmatprep.subr.bf16.mxu0 0
        %771 = vmatpush1.bf16.msra.mxu0 0
        %772 = vmatprep.subr.bf16.mxu0 0
        %773 = vmatpush1.bf16.msra.mxu0 0
        %774 = vmatprep.subr.bf16.mxu0 0
        %775 = vmatpush1.bf16.msra.mxu0 0
        %776 = vmatprep.subr.bf16.mxu0 0
        %777 = vmatpush1.bf16.msra.mxu0 0
        %778 = vmatprep.subr.bf16.mxu0 0
        %779 = vmatpush1.bf16.msra.mxu0 0
        %780 = vmatprep.subr.bf16.mxu0 0
        %781 = vmatpush1.bf16.msra.mxu0 0
        %782 = vmatprep.subr.bf16.mxu0 0
        %783 = vmatpush1.bf16.msra.mxu0 0
        %784 = vmatprep.subr.bf16.mxu0 0
        %785 = vmatpush1.bf16.msra.mxu0 0
        %786 = vmatprep.subr.bf16.mxu0 0
        %787 = vmatpush1.bf16.msra.mxu0 0
        %788 = vmatprep.mubr.bf16.mxu0 0
        %789 = vmatmul.mubr.bf16.gmra.mrb[0].mxu0 %v705
        %v790 = vpop.f32.mrb[0].mxu0
        %v791 = vadd.f32 0.0, %v790
        %v792 = vpop.f32.mrb[0].mxu0
        %v793 = vpop.f32.mrb[0].mxu0
        %v794 = vadd.f32 0.0, %v793
        %v795 = vpop.f32.mrb[0].mxu0
        %796 = vmatprep.mubr.bf16.mxu0 0
        %797 = vmatmul.mubr.bf16.gmra.mrb[0].mxu0 %v708
        %v798 = vpop.f32.mrb[0].mxu0
        %v799 = vadd.f32 0.0, %v798
        %v800 = vpop.f32.mrb[0].mxu0
        %v801 = vpop.f32.mrb[0].mxu0
        %v802 = vadd.f32 0.0, %v801
        %v803 = vpop.f32.mrb[0].mxu0
        %804 = vmatprep.mubr.bf16.mxu0 0
        %805 = vmatmul.mubr.bf16.gmra.mrb[0].mxu0 %v711
        %v806 = vpop.f32.mrb[0].mxu0
        %v807 = vadd.f32 0.0, %v806
        %v808 = vpop.f32.mrb[0].mxu0
        %v809 = vpop.f32.mrb[0].mxu0
        %v810 = vadd.f32 0.0, %v809
        %v811 = vpop.f32.mrb[0].mxu0
        %812 = vmatprep.mubr.bf16.mxu0 0
        %813 = vmatmul.mubr.bf16.gmra.mrb[0].mxu0 %v714
        %v814 = vpop.f32.mrb[0].mxu0
        %v815 = vadd.f32 0.0, %v814
        %v816 = vpop.f32.mrb[0].mxu0
        %v817 = vpop.f32.mrb[0].mxu0
        %v818 = vadd.f32 0.0, %v817
        %v819 = vpop.f32.mrb[0].mxu0
        %820 = vmatprep.mubr.bf16.mxu0 0
        %821 = vmatmul.mubr.bf16.gmra.mrb[0].mxu0 %v717
        %v822 = vpop.f32.mrb[0].mxu0
        %v823 = vadd.f32 0.0, %v822
        %v824 = vpop.f32.mrb[0].mxu0
        %v825 = vpop.f32.mrb[0].mxu0
        %v826 = vadd.f32 0.0, %v825
        %v827 = vpop.f32.mrb[0].mxu0
        %828 = vmatprep.mubr.bf16.mxu0 0
        %829 = vmatmul.mubr.bf16.gmra.mrb[0].mxu0 %v720
        %v830 = vpop.f32.mrb[0].mxu0
        %v831 = vadd.f32 0.0, %v830
        %v832 = vpop.f32.mrb[0].mxu0
        %v833 = vpop.f32.mrb[0].mxu0
        %v834 = vadd.f32 0.0, %v833
        %v835 = vpop.f32.mrb[0].mxu0
        %836 = vmatprep.mubr.bf16.mxu0 0
        %837 = vmatmul.mubr.bf16.gmra.mrb[0].mxu0 %v723
        %v838 = vpop.f32.mrb[0].mxu0
        %v839 = vadd.f32 0.0, %v838
        %v840 = vpop.f32.mrb[0].mxu0
        %v841 = vpop.f32.mrb[0].mxu0
        %v842 = vadd.f32 0.0, %v841
        %v843 = vpop.f32.mrb[0].mxu0
        %844 = vmatprep.mubr.bf16.mxu0 0
        %845 = vmatmul.mubr.bf16.gmra.mrb[0].mxu0 %v726
        %v846 = vpop.f32.mrb[0].mxu0
        %v847 = vadd.f32 0.0, %v846
        %v848 = vpop.f32.mrb[0].mxu0
        %v849 = vpop.f32.mrb[0].mxu0
        %v850 = vadd.f32 0.0, %v849
        %v851 = vpop.f32.mrb[0].mxu0
        %852 = vmatprep.mubr.bf16.mxu0 0
        %853 = vmatmul.mubr.bf16.gmra.mrb[0].mxu0 %v729
        %v854 = vpop.f32.mrb[0].mxu0
        %v855 = vadd.f32 0.0, %v854
        %v856 = vpop.f32.mrb[0].mxu0
        %v857 = vpop.f32.mrb[0].mxu0
        %v858 = vadd.f32 0.0, %v857
        %v859 = vpop.f32.mrb[0].mxu0
        %860 = vmatprep.mubr.bf16.mxu0 0
        %861 = vmatmul.mubr.bf16.gmra.mrb[0].mxu0 %v732
        %v862 = vpop.f32.mrb[0].mxu0
        %v863 = vadd.f32 0.0, %v862
        %v864 = vpop.f32.mrb[0].mxu0
        %v865 = vpop.f32.mrb[0].mxu0
        %v866 = vadd.f32 0.0, %v865
        %v867 = vpop.f32.mrb[0].mxu0
        %868 = vmatprep.mubr.bf16.mxu0 0
        %869 = vmatmul.mubr.bf16.gmra.mrb[0].mxu0 %v735
        %v870 = vpop.f32.mrb[0].mxu0
        %v871 = vadd.f32 0.0, %v870
        %v872 = vpop.f32.mrb[0].mxu0
        %v873 = vpop.f32.mrb[0].mxu0
        %v874 = vadd.f32 0.0, %v873
        %v875 = vpop.f32.mrb[0].mxu0
        %876 = vmatprep.mubr.bf16.mxu0 0
        %877 = vmatmul.mubr.bf16.gmra.mrb[0].mxu0 %v738
        %v878 = vpop.f32.mrb[0].mxu0
        %v879 = vadd.f32 0.0, %v878
        %v880 = vpop.f32.mrb[0].mxu0
        %v881 = vpop.f32.mrb[0].mxu0
        %v882 = vadd.f32 0.0, %v881
        %v883 = vpop.f32.mrb[0].mxu0
        %884 = vmatprep.mubr.bf16.mxu0 0
        %885 = vmatmul.mubr.bf16.gmra.mrb[0].mxu0 %v741
        %v886 = vpop.f32.mrb[0].mxu0
        %v887 = vadd.f32 0.0, %v886
        %v888 = vpop.f32.mrb[0].mxu0
        %v889 = vpop.f32.mrb[0].mxu0
        %v890 = vadd.f32 0.0, %v889
        %v891 = vpop.f32.mrb[0].mxu0
        %892 = vmatprep.mubr.bf16.mxu0 0
        %893 = vmatmul.mubr.bf16.gmra.mrb[0].mxu0 %v744
        %v894 = vpop.f32.mrb[0].mxu0
        %v895 = vadd.f32 0.0, %v894
        %v896 = vpop.f32.mrb[0].mxu0
        %v897 = vpop.f32.mrb[0].mxu0
        %v898 = vadd.f32 0.0, %v897
        %v899 = vpop.f32.mrb[0].mxu0
        %900 = vmatprep.mubr.bf16.mxu0 0
        %901 = vmatmul.mubr.bf16.gmra.mrb[0].mxu0 %v747
        %v902 = vpop.f32.mrb[0].mxu0
        %v903 = vadd.f32 0.0, %v902
        %v904 = vpop.f32.mrb[0].mxu0
        %v905 = vpop.f32.mrb[0].mxu0
        %v906 = vadd.f32 0.0, %v905
        %v907 = vpop.f32.mrb[0].mxu0
        %908 = vmatprep.mubr.bf16.mxu0 0
        %909 = vmatmul.mubr.bf16.gmra.mrb[0].mxu0 %v750
        %v910 = vpop.f32.mrb[0].mxu0
        %v911 = vadd.f32 0.0, %v910
        %v912 = vpop.f32.mrb[0].mxu0
        %v913 = vpop.f32.mrb[0].mxu0
        %v914 = vadd.f32 0.0, %v913
        %v915 = vpop.f32.mrb[0].mxu0
        %916 = vdwg.mxu0
        %v949 = vunpack.c.l.b16 %v217
        %v950 = vunpack.c.l.b16 %v218
        %v951 = vunpack.c.l.b16 %v219
        %v952 = vunpack.c.l.b16 %v220
        %v953 = vunpack.c.l.b16 %v221
        %v954 = vunpack.c.l.b16 %v222
        %v955 = vunpack.c.l.b16 %v223
        %v956 = vunpack.c.l.b16 %v224
        %v957 = vunpack.c.l.b16 %v225
        %v958 = vunpack.c.l.b16 %v226
        %v959 = vunpack.c.l.b16 %v227
        %v960 = vunpack.c.l.b16 %v228
        %v961 = vunpack.c.l.b16 %v229
        %v962 = vunpack.c.l.b16 %v230
        %v963 = vunpack.c.l.b16 %v231
        %v964 = vunpack.c.l.b16 %v232
        %v965 = vunpack.c.l.b16 %v233
        %v966 = vunpack.c.l.b16 %v234
        %v967 = vunpack.c.l.b16 %v235
        %v968 = vunpack.c.l.b16 %v236
        %v969 = vunpack.c.l.b16 %v237
        %v970 = vunpack.c.l.b16 %v238
        %v971 = vunpack.c.l.b16 %v239
        %v972 = vunpack.c.l.b16 %v240
        %v973 = vunpack.c.l.b16 %v241
        %v974 = vunpack.c.l.b16 %v242
        %v975 = vunpack.c.l.b16 %v243
        %v976 = vunpack.c.l.b16 %v244
        %v977 = vunpack.c.l.b16 %v245
        %v978 = vunpack.c.l.b16 %v246
        %v979 = vunpack.c.l.b16 %v247
        %v980 = vunpack.c.l.b16 %v248
        %v981 = vpack.c.b16 %v950, %v949
        %v982 = vpack.c.b16 %v952, %v951
        %v983 = vpack.c.b16 %v954, %v953
        %v984 = vpack.c.b16 %v956, %v955
        %v985 = vpack.c.b16 %v958, %v957
        %v986 = vpack.c.b16 %v960, %v959
        %v987 = vpack.c.b16 %v962, %v961
        %v988 = vpack.c.b16 %v964, %v963
        %v989 = vpack.c.b16 %v966, %v965
        %v990 = vpack.c.b16 %v968, %v967
        %v991 = vpack.c.b16 %v970, %v969
        %v992 = vpack.c.b16 %v972, %v971
        %v993 = vpack.c.b16 %v974, %v973
        %v994 = vpack.c.b16 %v976, %v975
        %v995 = vpack.c.b16 %v978, %v977
        %v996 = vpack.c.b16 %v980, %v979
        %v998 = vsel %vm703, %v981, 0
        %v1001 = vsel %vm703, %v982, 0
        %v1004 = vsel %vm703, %v983, 0
        %v1007 = vsel %vm703, %v984, 0
        %v1010 = vsel %vm703, %v985, 0
        %v1013 = vsel %vm703, %v986, 0
        %v1016 = vsel %vm703, %v987, 0
        %v1019 = vsel %vm703, %v988, 0
        %v1022 = vsel %vm703, %v989, 0
        %v1025 = vsel %vm703, %v990, 0
        %v1028 = vsel %vm703, %v991, 0
        %v1031 = vsel %vm703, %v992, 0
        %v1034 = vsel %vm703, %v993, 0
        %v1037 = vsel %vm703, %v994, 0
        %v1040 = vsel %vm703, %v995, 0
        %v1043 = vsel %vm703, %v996, 0
        %v1046 = vsel %vm752, %v249, 0
        %1048 = vmatprep.subr.bf16.mxu0 0
        %1049 = vmatpush1.bf16.msra.mxu0 %v1046
        %1050 = vmatprep.subr.bf16.mxu0 0
        %1051 = vmatpush1.bf16.msra.mxu0 0
        %1052 = vmatprep.subr.bf16.mxu0 0
        %1053 = vmatpush1.bf16.msra.mxu0 0
        %1054 = vmatprep.subr.bf16.mxu0 0
        %1055 = vmatpush1.bf16.msra.mxu0 0
        %1056 = vmatprep.subr.bf16.mxu0 0
        %1057 = vmatpush1.bf16.msra.mxu0 0
        %1058 = vmatprep.subr.bf16.mxu0 0
        %1059 = vmatpush1.bf16.msra.mxu0 0
        %1060 = vmatprep.subr.bf16.mxu0 0
        %1061 = vmatpush1.bf16.msra.mxu0 0
        %1062 = vmatprep.subr.bf16.mxu0 0
        %1063 = vmatpush1.bf16.msra.mxu0 0
        %1064 = vmatprep.subr.bf16.mxu0 0
        %1065 = vmatpush1.bf16.msra.mxu0 0
        %1066 = vmatprep.subr.bf16.mxu0 0
        %1067 = vmatpush1.bf16.msra.mxu0 0
        %1068 = vmatprep.subr.bf16.mxu0 0
        %1069 = vmatpush1.bf16.msra.mxu0 0
        %1070 = vmatprep.subr.bf16.mxu0 0
        %1071 = vmatpush1.bf16.msra.mxu0 0
        %1072 = vmatprep.subr.bf16.mxu0 0
        %1073 = vmatpush1.bf16.msra.mxu0 0
        %1074 = vmatprep.subr.bf16.mxu0 0
        %1075 = vmatpush1.bf16.msra.mxu0 0
        %1076 = vmatprep.subr.bf16.mxu0 0
        %1077 = vmatpush1.bf16.msra.mxu0 0
        %1078 = vmatprep.subr.bf16.mxu0 0
        %1079 = vmatpush1.bf16.msra.mxu0 0
        %1080 = vmatprep.mubr.bf16.mxu0 0
        %1081 = vmatmul.mubr.bf16.gmra.mrb[0].mxu0 %v998
        %v1082 = vpop.f32.mrb[0].mxu0
        %v1083 = vadd.f32 %v791, %v1082
        %v1084 = vpop.f32.mrb[0].mxu0
        %v1085 = vpop.f32.mrb[0].mxu0
        %v1086 = vadd.f32 %v794, %v1085
        %v1087 = vpop.f32.mrb[0].mxu0
        %1088 = vmatprep.mubr.bf16.mxu0 0
        %1089 = vmatmul.mubr.bf16.gmra.mrb[0].mxu0 %v1001
        %v1090 = vpop.f32.mrb[0].mxu0
        %v1091 = vadd.f32 %v799, %v1090
        %v1092 = vpop.f32.mrb[0].mxu0
        %v1093 = vpop.f32.mrb[0].mxu0
        %v1094 = vadd.f32 %v802, %v1093
        %v1095 = vpop.f32.mrb[0].mxu0
        %1096 = vmatprep.mubr.bf16.mxu0 0
        %1097 = vmatmul.mubr.bf16.gmra.mrb[0].mxu0 %v1004
        %v1098 = vpop.f32.mrb[0].mxu0
        %v1099 = vadd.f32 %v807, %v1098
        %v1100 = vpop.f32.mrb[0].mxu0
        %v1101 = vpop.f32.mrb[0].mxu0
        %v1102 = vadd.f32 %v810, %v1101
        %v1103 = vpop.f32.mrb[0].mxu0
        %1104 = vmatprep.mubr.bf16.mxu0 0
        %1105 = vmatmul.mubr.bf16.gmra.mrb[0].mxu0 %v1007
        %v1106 = vpop.f32.mrb[0].mxu0
        %v1107 = vadd.f32 %v815, %v1106
        %v1108 = vpop.f32.mrb[0].mxu0
        %v1109 = vpop.f32.mrb[0].mxu0
        %v1110 = vadd.f32 %v818, %v1109
        %v1111 = vpop.f32.mrb[0].mxu0
        %1112 = vmatprep.mubr.bf16.mxu0 0
        %1113 = vmatmul.mubr.bf16.gmra.mrb[0].mxu0 %v1010
        %v1114 = vpop.f32.mrb[0].mxu0
        %v1115 = vadd.f32 %v823, %v1114
        %v1116 = vpop.f32.mrb[0].mxu0
        %v1117 = vpop.f32.mrb[0].mxu0
        %v1118 = vadd.f32 %v826, %v1117
        %v1119 = vpop.f32.mrb[0].mxu0
        %1120 = vmatprep.mubr.bf16.mxu0 0
        %1121 = vmatmul.mubr.bf16.gmra.mrb[0].mxu0 %v1013
        %v1122 = vpop.f32.mrb[0].mxu0
        %v1123 = vadd.f32 %v831, %v1122
        %v1124 = vpop.f32.mrb[0].mxu0
        %v1125 = vpop.f32.mrb[0].mxu0
        %v1126 = vadd.f32 %v834, %v1125
        %v1127 = vpop.f32.mrb[0].mxu0
        %1128 = vmatprep.mubr.bf16.mxu0 0
        %1129 = vmatmul.mubr.bf16.gmra.mrb[0].mxu0 %v1016
        %v1130 = vpop.f32.mrb[0].mxu0
        %v1131 = vadd.f32 %v839, %v1130
        %v1132 = vpop.f32.mrb[0].mxu0
        %v1133 = vpop.f32.mrb[0].mxu0
        %v1134 = vadd.f32 %v842, %v1133
        %v1135 = vpop.f32.mrb[0].mxu0
        %1136 = vmatprep.mubr.bf16.mxu0 0
        %1137 = vmatmul.mubr.bf16.gmra.mrb[0].mxu0 %v1019
        %v1138 = vpop.f32.mrb[0].mxu0
        %v1139 = vadd.f32 %v847, %v1138
        %v1140 = vpop.f32.mrb[0].mxu0
        %v1141 = vpop.f32.mrb[0].mxu0
        %v1142 = vadd.f32 %v850, %v1141
        %v1143 = vpop.f32.mrb[0].mxu0
        %1144 = vmatprep.mubr.bf16.mxu0 0
        %1145 = vmatmul.mubr.bf16.gmra.mrb[0].mxu0 %v1022
        %v1146 = vpop.f32.mrb[0].mxu0
        %v1147 = vadd.f32 %v855, %v1146
        %v1148 = vpop.f32.mrb[0].mxu0
        %v1149 = vpop.f32.mrb[0].mxu0
        %v1150 = vadd.f32 %v858, %v1149
        %v1151 = vpop.f32.mrb[0].mxu0
        %1152 = vmatprep.mubr.bf16.mxu0 0
        %1153 = vmatmul.mubr.bf16.gmra.mrb[0].mxu0 %v1025
        %v1154 = vpop.f32.mrb[0].mxu0
        %v1155 = vadd.f32 %v863, %v1154
        %v1156 = vpop.f32.mrb[0].mxu0
        %v1157 = vpop.f32.mrb[0].mxu0
        %v1158 = vadd.f32 %v866, %v1157
        %v1159 = vpop.f32.mrb[0].mxu0
        %1160 = vmatprep.mubr.bf16.mxu0 0
        %1161 = vmatmul.mubr.bf16.gmra.mrb[0].mxu0 %v1028
        %v1162 = vpop.f32.mrb[0].mxu0
        %v1163 = vadd.f32 %v871, %v1162
        %v1164 = vpop.f32.mrb[0].mxu0
        %v1165 = vpop.f32.mrb[0].mxu0
        %v1166 = vadd.f32 %v874, %v1165
        %v1167 = vpop.f32.mrb[0].mxu0
        %1168 = vmatprep.mubr.bf16.mxu0 0
        %1169 = vmatmul.mubr.bf16.gmra.mrb[0].mxu0 %v1031
        %v1170 = vpop.f32.mrb[0].mxu0
        %v1171 = vadd.f32 %v879, %v1170
        %v1172 = vpop.f32.mrb[0].mxu0
        %v1173 = vpop.f32.mrb[0].mxu0
        %v1174 = vadd.f32 %v882, %v1173
        %v1175 = vpop.f32.mrb[0].mxu0
        %1176 = vmatprep.mubr.bf16.mxu0 0
        %1177 = vmatmul.mubr.bf16.gmra.mrb[0].mxu0 %v1034
        %v1178 = vpop.f32.mrb[0].mxu0
        %v1179 = vadd.f32 %v887, %v1178
        %v1180 = vpop.f32.mrb[0].mxu0
        %v1181 = vpop.f32.mrb[0].mxu0
        %v1182 = vadd.f32 %v890, %v1181
        %v1183 = vpop.f32.mrb[0].mxu0
        %1184 = vmatprep.mubr.bf16.mxu0 0
        %1185 = vmatmul.mubr.bf16.gmra.mrb[0].mxu0 %v1037
        %v1186 = vpop.f32.mrb[0].mxu0
        %v1187 = vadd.f32 %v895, %v1186
        %v1188 = vpop.f32.mrb[0].mxu0
        %v1189 = vpop.f32.mrb[0].mxu0
        %v1190 = vadd.f32 %v898, %v1189
        %v1191 = vpop.f32.mrb[0].mxu0
        %1192 = vmatprep.mubr.bf16.mxu0 0
        %1193 = vmatmul.mubr.bf16.gmra.mrb[0].mxu0 %v1040
        %v1194 = vpop.f32.mrb[0].mxu0
        %v1195 = vadd.f32 %v903, %v1194
        %v1196 = vpop.f32.mrb[0].mxu0
        %v1197 = vpop.f32.mrb[0].mxu0
        %v1198 = vadd.f32 %v906, %v1197
        %v1199 = vpop.f32.mrb[0].mxu0
        %1200 = vmatprep.mubr.bf16.mxu0 0
        %1201 = vmatmul.mubr.bf16.gmra.mrb[0].mxu0 %v1043
        %v1202 = vpop.f32.mrb[0].mxu0
        %v1203 = vadd.f32 %v911, %v1202
        %v1204 = vpop.f32.mrb[0].mxu0
        %v1205 = vpop.f32.mrb[0].mxu0
        %v1206 = vadd.f32 %v914, %v1205
        %v1207 = vpop.f32.mrb[0].mxu0
        %1208 = vdwg.mxu0
        %v1209 = vld [vmem:[%s185] sm:$0xe]
        %v1210 = vld [vmem:[%s185 + $0xc] sm:$0xe]
        %v1211 = vld [vmem:[%s185 + $0x18] sm:$0xe]
        %v1212 = vld [vmem:[%s185 + $0x24] sm:$0xe]
        %v1213 = vld [vmem:[%s185 + $0x30] sm:$0xe]
        %v1214 = vld [vmem:[%s185 + $0x3c] sm:$0xe]
        %v1215 = vld [vmem:[%s185 + $0x48] sm:$0xe]
        %v1216 = vld [vmem:[%s185 + $0x54] sm:$0xe]
        %v1217 = vld [vmem:[%s185 + $0x60] sm:$0xe]
        %v1218 = vld [vmem:[%s185 + $0x6c] sm:$0xe]
        %v1219 = vld [vmem:[%s185 + $0x78] sm:$0xe]
        %v1220 = vld [vmem:[%s185 + $0x84] sm:$0xe]
        %v1221 = vld [vmem:[%s185 + $0x90] sm:$0xe]
        %v1222 = vld [vmem:[%s185 + $0x9c] sm:$0xe]
        %v1223 = vld [vmem:[%s185 + $0xa8] sm:$0xe]
        %v1224 = vld [vmem:[%s185 + $0xb4] sm:$0xe]
        %vm1257 = vcmask 1042432
        %vm1258 = vcmask 1046532
        %vm1259 = vmor %vm1257, %vm1258
        %v1260 = vrot.slane %v1209, 5
        %v1261 = vrot.slane %v1260, 4
        %v1262 = vrot.slane %v218, 5
        %v1263 = vsel %vm1259, %v1261, %v1262
        %v1264 = vrot.slane %v1262, 4
        %v1265 = vrot.slane %v250, 5
        %v1266 = vsel %vm1259, %v1264, %v1265
        %v1267 = vrot.slane %v1210, 5
        %v1268 = vrot.slane %v1267, 4
        %v1269 = vrot.slane %v220, 5
        %v1270 = vsel %vm1259, %v1268, %v1269
        %v1271 = vrot.slane %v1269, 4
        %v1272 = vrot.slane %v251, 5
        %v1273 = vsel %vm1259, %v1271, %v1272
        %v1274 = vrot.slane %v1211, 5
        %v1275 = vrot.slane %v1274, 4
        %v1276 = vrot.slane %v222, 5
        %v1277 = vsel %vm1259, %v1275, %v1276
        %v1278 = vrot.slane %v1276, 4
        %v1279 = vrot.slane %v252, 5
        %v1280 = vsel %vm1259, %v1278, %v1279
        %v1281 = vrot.slane %v1212, 5
        %v1282 = vrot.slane %v1281, 4
        %v1283 = vrot.slane %v224, 5
        %v1284 = vsel %vm1259, %v1282, %v1283
        %v1285 = vrot.slane %v1283, 4
        %v1286 = vrot.slane %v253, 5
        %v1287 = vsel %vm1259, %v1285, %v1286
        %v1288 = vrot.slane %v1213, 5
        %v1289 = vrot.slane %v1288, 4
        %v1290 = vrot.slane %v226, 5
        %v1291 = vsel %vm1259, %v1289, %v1290
        %v1292 = vrot.slane %v1290, 4
        %v1293 = vrot.slane %v254, 5
        %v1294 = vsel %vm1259, %v1292, %v1293
        %v1295 = vrot.slane %v1214, 5
        %v1296 = vrot.slane %v1295, 4
        %v1297 = vrot.slane %v228, 5
        %v1298 = vsel %vm1259, %v1296, %v1297
        %v1299 = vrot.slane %v1297, 4
        %v1300 = vrot.slane %v255, 5
        %v1301 = vsel %vm1259, %v1299, %v1300
        %v1302 = vrot.slane %v1215, 5
        %v1303 = vrot.slane %v1302, 4
        %v1304 = vrot.slane %v230, 5
        %v1305 = vsel %vm1259, %v1303, %v1304
        %v1306 = vrot.slane %v1304, 4
        %v1307 = vrot.slane %v256, 5
        %v1308 = vsel %vm1259, %v1306, %v1307
        %v1309 = vrot.slane %v1216, 5
        %v1310 = vrot.slane %v1309, 4
        %v1311 = vrot.slane %v232, 5
        %v1312 = vsel %vm1259, %v1310, %v1311
        %v1313 = vrot.slane %v1311, 4
        %v1314 = vrot.slane %v257, 5
        %v1315 = vsel %vm1259, %v1313, %v1314
        %v1316 = vrot.slane %v1217, 5
        %v1317 = vrot.slane %v1316, 4
        %v1318 = vrot.slane %v234, 5
        %v1319 = vsel %vm1259, %v1317, %v1318
        %v1320 = vrot.slane %v1318, 4
        %v1321 = vrot.slane %v258, 5
        %v1322 = vsel %vm1259, %v1320, %v1321
        %v1323 = vrot.slane %v1218, 5
        %v1324 = vrot.slane %v1323, 4
        %v1325 = vrot.slane %v236, 5
        %v1326 = vsel %vm1259, %v1324, %v1325
        %v1327 = vrot.slane %v1325, 4
        %v1328 = vrot.slane %v259, 5
        %v1329 = vsel %vm1259, %v1327, %v1328
        %v1330 = vrot.slane %v1219, 5
        %v1331 = vrot.slane %v1330, 4
        %v1332 = vrot.slane %v238, 5
        %v1333 = vsel %vm1259, %v1331, %v1332
        %v1334 = vrot.slane %v1332, 4
        %v1335 = vrot.slane %v260, 5
        %v1336 = vsel %vm1259, %v1334, %v1335
        %v1337 = vrot.slane %v1220, 5
        %v1338 = vrot.slane %v1337, 4
        %v1339 = vrot.slane %v240, 5
        %v1340 = vsel %vm1259, %v1338, %v1339
        %v1341 = vrot.slane %v1339, 4
        %v1342 = vrot.slane %v261, 5
        %v1343 = vsel %vm1259, %v1341, %v1342
        %v1344 = vrot.slane %v1221, 5
        %v1345 = vrot.slane %v1344, 4
        %v1346 = vrot.slane %v242, 5
        %v1347 = vsel %vm1259, %v1345, %v1346
        %v1348 = vrot.slane %v1346, 4
        %v1349 = vrot.slane %v262, 5
        %v1350 = vsel %vm1259, %v1348, %v1349
        %v1351 = vrot.slane %v1222, 5
        %v1352 = vrot.slane %v1351, 4
        %v1353 = vrot.slane %v244, 5
        %v1354 = vsel %vm1259, %v1352, %v1353
        %v1355 = vrot.slane %v1353, 4
        %v1356 = vrot.slane %v263, 5
        %v1357 = vsel %vm1259, %v1355, %v1356
        %v1358 = vrot.slane %v1223, 5
        %v1359 = vrot.slane %v1358, 4
        %v1360 = vrot.slane %v246, 5
        %v1361 = vsel %vm1259, %v1359, %v1360
        %v1362 = vrot.slane %v1360, 4
        %v1363 = vrot.slane %v264, 5
        %v1364 = vsel %vm1259, %v1362, %v1363
        %v1365 = vrot.slane %v1224, 5
        %v1366 = vrot.slane %v1365, 4
        %v1367 = vrot.slane %v248, 5
        %v1368 = vsel %vm1259, %v1366, %v1367
        %v1369 = vrot.slane %v1367, 4
        %v1370 = vrot.slane %v265, 5
        %v1371 = vsel %vm1259, %v1369, %v1370
        %s1372 = scalar_lea.vmem [#allocation5], 4
        %v1373 = vld [vmem:[%s1372] sm:$0x3]
        %v1374 = vunpack.c.l.b16 %v1263
        %v1375 = vunpack.c.l.b16 %v1266
        %v1376 = vunpack.c.l.b16 %v1270
        %v1377 = vunpack.c.l.b16 %v1273
        %v1378 = vunpack.c.l.b16 %v1277
        %v1379 = vunpack.c.l.b16 %v1280
        %v1380 = vunpack.c.l.b16 %v1284
        %v1381 = vunpack.c.l.b16 %v1287
        %v1382 = vunpack.c.l.b16 %v1291
        %v1383 = vunpack.c.l.b16 %v1294
        %v1384 = vunpack.c.l.b16 %v1298
        %v1385 = vunpack.c.l.b16 %v1301
        %v1386 = vunpack.c.l.b16 %v1305
        %v1387 = vunpack.c.l.b16 %v1308
        %v1388 = vunpack.c.l.b16 %v1312
        %v1389 = vunpack.c.l.b16 %v1315
        %v1390 = vunpack.c.l.b16 %v1319
        %v1391 = vunpack.c.l.b16 %v1322
        %v1392 = vunpack.c.l.b16 %v1326
        %v1393 = vunpack.c.l.b16 %v1329
        %v1394 = vunpack.c.l.b16 %v1333
        %v1395 = vunpack.c.l.b16 %v1336
        %v1396 = vunpack.c.l.b16 %v1340
        %v1397 = vunpack.c.l.b16 %v1343
        %v1398 = vunpack.c.l.b16 %v1347
        %v1399 = vunpack.c.l.b16 %v1350
        %v1400 = vunpack.c.l.b16 %v1354
        %v1401 = vunpack.c.l.b16 %v1357
        %v1402 = vunpack.c.l.b16 %v1361
        %v1403 = vunpack.c.l.b16 %v1364
        %v1404 = vunpack.c.l.b16 %v1368
        %v1405 = vunpack.c.l.b16 %v1371
        %v1406 = vpack.c.b16 %v1375, %v1374
        %v1407 = vpack.c.b16 %v1377, %v1376
        %v1408 = vpack.c.b16 %v1379, %v1378
        %v1409 = vpack.c.b16 %v1381, %v1380
        %v1410 = vpack.c.b16 %v1383, %v1382
        %v1411 = vpack.c.b16 %v1385, %v1384
        %v1412 = vpack.c.b16 %v1387, %v1386
        %v1413 = vpack.c.b16 %v1389, %v1388
        %v1414 = vpack.c.b16 %v1391, %v1390
        %v1415 = vpack.c.b16 %v1393, %v1392
        %v1416 = vpack.c.b16 %v1395, %v1394
        %v1417 = vpack.c.b16 %v1397, %v1396
        %v1418 = vpack.c.b16 %v1399, %v1398
        %v1419 = vpack.c.b16 %v1401, %v1400
        %v1420 = vpack.c.b16 %v1403, %v1402
        %v1421 = vpack.c.b16 %v1405, %v1404
        %v1423 = vsel %vm703, %v1406, 0
        %v1426 = vsel %vm703, %v1407, 0
        %v1429 = vsel %vm703, %v1408, 0
        %v1432 = vsel %vm703, %v1409, 0
        %v1435 = vsel %vm703, %v1410, 0
        %v1438 = vsel %vm703, %v1411, 0
        %v1441 = vsel %vm703, %v1412, 0
        %v1444 = vsel %vm703, %v1413, 0
        %v1447 = vsel %vm703, %v1414, 0
        %v1450 = vsel %vm703, %v1415, 0
        %v1453 = vsel %vm703, %v1416, 0
        %v1456 = vsel %vm703, %v1417, 0
        %v1459 = vsel %vm703, %v1418, 0
        %v1462 = vsel %vm703, %v1419, 0
        %v1465 = vsel %vm703, %v1420, 0
        %v1468 = vsel %vm703, %v1421, 0
        %v1471 = vsel %vm752, %v1373, 0
        %1473 = vmatprep.subr.bf16.mxu0 0
        %1474 = vmatpush1.bf16.msra.mxu0 %v1471
        %1475 = vmatprep.subr.bf16.mxu0 0
        %1476 = vmatpush1.bf16.msra.mxu0 0
        %1477 = vmatprep.subr.bf16.mxu0 0
        %1478 = vmatpush1.bf16.msra.mxu0 0
        %1479 = vmatprep.subr.bf16.mxu0 0
        %1480 = vmatpush1.bf16.msra.mxu0 0
        %1481 = vmatprep.subr.bf16.mxu0 0
        %1482 = vmatpush1.bf16.msra.mxu0 0
        %1483 = vmatprep.subr.bf16.mxu0 0
        %1484 = vmatpush1.bf16.msra.mxu0 0
        %1485 = vmatprep.subr.bf16.mxu0 0
        %1486 = vmatpush1.bf16.msra.mxu0 0
        %1487 = vmatprep.subr.bf16.mxu0 0
        %1488 = vmatpush1.bf16.msra.mxu0 0
        %1489 = vmatprep.subr.bf16.mxu0 0
        %1490 = vmatpush1.bf16.msra.mxu0 0
        %1491 = vmatprep.subr.bf16.mxu0 0
        %1492 = vmatpush1.bf16.msra.mxu0 0
        %1493 = vmatprep.subr.bf16.mxu0 0
        %1494 = vmatpush1.bf16.msra.mxu0 0
        %1495 = vmatprep.subr.bf16.mxu0 0
        %1496 = vmatpush1.bf16.msra.mxu0 0
        %1497 = vmatprep.subr.bf16.mxu0 0
        %1498 = vmatpush1.bf16.msra.mxu0 0
        %1499 = vmatprep.subr.bf16.mxu0 0
        %1500 = vmatpush1.bf16.msra.mxu0 0
        %1501 = vmatprep.subr.bf16.mxu0 0
        %1502 = vmatpush1.bf16.msra.mxu0 0
        %1503 = vmatprep.subr.bf16.mxu0 0
        %1504 = vmatpush1.bf16.msra.mxu0 0
        %1505 = vmatprep.mubr.bf16.mxu0 0
        %1506 = vmatmul.mubr.bf16.gmra.mrb[0].mxu0 %v1423
        %v1507 = vpop.f32.mrb[0].mxu0
        %v1508 = vadd.f32 0.0, %v1507
        %v1509 = vpop.f32.mrb[0].mxu0
        %v1510 = vpop.f32.mrb[0].mxu0
        %v1511 = vadd.f32 0.0, %v1510
        %v1512 = vpop.f32.mrb[0].mxu0
        %1513 = vmatprep.mubr.bf16.mxu0 0
        %1514 = vmatmul.mubr.bf16.gmra.mrb[0].mxu0 %v1426
        %v1515 = vpop.f32.mrb[0].mxu0
        %v1516 = vadd.f32 0.0, %v1515
        %v1517 = vpop.f32.mrb[0].mxu0
        %v1518 = vpop.f32.mrb[0].mxu0
        %v1519 = vadd.f32 0.0, %v1518
        %v1520 = vpop.f32.mrb[0].mxu0
        %1521 = vmatprep.mubr.bf16.mxu0 0
        %1522 = vmatmul.mubr.bf16.gmra.mrb[0].mxu0 %v1429
        %v1523 = vpop.f32.mrb[0].mxu0
        %v1524 = vadd.f32 0.0, %v1523
        %v1525 = vpop.f32.mrb[0].mxu0
        %v1526 = vpop.f32.mrb[0].mxu0
        %v1527 = vadd.f32 0.0, %v1526
        %v1528 = vpop.f32.mrb[0].mxu0
        %1529 = vmatprep.mubr.bf16.mxu0 0
        %1530 = vmatmul.mubr.bf16.gmra.mrb[0].mxu0 %v1432
        %v1531 = vpop.f32.mrb[0].mxu0
        %v1532 = vadd.f32 0.0, %v1531
        %v1533 = vpop.f32.mrb[0].mxu0
        %v1534 = vpop.f32.mrb[0].mxu0
        %v1535 = vadd.f32 0.0, %v1534
        %v1536 = vpop.f32.mrb[0].mxu0
        %1537 = vmatprep.mubr.bf16.mxu0 0
        %1538 = vmatmul.mubr.bf16.gmra.mrb[0].mxu0 %v1435
        %v1539 = vpop.f32.mrb[0].mxu0
        %v1540 = vadd.f32 0.0, %v1539
        %v1541 = vpop.f32.mrb[0].mxu0
        %v1542 = vpop.f32.mrb[0].mxu0
        %v1543 = vadd.f32 0.0, %v1542
        %v1544 = vpop.f32.mrb[0].mxu0
        %1545 = vmatprep.mubr.bf16.mxu0 0
        %1546 = vmatmul.mubr.bf16.gmra.mrb[0].mxu0 %v1438
        %v1547 = vpop.f32.mrb[0].mxu0
        %v1548 = vadd.f32 0.0, %v1547
        %v1549 = vpop.f32.mrb[0].mxu0
        %v1550 = vpop.f32.mrb[0].mxu0
        %v1551 = vadd.f32 0.0, %v1550
        %v1552 = vpop.f32.mrb[0].mxu0
        %1553 = vmatprep.mubr.bf16.mxu0 0
        %1554 = vmatmul.mubr.bf16.gmra.mrb[0].mxu0 %v1441
        %v1555 = vpop.f32.mrb[0].mxu0
        %v1556 = vadd.f32 0.0, %v1555
        %v1557 = vpop.f32.mrb[0].mxu0
        %v1558 = vpop.f32.mrb[0].mxu0
        %v1559 = vadd.f32 0.0, %v1558
        %v1560 = vpop.f32.mrb[0].mxu0
        %1561 = vmatprep.mubr.bf16.mxu0 0
        %1562 = vmatmul.mubr.bf16.gmra.mrb[0].mxu0 %v1444
        %v1563 = vpop.f32.mrb[0].mxu0
        %v1564 = vadd.f32 0.0, %v1563
        %v1565 = vpop.f32.mrb[0].mxu0
        %v1566 = vpop.f32.mrb[0].mxu0
        %v1567 = vadd.f32 0.0, %v1566
        %v1568 = vpop.f32.mrb[0].mxu0
        %1569 = vmatprep.mubr.bf16.mxu0 0
        %1570 = vmatmul.mubr.bf16.gmra.mrb[0].mxu0 %v1447
        %v1571 = vpop.f32.mrb[0].mxu0
        %v1572 = vadd.f32 0.0, %v1571
        %v1573 = vpop.f32.mrb[0].mxu0
        %v1574 = vpop.f32.mrb[0].mxu0
        %v1575 = vadd.f32 0.0, %v1574
        %v1576 = vpop.f32.mrb[0].mxu0
        %1577 = vmatprep.mubr.bf16.mxu0 0
        %1578 = vmatmul.mubr.bf16.gmra.mrb[0].mxu0 %v1450
        %v1579 = vpop.f32.mrb[0].mxu0
        %v1580 = vadd.f32 0.0, %v1579
        %v1581 = vpop.f32.mrb[0].mxu0
        %v1582 = vpop.f32.mrb[0].mxu0
        %v1583 = vadd.f32 0.0, %v1582
        %v1584 = vpop.f32.mrb[0].mxu0
        %1585 = vmatprep.mubr.bf16.mxu0 0
        %1586 = vmatmul.mubr.bf16.gmra.mrb[0].mxu0 %v1453
        %v1587 = vpop.f32.mrb[0].mxu0
        %v1588 = vadd.f32 0.0, %v1587
        %v1589 = vpop.f32.mrb[0].mxu0
        %v1590 = vpop.f32.mrb[0].mxu0
        %v1591 = vadd.f32 0.0, %v1590
        %v1592 = vpop.f32.mrb[0].mxu0
        %1593 = vmatprep.mubr.bf16.mxu0 0
        %1594 = vmatmul.mubr.bf16.gmra.mrb[0].mxu0 %v1456
        %v1595 = vpop.f32.mrb[0].mxu0
        %v1596 = vadd.f32 0.0, %v1595
        %v1597 = vpop.f32.mrb[0].mxu0
        %v1598 = vpop.f32.mrb[0].mxu0
        %v1599 = vadd.f32 0.0, %v1598
        %v1600 = vpop.f32.mrb[0].mxu0
        %1601 = vmatprep.mubr.bf16.mxu0 0
        %1602 = vmatmul.mubr.bf16.gmra.mrb[0].mxu0 %v1459
        %v1603 = vpop.f32.mrb[0].mxu0
        %v1604 = vadd.f32 0.0, %v1603
        %v1605 = vpop.f32.mrb[0].mxu0
        %v1606 = vpop.f32.mrb[0].mxu0
        %v1607 = vadd.f32 0.0, %v1606
        %v1608 = vpop.f32.mrb[0].mxu0
        %1609 = vmatprep.mubr.bf16.mxu0 0
        %1610 = vmatmul.mubr.bf16.gmra.mrb[0].mxu0 %v1462
        %v1611 = vpop.f32.mrb[0].mxu0
        %v1612 = vadd.f32 0.0, %v1611
        %v1613 = vpop.f32.mrb[0].mxu0
        %v1614 = vpop.f32.mrb[0].mxu0
        %v1615 = vadd.f32 0.0, %v1614
        %v1616 = vpop.f32.mrb[0].mxu0
        %1617 = vmatprep.mubr.bf16.mxu0 0
        %1618 = vmatmul.mubr.bf16.gmra.mrb[0].mxu0 %v1465
        %v1619 = vpop.f32.mrb[0].mxu0
        %v1620 = vadd.f32 0.0, %v1619
        %v1621 = vpop.f32.mrb[0].mxu0
        %v1622 = vpop.f32.mrb[0].mxu0
        %v1623 = vadd.f32 0.0, %v1622
        %v1624 = vpop.f32.mrb[0].mxu0
        %1625 = vmatprep.mubr.bf16.mxu0 0
        %1626 = vmatmul.mubr.bf16.gmra.mrb[0].mxu0 %v1468
        %v1627 = vpop.f32.mrb[0].mxu0
        %v1628 = vadd.f32 0.0, %v1627
        %v1629 = vpop.f32.mrb[0].mxu0
        %v1630 = vpop.f32.mrb[0].mxu0
        %v1631 = vadd.f32 0.0, %v1630
        %v1632 = vpop.f32.mrb[0].mxu0
        %1633 = vdwg.mxu0
        %v1634 = vadd.f32 %v1083, %v1508
        %v1635 = vadd.f32 %v1086, %v1511
        %v1636 = vadd.f32 %v1091, %v1516
        %v1637 = vadd.f32 %v1094, %v1519
        %v1638 = vadd.f32 %v1099, %v1524
        %v1639 = vadd.f32 %v1102, %v1527
        %v1640 = vadd.f32 %v1107, %v1532
        %v1641 = vadd.f32 %v1110, %v1535
        %v1642 = vadd.f32 %v1115, %v1540
        %v1643 = vadd.f32 %v1118, %v1543
        %v1644 = vadd.f32 %v1123, %v1548
        %v1645 = vadd.f32 %v1126, %v1551
        %v1646 = vadd.f32 %v1131, %v1556
        %v1647 = vadd.f32 %v1134, %v1559
        %v1648 = vadd.f32 %v1139, %v1564
        %v1649 = vadd.f32 %v1142, %v1567
        %v1650 = vadd.f32 %v1147, %v1572
        %v1651 = vadd.f32 %v1150, %v1575
        %v1652 = vadd.f32 %v1155, %v1580
        %v1653 = vadd.f32 %v1158, %v1583
        %v1654 = vadd.f32 %v1163, %v1588
        %v1655 = vadd.f32 %v1166, %v1591
        %v1656 = vadd.f32 %v1171, %v1596
        %v1657 = vadd.f32 %v1174, %v1599
        %v1658 = vadd.f32 %v1179, %v1604
        %v1659 = vadd.f32 %v1182, %v1607
        %v1660 = vadd.f32 %v1187, %v1612
        %v1661 = vadd.f32 %v1190, %v1615
        %v1662 = vadd.f32 %v1195, %v1620
        %v1663 = vadd.f32 %v1198, %v1623
        %v1664 = vadd.f32 %v1203, %v1628
        %v1665 = vadd.f32 %v1206, %v1631
        %s1666 = scalar_lea.vmem %s185, 12 [#allocation2]
        %v1667 = vld [vmem:[%s1666] sm:$0xf]
        %v1668 = vld [vmem:[%s1666 + $0x4] sm:$0xf]
        %v1669 = vld [vmem:[%s1666 + $0xc] sm:$0xf]
        %v1670 = vld [vmem:[%s1666 + $0x10] sm:$0xf]
        %v1671 = vld [vmem:[%s1666 + $0x18] sm:$0xf]
        %v1672 = vld [vmem:[%s1666 + $0x1c] sm:$0xf]
        %v1673 = vld [vmem:[%s1666 + $0x24] sm:$0xf]
        %v1674 = vld [vmem:[%s1666 + $0x28] sm:$0xf]
        %v1675 = vld [vmem:[%s1666 + $0x30] sm:$0xf]
        %v1676 = vld [vmem:[%s1666 + $0x34] sm:$0xf]
        %v1677 = vld [vmem:[%s1666 + $0x3c] sm:$0xf]
        %v1678 = vld [vmem:[%s1666 + $0x40] sm:$0xf]
        %v1679 = vld [vmem:[%s1666 + $0x48] sm:$0xf]
        %v1680 = vld [vmem:[%s1666 + $0x4c] sm:$0xf]
        %v1681 = vld [vmem:[%s1666 + $0x54] sm:$0xf]
        %v1682 = vld [vmem:[%s1666 + $0x58] sm:$0xf]
        %v1683 = vld [vmem:[%s1666 + $0x60] sm:$0xf]
        %v1684 = vld [vmem:[%s1666 + $0x64] sm:$0xf]
        %v1685 = vld [vmem:[%s1666 + $0x6c] sm:$0xf]
        %v1686 = vld [vmem:[%s1666 + $0x70] sm:$0xf]
        %v1687 = vld [vmem:[%s1666 + $0x78] sm:$0xf]
        %v1688 = vld [vmem:[%s1666 + $0x7c] sm:$0xf]
        %v1689 = vld [vmem:[%s1666 + $0x84] sm:$0xf]
        %v1690 = vld [vmem:[%s1666 + $0x88] sm:$0xf]
        %v1691 = vld [vmem:[%s1666 + $0x90] sm:$0xf]
        %v1692 = vld [vmem:[%s1666 + $0x94] sm:$0xf]
        %v1693 = vld [vmem:[%s1666 + $0x9c] sm:$0xf]
        %v1694 = vld [vmem:[%s1666 + $0xa0] sm:$0xf]
        %v1695 = vld [vmem:[%s1666 + $0xa8] sm:$0xf]
        %v1696 = vld [vmem:[%s1666 + $0xac] sm:$0xf]
        %v1697 = vld [vmem:[%s1666 + $0xb4] sm:$0xf]
        %v1698 = vld [vmem:[%s1666 + $0xb8] sm:$0xf]
        %s1699 = scalar_lea.vmem [#allocation5], 6
        %v1700 = vld [vmem:[%s1699] sm:$0x3]
        %v1733 = vunpack.c.l.b16 %v1667
        %v1734 = vunpack.c.l.b16 %v1668
        %v1735 = vunpack.c.l.b16 %v1669
        %v1736 = vunpack.c.l.b16 %v1670
        %v1737 = vunpack.c.l.b16 %v1671
        %v1738 = vunpack.c.l.b16 %v1672
        %v1739 = vunpack.c.l.b16 %v1673
        %v1740 = vunpack.c.l.b16 %v1674
        %v1741 = vunpack.c.l.b16 %v1675
        %v1742 = vunpack.c.l.b16 %v1676
        %v1743 = vunpack.c.l.b16 %v1677
        %v1744 = vunpack.c.l.b16 %v1678
        %v1745 = vunpack.c.l.b16 %v1679
        %v1746 = vunpack.c.l.b16 %v1680
        %v1747 = vunpack.c.l.b16 %v1681
        %v1748 = vunpack.c.l.b16 %v1682
        %v1749 = vunpack.c.l.b16 %v1683
        %v1750 = vunpack.c.l.b16 %v1684
        %v1751 = vunpack.c.l.b16 %v1685
        %v1752 = vunpack.c.l.b16 %v1686
        %v1753 = vunpack.c.l.b16 %v1687
        %v1754 = vunpack.c.l.b16 %v1688
        %v1755 = vunpack.c.l.b16 %v1689
        %v1756 = vunpack.c.l.b16 %v1690
        %v1757 = vunpack.c.l.b16 %v1691
        %v1758 = vunpack.c.l.b16 %v1692
        %v1759 = vunpack.c.l.b16 %v1693
        %v1760 = vunpack.c.l.b16 %v1694
        %v1761 = vunpack.c.l.b16 %v1695
        %v1762 = vunpack.c.l.b16 %v1696
        %v1763 = vunpack.c.l.b16 %v1697
        %v1764 = vunpack.c.l.b16 %v1698
        %v1765 = vpack.c.b16 %v1734, %v1733
        %v1766 = vpack.c.b16 %v1736, %v1735
        %v1767 = vpack.c.b16 %v1738, %v1737
        %v1768 = vpack.c.b16 %v1740, %v1739
        %v1769 = vpack.c.b16 %v1742, %v1741
        %v1770 = vpack.c.b16 %v1744, %v1743
        %v1771 = vpack.c.b16 %v1746, %v1745
        %v1772 = vpack.c.b16 %v1748, %v1747
        %v1773 = vpack.c.b16 %v1750, %v1749
        %v1774 = vpack.c.b16 %v1752, %v1751
        %v1775 = vpack.c.b16 %v1754, %v1753
        %v1776 = vpack.c.b16 %v1756, %v1755
        %v1777 = vpack.c.b16 %v1758, %v1757
        %v1778 = vpack.c.b16 %v1760, %v1759
        %v1779 = vpack.c.b16 %v1762, %v1761
        %v1780 = vpack.c.b16 %v1764, %v1763
        %v1782 = vsel %vm703, %v1765, 0
        %v1785 = vsel %vm703, %v1766, 0
        %v1788 = vsel %vm703, %v1767, 0
        %v1791 = vsel %vm703, %v1768, 0
        %v1794 = vsel %vm703, %v1769, 0
        %v1797 = vsel %vm703, %v1770, 0
        %v1800 = vsel %vm703, %v1771, 0
        %v1803 = vsel %vm703, %v1772, 0
        %v1806 = vsel %vm703, %v1773, 0
        %v1809 = vsel %vm703, %v1774, 0
        %v1812 = vsel %vm703, %v1775, 0
        %v1815 = vsel %vm703, %v1776, 0
        %v1818 = vsel %vm703, %v1777, 0
        %v1821 = vsel %vm703, %v1778, 0
        %v1824 = vsel %vm703, %v1779, 0
        %v1827 = vsel %vm703, %v1780, 0
        %v1830 = vsel %vm752, %v1700, 0
        %1832 = vmatprep.subr.bf16.mxu0 0
        %1833 = vmatpush1.bf16.msra.mxu0 %v1830
        %1834 = vmatprep.subr.bf16.mxu0 0
        %1835 = vmatpush1.bf16.msra.mxu0 0
        %1836 = vmatprep.subr.bf16.mxu0 0
        %1837 = vmatpush1.bf16.msra.mxu0 0
        %1838 = vmatprep.subr.bf16.mxu0 0
        %1839 = vmatpush1.bf16.msra.mxu0 0
        %1840 = vmatprep.subr.bf16.mxu0 0
        %1841 = vmatpush1.bf16.msra.mxu0 0
        %1842 = vmatprep.subr.bf16.mxu0 0
        %1843 = vmatpush1.bf16.msra.mxu0 0
        %1844 = vmatprep.subr.bf16.mxu0 0
        %1845 = vmatpush1.bf16.msra.mxu0 0
        %1846 = vmatprep.subr.bf16.mxu0 0
        %1847 = vmatpush1.bf16.msra.mxu0 0
        %1848 = vmatprep.subr.bf16.mxu0 0
        %1849 = vmatpush1.bf16.msra.mxu0 0
        %1850 = vmatprep.subr.bf16.mxu0 0
        %1851 = vmatpush1.bf16.msra.mxu0 0
        %1852 = vmatprep.subr.bf16.mxu0 0
        %1853 = vmatpush1.bf16.msra.mxu0 0
        %1854 = vmatprep.subr.bf16.mxu0 0
        %1855 = vmatpush1.bf16.msra.mxu0 0
        %1856 = vmatprep.subr.bf16.mxu0 0
        %1857 = vmatpush1.bf16.msra.mxu0 0
        %1858 = vmatprep.subr.bf16.mxu0 0
        %1859 = vmatpush1.bf16.msra.mxu0 0
        %1860 = vmatprep.subr.bf16.mxu0 0
        %1861 = vmatpush1.bf16.msra.mxu0 0
        %1862 = vmatprep.subr.bf16.mxu0 0
        %1863 = vmatpush1.bf16.msra.mxu0 0
        %1864 = vmatprep.mubr.bf16.mxu0 0
        %1865 = vmatmul.mubr.bf16.gmra.mrb[0].mxu0 %v1782
        %v1866 = vpop.f32.mrb[0].mxu0
        %v1867 = vadd.f32 0.0, %v1866
        %v1868 = vpop.f32.mrb[0].mxu0
        %v1869 = vpop.f32.mrb[0].mxu0
        %v1870 = vadd.f32 0.0, %v1869
        %v1871 = vpop.f32.mrb[0].mxu0
        %1872 = vmatprep.mubr.bf16.mxu0 0
        %1873 = vmatmul.mubr.bf16.gmra.mrb[0].mxu0 %v1785
        %v1874 = vpop.f32.mrb[0].mxu0
        %v1875 = vadd.f32 0.0, %v1874
        %v1876 = vpop.f32.mrb[0].mxu0
        %v1877 = vpop.f32.mrb[0].mxu0
        %v1878 = vadd.f32 0.0, %v1877
        %v1879 = vpop.f32.mrb[0].mxu0
        %1880 = vmatprep.mubr.bf16.mxu0 0
        %1881 = vmatmul.mubr.bf16.gmra.mrb[0].mxu0 %v1788
        %v1882 = vpop.f32.mrb[0].mxu0
        %v1883 = vadd.f32 0.0, %v1882
        %v1884 = vpop.f32.mrb[0].mxu0
        %v1885 = vpop.f32.mrb[0].mxu0
        %v1886 = vadd.f32 0.0, %v1885
        %v1887 = vpop.f32.mrb[0].mxu0
        %1888 = vmatprep.mubr.bf16.mxu0 0
        %1889 = vmatmul.mubr.bf16.gmra.mrb[0].mxu0 %v1791
        %v1890 = vpop.f32.mrb[0].mxu0
        %v1891 = vadd.f32 0.0, %v1890
        %v1892 = vpop.f32.mrb[0].mxu0
        %v1893 = vpop.f32.mrb[0].mxu0
        %v1894 = vadd.f32 0.0, %v1893
        %v1895 = vpop.f32.mrb[0].mxu0
        %1896 = vmatprep.mubr.bf16.mxu0 0
        %1897 = vmatmul.mubr.bf16.gmra.mrb[0].mxu0 %v1794
        %v1898 = vpop.f32.mrb[0].mxu0
        %v1899 = vadd.f32 0.0, %v1898
        %v1900 = vpop.f32.mrb[0].mxu0
        %v1901 = vpop.f32.mrb[0].mxu0
        %v1902 = vadd.f32 0.0, %v1901
        %v1903 = vpop.f32.mrb[0].mxu0
        %1904 = vmatprep.mubr.bf16.mxu0 0
        %1905 = vmatmul.mubr.bf16.gmra.mrb[0].mxu0 %v1797
        %v1906 = vpop.f32.mrb[0].mxu0
        %v1907 = vadd.f32 0.0, %v1906
        %v1908 = vpop.f32.mrb[0].mxu0
        %v1909 = vpop.f32.mrb[0].mxu0
        %v1910 = vadd.f32 0.0, %v1909
        %v1911 = vpop.f32.mrb[0].mxu0
        %1912 = vmatprep.mubr.bf16.mxu0 0
        %1913 = vmatmul.mubr.bf16.gmra.mrb[0].mxu0 %v1800
        %v1914 = vpop.f32.mrb[0].mxu0
        %v1915 = vadd.f32 0.0, %v1914
        %v1916 = vpop.f32.mrb[0].mxu0
        %v1917 = vpop.f32.mrb[0].mxu0
        %v1918 = vadd.f32 0.0, %v1917
        %v1919 = vpop.f32.mrb[0].mxu0
        %1920 = vmatprep.mubr.bf16.mxu0 0
        %1921 = vmatmul.mubr.bf16.gmra.mrb[0].mxu0 %v1803
        %v1922 = vpop.f32.mrb[0].mxu0
        %v1923 = vadd.f32 0.0, %v1922
        %v1924 = vpop.f32.mrb[0].mxu0
        %v1925 = vpop.f32.mrb[0].mxu0
        %v1926 = vadd.f32 0.0, %v1925
        %v1927 = vpop.f32.mrb[0].mxu0
        %1928 = vmatprep.mubr.bf16.mxu0 0
        %1929 = vmatmul.mubr.bf16.gmra.mrb[0].mxu0 %v1806
        %v1930 = vpop.f32.mrb[0].mxu0
        %v1931 = vadd.f32 0.0, %v1930
        %v1932 = vpop.f32.mrb[0].mxu0
        %v1933 = vpop.f32.mrb[0].mxu0
        %v1934 = vadd.f32 0.0, %v1933
        %v1935 = vpop.f32.mrb[0].mxu0
        %1936 = vmatprep.mubr.bf16.mxu0 0
        %1937 = vmatmul.mubr.bf16.gmra.mrb[0].mxu0 %v1809
        %v1938 = vpop.f32.mrb[0].mxu0
        %v1939 = vadd.f32 0.0, %v1938
        %v1940 = vpop.f32.mrb[0].mxu0
        %v1941 = vpop.f32.mrb[0].mxu0
        %v1942 = vadd.f32 0.0, %v1941
        %v1943 = vpop.f32.mrb[0].mxu0
        %1944 = vmatprep.mubr.bf16.mxu0 0
        %1945 = vmatmul.mubr.bf16.gmra.mrb[0].mxu0 %v1812
        %v1946 = vpop.f32.mrb[0].mxu0
        %v1947 = vadd.f32 0.0, %v1946
        %v1948 = vpop.f32.mrb[0].mxu0
        %v1949 = vpop.f32.mrb[0].mxu0
        %v1950 = vadd.f32 0.0, %v1949
        %v1951 = vpop.f32.mrb[0].mxu0
        %1952 = vmatprep.mubr.bf16.mxu0 0
        %1953 = vmatmul.mubr.bf16.gmra.mrb[0].mxu0 %v1815
        %v1954 = vpop.f32.mrb[0].mxu0
        %v1955 = vadd.f32 0.0, %v1954
        %v1956 = vpop.f32.mrb[0].mxu0
        %v1957 = vpop.f32.mrb[0].mxu0
        %v1958 = vadd.f32 0.0, %v1957
        %v1959 = vpop.f32.mrb[0].mxu0
        %1960 = vmatprep.mubr.bf16.mxu0 0
        %1961 = vmatmul.mubr.bf16.gmra.mrb[0].mxu0 %v1818
        %v1962 = vpop.f32.mrb[0].mxu0
        %v1963 = vadd.f32 0.0, %v1962
        %v1964 = vpop.f32.mrb[0].mxu0
        %v1965 = vpop.f32.mrb[0].mxu0
        %v1966 = vadd.f32 0.0, %v1965
        %v1967 = vpop.f32.mrb[0].mxu0
        %1968 = vmatprep.mubr.bf16.mxu0 0
        %1969 = vmatmul.mubr.bf16.gmra.mrb[0].mxu0 %v1821
        %v1970 = vpop.f32.mrb[0].mxu0
        %v1971 = vadd.f32 0.0, %v1970
        %v1972 = vpop.f32.mrb[0].mxu0
        %v1973 = vpop.f32.mrb[0].mxu0
        %v1974 = vadd.f32 0.0, %v1973
        %v1975 = vpop.f32.mrb[0].mxu0
        %1976 = vmatprep.mubr.bf16.mxu0 0
        %1977 = vmatmul.mubr.bf16.gmra.mrb[0].mxu0 %v1824
        %v1978 = vpop.f32.mrb[0].mxu0
        %v1979 = vadd.f32 0.0, %v1978
        %v1980 = vpop.f32.mrb[0].mxu0
        %v1981 = vpop.f32.mrb[0].mxu0
        %v1982 = vadd.f32 0.0, %v1981
        %v1983 = vpop.f32.mrb[0].mxu0
        %1984 = vmatprep.mubr.bf16.mxu0 0
        %1985 = vmatmul.mubr.bf16.gmra.mrb[0].mxu0 %v1827
        %v1986 = vpop.f32.mrb[0].mxu0
        %v1987 = vadd.f32 0.0, %v1986
        %v1988 = vpop.f32.mrb[0].mxu0
        %v1989 = vpop.f32.mrb[0].mxu0
        %v1990 = vadd.f32 0.0, %v1989
        %v1991 = vpop.f32.mrb[0].mxu0
        %1992 = vdwg.mxu0
        %v1993 = vadd.f32 %v1634, %v1867
        %v1994 = vadd.f32 %v1635, %v1870
        %v1995 = vadd.f32 %v1636, %v1875
        %v1996 = vadd.f32 %v1637, %v1878
        %v1997 = vadd.f32 %v1638, %v1883
        %v1998 = vadd.f32 %v1639, %v1886
        %v1999 = vadd.f32 %v1640, %v1891
        %v2000 = vadd.f32 %v1641, %v1894
        %v2001 = vadd.f32 %v1642, %v1899
        %v2002 = vadd.f32 %v1643, %v1902
        %v2003 = vadd.f32 %v1644, %v1907
        %v2004 = vadd.f32 %v1645, %v1910
        %v2005 = vadd.f32 %v1646, %v1915
        %v2006 = vadd.f32 %v1647, %v1918
        %v2007 = vadd.f32 %v1648, %v1923
        %v2008 = vadd.f32 %v1649, %v1926
        %v2009 = vadd.f32 %v1650, %v1931
        %v2010 = vadd.f32 %v1651, %v1934
        %v2011 = vadd.f32 %v1652, %v1939
        %v2012 = vadd.f32 %v1653, %v1942
        %v2013 = vadd.f32 %v1654, %v1947
        %v2014 = vadd.f32 %v1655, %v1950
        %v2015 = vadd.f32 %v1656, %v1955
        %v2016 = vadd.f32 %v1657, %v1958
        %v2017 = vadd.f32 %v1658, %v1963
        %v2018 = vadd.f32 %v1659, %v1966
        %v2019 = vadd.f32 %v1660, %v1971
        %v2020 = vadd.f32 %v1661, %v1974
        %v2021 = vadd.f32 %v1662, %v1979
        %v2022 = vadd.f32 %v1663, %v1982
        %v2023 = vadd.f32 %v1664, %v1987
        %v2024 = vadd.f32 %v1665, %v1990
        %v2025 = vld [vmem:[%s1666] sm:$0xf]
        %v2026 = vld [vmem:[%s1666 + $0x4] sm:$0xf]
        %v2027 = vld [vmem:[%s1666 + $0x8] sm:$0x1]
        %v2028 = vld [vmem:[%s1666 + $0xc] sm:$0xf]
        %v2029 = vld [vmem:[%s1666 + $0x10] sm:$0xf]
        %v2030 = vld [vmem:[%s1666 + $0x14] sm:$0x1]
        %v2031 = vld [vmem:[%s1666 + $0x18] sm:$0xf]
        %v2032 = vld [vmem:[%s1666 + $0x1c] sm:$0xf]
        %v2033 = vld [vmem:[%s1666 + $0x20] sm:$0x1]
        %v2034 = vld [vmem:[%s1666 + $0x24] sm:$0xf]
        %v2035 = vld [vmem:[%s1666 + $0x28] sm:$0xf]
        %v2036 = vld [vmem:[%s1666 + $0x2c] sm:$0x1]
        %v2037 = vld [vmem:[%s1666 + $0x30] sm:$0xf]
        %v2038 = vld [vmem:[%s1666 + $0x34] sm:$0xf]
        %v2039 = vld [vmem:[%s1666 + $0x38] sm:$0x1]
        %v2040 = vld [vmem:[%s1666 + $0x3c] sm:$0xf]
        %v2041 = vld [vmem:[%s1666 + $0x40] sm:$0xf]
        %v2042 = vld [vmem:[%s1666 + $0x44] sm:$0x1]
        %v2043 = vld [vmem:[%s1666 + $0x48] sm:$0xf]
        %v2044 = vld [vmem:[%s1666 + $0x4c] sm:$0xf]
        %v2045 = vld [vmem:[%s1666 + $0x50] sm:$0x1]
        %v2046 = vld [vmem:[%s1666 + $0x54] sm:$0xf]
        %v2047 = vld [vmem:[%s1666 + $0x58] sm:$0xf]
        %v2048 = vld [vmem:[%s1666 + $0x5c] sm:$0x1]
        %v2049 = vld [vmem:[%s1666 + $0x60] sm:$0xf]
        %v2050 = vld [vmem:[%s1666 + $0x64] sm:$0xf]
        %v2051 = vld [vmem:[%s1666 + $0x68] sm:$0x1]
        %v2052 = vld [vmem:[%s1666 + $0x6c] sm:$0xf]
        %v2053 = vld [vmem:[%s1666 + $0x70] sm:$0xf]
        %v2054 = vld [vmem:[%s1666 + $0x74] sm:$0x1]
        %v2055 = vld [vmem:[%s1666 + $0x78] sm:$0xf]
        %v2056 = vld [vmem:[%s1666 + $0x7c] sm:$0xf]
        %v2057 = vld [vmem:[%s1666 + $0x80] sm:$0x1]
        %v2058 = vld [vmem:[%s1666 + $0x84] sm:$0xf]
        %v2059 = vld [vmem:[%s1666 + $0x88] sm:$0xf]
        %v2060 = vld [vmem:[%s1666 + $0x8c] sm:$0x1]
        %v2061 = vld [vmem:[%s1666 + $0x90] sm:$0xf]
        %v2062 = vld [vmem:[%s1666 + $0x94] sm:$0xf]
        %v2063 = vld [vmem:[%s1666 + $0x98] sm:$0x1]
        %v2064 = vld [vmem:[%s1666 + $0x9c] sm:$0xf]
        %v2065 = vld [vmem:[%s1666 + $0xa0] sm:$0xf]
        %v2066 = vld [vmem:[%s1666 + $0xa4] sm:$0x1]
        %v2067 = vld [vmem:[%s1666 + $0xa8] sm:$0xf]
        %v2068 = vld [vmem:[%s1666 + $0xac] sm:$0xf]
        %v2069 = vld [vmem:[%s1666 + $0xb0] sm:$0x1]
        %v2070 = vld [vmem:[%s1666 + $0xb4] sm:$0xf]
        %v2071 = vld [vmem:[%s1666 + $0xb8] sm:$0xf]
        %v2072 = vld [vmem:[%s1666 + $0xbc] sm:$0x1]
        %v2074 = vshrl.u32 %v2025, 16
        %v2076 = vrot.slane %v2074, 4
        %v2077 = vshll.u32 %v2025, 16
        %v2079 = vrot.slane %v2077, 5
        %v2080 = vor.u32 %v2076, %v2079
        %v2081 = vrot.slane %v2080, 4
        %v2083 = vshll.u32 %v2026, 16
        %v2085 = vrot.slane %v2083, 5
        %v2086 = vsel %vm268, %v2081, %v2085
        %v2087 = vshrl.u32 %v2026, 16
        %v2089 = vrot.slane %v2087, 4
        %v2090 = vor.u32 %v2089, %v2085
        %v2091 = vrot.slane %v2090, 4
        %v2093 = vshll.u32 %v2027, 16
        %v2095 = vrot.slane %v2093, 5
        %v2096 = vsel %vm268, %v2091, %v2095
        %v2098 = vshrl.u32 %v2028, 16
        %v2100 = vrot.slane %v2098, 4
        %v2101 = vshll.u32 %v2028, 16
        %v2103 = vrot.slane %v2101, 5
        %v2104 = vor.u32 %v2100, %v2103
        %v2105 = vrot.slane %v2104, 4
        %v2107 = vshll.u32 %v2029, 16
        %v2109 = vrot.slane %v2107, 5
        %v2110 = vsel %vm268, %v2105, %v2109
        %v2111 = vshrl.u32 %v2029, 16
        %v2113 = vrot.slane %v2111, 4
        %v2114 = vor.u32 %v2113, %v2109
        %v2115 = vrot.slane %v2114, 4
        %v2117 = vshll.u32 %v2030, 16
        %v2119 = vrot.slane %v2117, 5
        %v2120 = vsel %vm268, %v2115, %v2119
        %v2122 = vshrl.u32 %v2031, 16
        %v2124 = vrot.slane %v2122, 4
        %v2125 = vshll.u32 %v2031, 16
        %v2127 = vrot.slane %v2125, 5
        %v2128 = vor.u32 %v2124, %v2127
        %v2129 = vrot.slane %v2128, 4
        %v2131 = vshll.u32 %v2032, 16
        %v2133 = vrot.slane %v2131, 5
        %v2134 = vsel %vm268, %v2129, %v2133
        %v2135 = vshrl.u32 %v2032, 16
        %v2137 = vrot.slane %v2135, 4
        %v2138 = vor.u32 %v2137, %v2133
        %v2139 = vrot.slane %v2138, 4
        %v2141 = vshll.u32 %v2033, 16
        %v2143 = vrot.slane %v2141, 5
        %v2144 = vsel %vm268, %v2139, %v2143
        %v2146 = vshrl.u32 %v2034, 16
        %v2148 = vrot.slane %v2146, 4
        %v2149 = vshll.u32 %v2034, 16
        %v2151 = vrot.slane %v2149, 5
        %v2152 = vor.u32 %v2148, %v2151
        %v2153 = vrot.slane %v2152, 4
        %v2155 = vshll.u32 %v2035, 16
        %v2157 = vrot.slane %v2155, 5
        %v2158 = vsel %vm268, %v2153, %v2157
        %v2159 = vshrl.u32 %v2035, 16
        %v2161 = vrot.slane %v2159, 4
        %v2162 = vor.u32 %v2161, %v2157
        %v2163 = vrot.slane %v2162, 4
        %v2165 = vshll.u32 %v2036, 16
        %v2167 = vrot.slane %v2165, 5
        %v2168 = vsel %vm268, %v2163, %v2167
        %v2170 = vshrl.u32 %v2037, 16
        %v2172 = vrot.slane %v2170, 4
        %v2173 = vshll.u32 %v2037, 16
        %v2175 = vrot.slane %v2173, 5
        %v2176 = vor.u32 %v2172, %v2175
        %v2177 = vrot.slane %v2176, 4
        %v2179 = vshll.u32 %v2038, 16
        %v2181 = vrot.slane %v2179, 5
        %v2182 = vsel %vm268, %v2177, %v2181
        %v2183 = vshrl.u32 %v2038, 16
        %v2185 = vrot.slane %v2183, 4
        %v2186 = vor.u32 %v2185, %v2181
        %v2187 = vrot.slane %v2186, 4
        %v2189 = vshll.u32 %v2039, 16
        %v2191 = vrot.slane %v2189, 5
        %v2192 = vsel %vm268, %v2187, %v2191
        %v2194 = vshrl.u32 %v2040, 16
        %v2196 = vrot.slane %v2194, 4
        %v2197 = vshll.u32 %v2040, 16
        %v2199 = vrot.slane %v2197, 5
        %v2200 = vor.u32 %v2196, %v2199
        %v2201 = vrot.slane %v2200, 4
        %v2203 = vshll.u32 %v2041, 16
        %v2205 = vrot.slane %v2203, 5
        %v2206 = vsel %vm268, %v2201, %v2205
        %v2207 = vshrl.u32 %v2041, 16
        %v2209 = vrot.slane %v2207, 4
        %v2210 = vor.u32 %v2209, %v2205
        %v2211 = vrot.slane %v2210, 4
        %v2213 = vshll.u32 %v2042, 16
        %v2215 = vrot.slane %v2213, 5
        %v2216 = vsel %vm268, %v2211, %v2215
        %v2218 = vshrl.u32 %v2043, 16
        %v2220 = vrot.slane %v2218, 4
        %v2221 = vshll.u32 %v2043, 16
        %v2223 = vrot.slane %v2221, 5
        %v2224 = vor.u32 %v2220, %v2223
        %v2225 = vrot.slane %v2224, 4
        %v2227 = vshll.u32 %v2044, 16
        %v2229 = vrot.slane %v2227, 5
        %v2230 = vsel %vm268, %v2225, %v2229
        %v2231 = vshrl.u32 %v2044, 16
        %v2233 = vrot.slane %v2231, 4
        %v2234 = vor.u32 %v2233, %v2229
        %v2235 = vrot.slane %v2234, 4
        %v2237 = vshll.u32 %v2045, 16
        %v2239 = vrot.slane %v2237, 5
        %v2240 = vsel %vm268, %v2235, %v2239
        %v2242 = vshrl.u32 %v2046, 16
        %v2244 = vrot.slane %v2242, 4
        %v2245 = vshll.u32 %v2046, 16
        %v2247 = vrot.slane %v2245, 5
        %v2248 = vor.u32 %v2244, %v2247
        %v2249 = vrot.slane %v2248, 4
        %v2251 = vshll.u32 %v2047, 16
        %v2253 = vrot.slane %v2251, 5
        %v2254 = vsel %vm268, %v2249, %v2253
        %v2255 = vshrl.u32 %v2047, 16
        %v2257 = vrot.slane %v2255, 4
        %v2258 = vor.u32 %v2257, %v2253
        %v2259 = vrot.slane %v2258, 4
        %v2261 = vshll.u32 %v2048, 16
        %v2263 = vrot.slane %v2261, 5
        %v2264 = vsel %vm268, %v2259, %v2263
        %v2266 = vshrl.u32 %v2049, 16
        %v2268 = vrot.slane %v2266, 4
        %v2269 = vshll.u32 %v2049, 16
        %v2271 = vrot.slane %v2269, 5
        %v2272 = vor.u32 %v2268, %v2271
        %v2273 = vrot.slane %v2272, 4
        %v2275 = vshll.u32 %v2050, 16
        %v2277 = vrot.slane %v2275, 5
        %v2278 = vsel %vm268, %v2273, %v2277
        %v2279 = vshrl.u32 %v2050, 16
        %v2281 = vrot.slane %v2279, 4
        %v2282 = vor.u32 %v2281, %v2277
        %v2283 = vrot.slane %v2282, 4
        %v2285 = vshll.u32 %v2051, 16
        %v2287 = vrot.slane %v2285, 5
        %v2288 = vsel %vm268, %v2283, %v2287
        %v2290 = vshrl.u32 %v2052, 16
        %v2292 = vrot.slane %v2290, 4
        %v2293 = vshll.u32 %v2052, 16
        %v2295 = vrot.slane %v2293, 5
        %v2296 = vor.u32 %v2292, %v2295
        %v2297 = vrot.slane %v2296, 4
        %v2299 = vshll.u32 %v2053, 16
        %v2301 = vrot.slane %v2299, 5
        %v2302 = vsel %vm268, %v2297, %v2301
        %v2303 = vshrl.u32 %v2053, 16
        %v2305 = vrot.slane %v2303, 4
        %v2306 = vor.u32 %v2305, %v2301
        %v2307 = vrot.slane %v2306, 4
        %v2309 = vshll.u32 %v2054, 16
        %v2311 = vrot.slane %v2309, 5
        %v2312 = vsel %vm268, %v2307, %v2311
        %v2314 = vshrl.u32 %v2055, 16
        %v2316 = vrot.slane %v2314, 4
        %v2317 = vshll.u32 %v2055, 16
        %v2319 = vrot.slane %v2317, 5
        %v2320 = vor.u32 %v2316, %v2319
        %v2321 = vrot.slane %v2320, 4
        %v2323 = vshll.u32 %v2056, 16
        %v2325 = vrot.slane %v2323, 5
        %v2326 = vsel %vm268, %v2321, %v2325
        %v2327 = vshrl.u32 %v2056, 16
        %v2329 = vrot.slane %v2327, 4
        %v2330 = vor.u32 %v2329, %v2325
        %v2331 = vrot.slane %v2330, 4
        %v2333 = vshll.u32 %v2057, 16
        %v2335 = vrot.slane %v2333, 5
        %v2336 = vsel %vm268, %v2331, %v2335
        %v2338 = vshrl.u32 %v2058, 16
        %v2340 = vrot.slane %v2338, 4
        %v2341 = vshll.u32 %v2058, 16
        %v2343 = vrot.slane %v2341, 5
        %v2344 = vor.u32 %v2340, %v2343
        %v2345 = vrot.slane %v2344, 4
        %v2347 = vshll.u32 %v2059, 16
        %v2349 = vrot.slane %v2347, 5
        %v2350 = vsel %vm268, %v2345, %v2349
        %v2351 = vshrl.u32 %v2059, 16
        %v2353 = vrot.slane %v2351, 4
        %v2354 = vor.u32 %v2353, %v2349
        %v2355 = vrot.slane %v2354, 4
        %v2357 = vshll.u32 %v2060, 16
        %v2359 = vrot.slane %v2357, 5
        %v2360 = vsel %vm268, %v2355, %v2359
        %v2362 = vshrl.u32 %v2061, 16
        %v2364 = vrot.slane %v2362, 4
        %v2365 = vshll.u32 %v2061, 16
        %v2367 = vrot.slane %v2365, 5
        %v2368 = vor.u32 %v2364, %v2367
        %v2369 = vrot.slane %v2368, 4
        %v2371 = vshll.u32 %v2062, 16
        %v2373 = vrot.slane %v2371, 5
        %v2374 = vsel %vm268, %v2369, %v2373
        %v2375 = vshrl.u32 %v2062, 16
        %v2377 = vrot.slane %v2375, 4
        %v2378 = vor.u32 %v2377, %v2373
        %v2379 = vrot.slane %v2378, 4
        %v2381 = vshll.u32 %v2063, 16
        %v2383 = vrot.slane %v2381, 5
        %v2384 = vsel %vm268, %v2379, %v2383
        %v2386 = vshrl.u32 %v2064, 16
        %v2388 = vrot.slane %v2386, 4
        %v2389 = vshll.u32 %v2064, 16
        %v2391 = vrot.slane %v2389, 5
        %v2392 = vor.u32 %v2388, %v2391
        %v2393 = vrot.slane %v2392, 4
        %v2395 = vshll.u32 %v2065, 16
        %v2397 = vrot.slane %v2395, 5
        %v2398 = vsel %vm268, %v2393, %v2397
        %v2399 = vshrl.u32 %v2065, 16
        %v2401 = vrot.slane %v2399, 4
        %v2402 = vor.u32 %v2401, %v2397
        %v2403 = vrot.slane %v2402, 4
        %v2405 = vshll.u32 %v2066, 16
        %v2407 = vrot.slane %v2405, 5
        %v2408 = vsel %vm268, %v2403, %v2407
        %v2410 = vshrl.u32 %v2067, 16
        %v2412 = vrot.slane %v2410, 4
        %v2413 = vshll.u32 %v2067, 16
        %v2415 = vrot.slane %v2413, 5
        %v2416 = vor.u32 %v2412, %v2415
        %v2417 = vrot.slane %v2416, 4
        %v2419 = vshll.u32 %v2068, 16
        %v2421 = vrot.slane %v2419, 5
        %v2422 = vsel %vm268, %v2417, %v2421
        %v2423 = vshrl.u32 %v2068, 16
        %v2425 = vrot.slane %v2423, 4
        %v2426 = vor.u32 %v2425, %v2421
        %v2427 = vrot.slane %v2426, 4
        %v2429 = vshll.u32 %v2069, 16
        %v2431 = vrot.slane %v2429, 5
        %v2432 = vsel %vm268, %v2427, %v2431
        %v2434 = vshrl.u32 %v2070, 16
        %v2436 = vrot.slane %v2434, 4
        %v2437 = vshll.u32 %v2070, 16
        %v2439 = vrot.slane %v2437, 5
        %v2440 = vor.u32 %v2436, %v2439
        %v2441 = vrot.slane %v2440, 4
        %v2443 = vshll.u32 %v2071, 16
        %v2445 = vrot.slane %v2443, 5
        %v2446 = vsel %vm268, %v2441, %v2445
        %v2447 = vshrl.u32 %v2071, 16
        %v2449 = vrot.slane %v2447, 4
        %v2450 = vor.u32 %v2449, %v2445
        %v2451 = vrot.slane %v2450, 4
        %v2453 = vshll.u32 %v2072, 16
        %v2455 = vrot.slane %v2453, 5
        %v2456 = vsel %vm268, %v2451, %v2455
        %s2457 = scalar_lea.vmem [#allocation5], 8
        %v2458 = vld [vmem:[%s2457] sm:$0x3]
        %v2459 = vunpack.c.l.b16 %v2086
        %v2460 = vunpack.c.l.b16 %v2096
        %v2461 = vunpack.c.l.b16 %v2110
        %v2462 = vunpack.c.l.b16 %v2120
        %v2463 = vunpack.c.l.b16 %v2134
        %v2464 = vunpack.c.l.b16 %v2144
        %v2465 = vunpack.c.l.b16 %v2158
        %v2466 = vunpack.c.l.b16 %v2168
        %v2467 = vunpack.c.l.b16 %v2182
        %v2468 = vunpack.c.l.b16 %v2192
        %v2469 = vunpack.c.l.b16 %v2206
        %v2470 = vunpack.c.l.b16 %v2216
        %v2471 = vunpack.c.l.b16 %v2230
        %v2472 = vunpack.c.l.b16 %v2240
        %v2473 = vunpack.c.l.b16 %v2254
        %v2474 = vunpack.c.l.b16 %v2264
        %v2475 = vunpack.c.l.b16 %v2278
        %v2476 = vunpack.c.l.b16 %v2288
        %v2477 = vunpack.c.l.b16 %v2302
        %v2478 = vunpack.c.l.b16 %v2312
        %v2479 = vunpack.c.l.b16 %v2326
        %v2480 = vunpack.c.l.b16 %v2336
        %v2481 = vunpack.c.l.b16 %v2350
        %v2482 = vunpack.c.l.b16 %v2360
        %v2483 = vunpack.c.l.b16 %v2374
        %v2484 = vunpack.c.l.b16 %v2384
        %v2485 = vunpack.c.l.b16 %v2398
        %v2486 = vunpack.c.l.b16 %v2408
        %v2487 = vunpack.c.l.b16 %v2422
        %v2488 = vunpack.c.l.b16 %v2432
        %v2489 = vunpack.c.l.b16 %v2446
        %v2490 = vunpack.c.l.b16 %v2456
        %v2491 = vpack.c.b16 %v2460, %v2459
        %v2492 = vpack.c.b16 %v2462, %v2461
        %v2493 = vpack.c.b16 %v2464, %v2463
        %v2494 = vpack.c.b16 %v2466, %v2465
        %v2495 = vpack.c.b16 %v2468, %v2467
        %v2496 = vpack.c.b16 %v2470, %v2469
        %v2497 = vpack.c.b16 %v2472, %v2471
        %v2498 = vpack.c.b16 %v2474, %v2473
        %v2499 = vpack.c.b16 %v2476, %v2475
        %v2500 = vpack.c.b16 %v2478, %v2477
        %v2501 = vpack.c.b16 %v2480, %v2479
        %v2502 = vpack.c.b16 %v2482, %v2481
        %v2503 = vpack.c.b16 %v2484, %v2483
        %v2504 = vpack.c.b16 %v2486, %v2485
        %v2505 = vpack.c.b16 %v2488, %v2487
        %v2506 = vpack.c.b16 %v2490, %v2489
        %v2508 = vsel %vm703, %v2491, 0
        %v2511 = vsel %vm703, %v2492, 0
        %v2514 = vsel %vm703, %v2493, 0
        %v2517 = vsel %vm703, %v2494, 0
        %v2520 = vsel %vm703, %v2495, 0
        %v2523 = vsel %vm703, %v2496, 0
        %v2526 = vsel %vm703, %v2497, 0
        %v2529 = vsel %vm703, %v2498, 0
        %v2532 = vsel %vm703, %v2499, 0
        %v2535 = vsel %vm703, %v2500, 0
        %v2538 = vsel %vm703, %v2501, 0
        %v2541 = vsel %vm703, %v2502, 0
        %v2544 = vsel %vm703, %v2503, 0
        %v2547 = vsel %vm703, %v2504, 0
        %v2550 = vsel %vm703, %v2505, 0
        %v2553 = vsel %vm703, %v2506, 0
        %v2556 = vsel %vm752, %v2458, 0
        %2558 = vmatprep.subr.bf16.mxu0 0
        %2559 = vmatpush1.bf16.msra.mxu0 %v2556
        %2560 = vmatprep.subr.bf16.mxu0 0
        %2561 = vmatpush1.bf16.msra.mxu0 0
        %2562 = vmatprep.subr.bf16.mxu0 0
        %2563 = vmatpush1.bf16.msra.mxu0 0
        %2564 = vmatprep.subr.bf16.mxu0 0
        %2565 = vmatpush1.bf16.msra.mxu0 0
        %2566 = vmatprep.subr.bf16.mxu0 0
        %2567 = vmatpush1.bf16.msra.mxu0 0
        %2568 = vmatprep.subr.bf16.mxu0 0
        %2569 = vmatpush1.bf16.msra.mxu0 0
        %2570 = vmatprep.subr.bf16.mxu0 0
        %2571 = vmatpush1.bf16.msra.mxu0 0
        %2572 = vmatprep.subr.bf16.mxu0 0
        %2573 = vmatpush1.bf16.msra.mxu0 0
        %2574 = vmatprep.subr.bf16.mxu0 0
        %2575 = vmatpush1.bf16.msra.mxu0 0
        %2576 = vmatprep.subr.bf16.mxu0 0
        %2577 = vmatpush1.bf16.msra.mxu0 0
        %2578 = vmatprep.subr.bf16.mxu0 0
        %2579 = vmatpush1.bf16.msra.mxu0 0
        %2580 = vmatprep.subr.bf16.mxu0 0
        %2581 = vmatpush1.bf16.msra.mxu0 0
        %2582 = vmatprep.subr.bf16.mxu0 0
        %2583 = vmatpush1.bf16.msra.mxu0 0
        %2584 = vmatprep.subr.bf16.mxu0 0
        %2585 = vmatpush1.bf16.msra.mxu0 0
        %2586 = vmatprep.subr.bf16.mxu0 0
        %2587 = vmatpush1.bf16.msra.mxu0 0
        %2588 = vmatprep.subr.bf16.mxu0 0
        %2589 = vmatpush1.bf16.msra.mxu0 0
        %2590 = vmatprep.mubr.bf16.mxu0 0
        %2591 = vmatmul.mubr.bf16.gmra.mrb[0].mxu0 %v2508
        %v2592 = vpop.f32.mrb[0].mxu0
        %v2593 = vadd.f32 0.0, %v2592
        %v2594 = vpop.f32.mrb[0].mxu0
        %v2595 = vpop.f32.mrb[0].mxu0
        %v2596 = vadd.f32 0.0, %v2595
        %v2597 = vpop.f32.mrb[0].mxu0
        %2598 = vmatprep.mubr.bf16.mxu0 0
        %2599 = vmatmul.mubr.bf16.gmra.mrb[0].mxu0 %v2511
        %v2600 = vpop.f32.mrb[0].mxu0
        %v2601 = vadd.f32 0.0, %v2600
        %v2602 = vpop.f32.mrb[0].mxu0
        %v2603 = vpop.f32.mrb[0].mxu0
        %v2604 = vadd.f32 0.0, %v2603
        %v2605 = vpop.f32.mrb[0].mxu0
        %2606 = vmatprep.mubr.bf16.mxu0 0
        %2607 = vmatmul.mubr.bf16.gmra.mrb[0].mxu0 %v2514
        %v2608 = vpop.f32.mrb[0].mxu0
        %v2609 = vadd.f32 0.0, %v2608
        %v2610 = vpop.f32.mrb[0].mxu0
        %v2611 = vpop.f32.mrb[0].mxu0
        %v2612 = vadd.f32 0.0, %v2611
        %v2613 = vpop.f32.mrb[0].mxu0
        %2614 = vmatprep.mubr.bf16.mxu0 0
        %2615 = vmatmul.mubr.bf16.gmra.mrb[0].mxu0 %v2517
        %v2616 = vpop.f32.mrb[0].mxu0
        %v2617 = vadd.f32 0.0, %v2616
        %v2618 = vpop.f32.mrb[0].mxu0
        %v2619 = vpop.f32.mrb[0].mxu0
        %v2620 = vadd.f32 0.0, %v2619
        %v2621 = vpop.f32.mrb[0].mxu0
        %2622 = vmatprep.mubr.bf16.mxu0 0
        %2623 = vmatmul.mubr.bf16.gmra.mrb[0].mxu0 %v2520
        %v2624 = vpop.f32.mrb[0].mxu0
        %v2625 = vadd.f32 0.0, %v2624
        %v2626 = vpop.f32.mrb[0].mxu0
        %v2627 = vpop.f32.mrb[0].mxu0
        %v2628 = vadd.f32 0.0, %v2627
        %v2629 = vpop.f32.mrb[0].mxu0
        %2630 = vmatprep.mubr.bf16.mxu0 0
        %2631 = vmatmul.mubr.bf16.gmra.mrb[0].mxu0 %v2523
        %v2632 = vpop.f32.mrb[0].mxu0
        %v2633 = vadd.f32 0.0, %v2632
        %v2634 = vpop.f32.mrb[0].mxu0
        %v2635 = vpop.f32.mrb[0].mxu0
        %v2636 = vadd.f32 0.0, %v2635
        %v2637 = vpop.f32.mrb[0].mxu0
        %2638 = vmatprep.mubr.bf16.mxu0 0
        %2639 = vmatmul.mubr.bf16.gmra.mrb[0].mxu0 %v2526
        %v2640 = vpop.f32.mrb[0].mxu0
        %v2641 = vadd.f32 0.0, %v2640
        %v2642 = vpop.f32.mrb[0].mxu0
        %v2643 = vpop.f32.mrb[0].mxu0
        %v2644 = vadd.f32 0.0, %v2643
        %v2645 = vpop.f32.mrb[0].mxu0
        %2646 = vmatprep.mubr.bf16.mxu0 0
        %2647 = vmatmul.mubr.bf16.gmra.mrb[0].mxu0 %v2529
        %v2648 = vpop.f32.mrb[0].mxu0
        %v2649 = vadd.f32 0.0, %v2648
        %v2650 = vpop.f32.mrb[0].mxu0
        %v2651 = vpop.f32.mrb[0].mxu0
        %v2652 = vadd.f32 0.0, %v2651
        %v2653 = vpop.f32.mrb[0].mxu0
        %2654 = vmatprep.mubr.bf16.mxu0 0
        %2655 = vmatmul.mubr.bf16.gmra.mrb[0].mxu0 %v2532
        %v2656 = vpop.f32.mrb[0].mxu0
        %v2657 = vadd.f32 0.0, %v2656
        %v2658 = vpop.f32.mrb[0].mxu0
        %v2659 = vpop.f32.mrb[0].mxu0
        %v2660 = vadd.f32 0.0, %v2659
        %v2661 = vpop.f32.mrb[0].mxu0
        %2662 = vmatprep.mubr.bf16.mxu0 0
        %2663 = vmatmul.mubr.bf16.gmra.mrb[0].mxu0 %v2535
        %v2664 = vpop.f32.mrb[0].mxu0
        %v2665 = vadd.f32 0.0, %v2664
        %v2666 = vpop.f32.mrb[0].mxu0
        %v2667 = vpop.f32.mrb[0].mxu0
        %v2668 = vadd.f32 0.0, %v2667
        %v2669 = vpop.f32.mrb[0].mxu0
        %2670 = vmatprep.mubr.bf16.mxu0 0
        %2671 = vmatmul.mubr.bf16.gmra.mrb[0].mxu0 %v2538
        %v2672 = vpop.f32.mrb[0].mxu0
        %v2673 = vadd.f32 0.0, %v2672
        %v2674 = vpop.f32.mrb[0].mxu0
        %v2675 = vpop.f32.mrb[0].mxu0
        %v2676 = vadd.f32 0.0, %v2675
        %v2677 = vpop.f32.mrb[0].mxu0
        %2678 = vmatprep.mubr.bf16.mxu0 0
        %2679 = vmatmul.mubr.bf16.gmra.mrb[0].mxu0 %v2541
        %v2680 = vpop.f32.mrb[0].mxu0
        %v2681 = vadd.f32 0.0, %v2680
        %v2682 = vpop.f32.mrb[0].mxu0
        %v2683 = vpop.f32.mrb[0].mxu0
        %v2684 = vadd.f32 0.0, %v2683
        %v2685 = vpop.f32.mrb[0].mxu0
        %2686 = vmatprep.mubr.bf16.mxu0 0
        %2687 = vmatmul.mubr.bf16.gmra.mrb[0].mxu0 %v2544
        %v2688 = vpop.f32.mrb[0].mxu0
        %v2689 = vadd.f32 0.0, %v2688
        %v2690 = vpop.f32.mrb[0].mxu0
        %v2691 = vpop.f32.mrb[0].mxu0
        %v2692 = vadd.f32 0.0, %v2691
        %v2693 = vpop.f32.mrb[0].mxu0
        %2694 = vmatprep.mubr.bf16.mxu0 0
        %2695 = vmatmul.mubr.bf16.gmra.mrb[0].mxu0 %v2547
        %v2696 = vpop.f32.mrb[0].mxu0
        %v2697 = vadd.f32 0.0, %v2696
        %v2698 = vpop.f32.mrb[0].mxu0
        %v2699 = vpop.f32.mrb[0].mxu0
        %v2700 = vadd.f32 0.0, %v2699
        %v2701 = vpop.f32.mrb[0].mxu0
        %2702 = vmatprep.mubr.bf16.mxu0 0
        %2703 = vmatmul.mubr.bf16.gmra.mrb[0].mxu0 %v2550
        %v2704 = vpop.f32.mrb[0].mxu0
        %v2705 = vadd.f32 0.0, %v2704
        %v2706 = vpop.f32.mrb[0].mxu0
        %v2707 = vpop.f32.mrb[0].mxu0
        %v2708 = vadd.f32 0.0, %v2707
        %v2709 = vpop.f32.mrb[0].mxu0
        %2710 = vmatprep.mubr.bf16.mxu0 0
        %2711 = vmatmul.mubr.bf16.gmra.mrb[0].mxu0 %v2553
        %v2712 = vpop.f32.mrb[0].mxu0
        %v2713 = vadd.f32 0.0, %v2712
        %v2714 = vpop.f32.mrb[0].mxu0
        %v2715 = vpop.f32.mrb[0].mxu0
        %v2716 = vadd.f32 0.0, %v2715
        %v2717 = vpop.f32.mrb[0].mxu0
        %2718 = vdwg.mxu0
        %v2719 = vadd.f32 %v1993, %v2593
        %v2720 = vadd.f32 %v1994, %v2596
        %v2721 = vadd.f32 %v1995, %v2601
        %v2722 = vadd.f32 %v1996, %v2604
        %v2723 = vadd.f32 %v1997, %v2609
        %v2724 = vadd.f32 %v1998, %v2612
        %v2725 = vadd.f32 %v1999, %v2617
        %v2726 = vadd.f32 %v2000, %v2620
        %v2727 = vadd.f32 %v2001, %v2625
        %v2728 = vadd.f32 %v2002, %v2628
        %v2729 = vadd.f32 %v2003, %v2633
        %v2730 = vadd.f32 %v2004, %v2636
        %v2731 = vadd.f32 %v2005, %v2641
        %v2732 = vadd.f32 %v2006, %v2644
        %v2733 = vadd.f32 %v2007, %v2649
        %v2734 = vadd.f32 %v2008, %v2652
        %v2735 = vadd.f32 %v2009, %v2657
        %v2736 = vadd.f32 %v2010, %v2660
        %v2737 = vadd.f32 %v2011, %v2665
        %v2738 = vadd.f32 %v2012, %v2668
        %v2739 = vadd.f32 %v2013, %v2673
        %v2740 = vadd.f32 %v2014, %v2676
        %v2741 = vadd.f32 %v2015, %v2681
        %v2742 = vadd.f32 %v2016, %v2684
        %v2743 = vadd.f32 %v2017, %v2689
        %v2744 = vadd.f32 %v2018, %v2692
        %v2745 = vadd.f32 %v2019, %v2697
        %v2746 = vadd.f32 %v2020, %v2700
        %v2747 = vadd.f32 %v2021, %v2705
        %v2748 = vadd.f32 %v2022, %v2708
        %v2749 = vadd.f32 %v2023, %v2713
        %v2750 = vadd.f32 %v2024, %v2716
        %v2751 = vld [vmem:[%s1666] sm:$0xe]
        %v2752 = vld [vmem:[%s1666 + $0xc] sm:$0xe]
        %v2753 = vld [vmem:[%s1666 + $0x18] sm:$0xe]
        %v2754 = vld [vmem:[%s1666 + $0x24] sm:$0xe]
        %v2755 = vld [vmem:[%s1666 + $0x30] sm:$0xe]
        %v2756 = vld [vmem:[%s1666 + $0x3c] sm:$0xe]
        %v2757 = vld [vmem:[%s1666 + $0x48] sm:$0xe]
        %v2758 = vld [vmem:[%s1666 + $0x54] sm:$0xe]
        %v2759 = vld [vmem:[%s1666 + $0x60] sm:$0xe]
        %v2760 = vld [vmem:[%s1666 + $0x6c] sm:$0xe]
        %v2761 = vld [vmem:[%s1666 + $0x78] sm:$0xe]
        %v2762 = vld [vmem:[%s1666 + $0x84] sm:$0xe]
        %v2763 = vld [vmem:[%s1666 + $0x90] sm:$0xe]
        %v2764 = vld [vmem:[%s1666 + $0x9c] sm:$0xe]
        %v2765 = vld [vmem:[%s1666 + $0xa8] sm:$0xe]
        %v2766 = vld [vmem:[%s1666 + $0xb4] sm:$0xe]
        %v2815 = vrot.slane %v2751, 5
        %v2816 = vrot.slane %v2815, 4
        %v2817 = vrot.slane %v2026, 5
        %v2818 = vsel %vm1259, %v2816, %v2817
        %v2819 = vrot.slane %v2817, 4
        %v2820 = vrot.slane %v2027, 5
        %v2821 = vsel %vm1259, %v2819, %v2820
        %v2822 = vrot.slane %v2752, 5
        %v2823 = vrot.slane %v2822, 4
        %v2824 = vrot.slane %v2029, 5
        %v2825 = vsel %vm1259, %v2823, %v2824
        %v2826 = vrot.slane %v2824, 4
        %v2827 = vrot.slane %v2030, 5
        %v2828 = vsel %vm1259, %v2826, %v2827
        %v2829 = vrot.slane %v2753, 5
        %v2830 = vrot.slane %v2829, 4
        %v2831 = vrot.slane %v2032, 5
        %v2832 = vsel %vm1259, %v2830, %v2831
        %v2833 = vrot.slane %v2831, 4
        %v2834 = vrot.slane %v2033, 5
        %v2835 = vsel %vm1259, %v2833, %v2834
        %v2836 = vrot.slane %v2754, 5
        %v2837 = vrot.slane %v2836, 4
        %v2838 = vrot.slane %v2035, 5
        %v2839 = vsel %vm1259, %v2837, %v2838
        %v2840 = vrot.slane %v2838, 4
        %v2841 = vrot.slane %v2036, 5
        %v2842 = vsel %vm1259, %v2840, %v2841
        %v2843 = vrot.slane %v2755, 5
        %v2844 = vrot.slane %v2843, 4
        %v2845 = vrot.slane %v2038, 5
        %v2846 = vsel %vm1259, %v2844, %v2845
        %v2847 = vrot.slane %v2845, 4
        %v2848 = vrot.slane %v2039, 5
        %v2849 = vsel %vm1259, %v2847, %v2848
        %v2850 = vrot.slane %v2756, 5
        %v2851 = vrot.slane %v2850, 4
        %v2852 = vrot.slane %v2041, 5
        %v2853 = vsel %vm1259, %v2851, %v2852
        %v2854 = vrot.slane %v2852, 4
        %v2855 = vrot.slane %v2042, 5
        %v2856 = vsel %vm1259, %v2854, %v2855
        %v2857 = vrot.slane %v2757, 5
        %v2858 = vrot.slane %v2857, 4
        %v2859 = vrot.slane %v2044, 5
        %v2860 = vsel %vm1259, %v2858, %v2859
        %v2861 = vrot.slane %v2859, 4
        %v2862 = vrot.slane %v2045, 5
        %v2863 = vsel %vm1259, %v2861, %v2862
        %v2864 = vrot.slane %v2758, 5
        %v2865 = vrot.slane %v2864, 4
        %v2866 = vrot.slane %v2047, 5
        %v2867 = vsel %vm1259, %v2865, %v2866
        %v2868 = vrot.slane %v2866, 4
        %v2869 = vrot.slane %v2048, 5
        %v2870 = vsel %vm1259, %v2868, %v2869
        %v2871 = vrot.slane %v2759, 5
        %v2872 = vrot.slane %v2871, 4
        %v2873 = vrot.slane %v2050, 5
        %v2874 = vsel %vm1259, %v2872, %v2873
        %v2875 = vrot.slane %v2873, 4
        %v2876 = vrot.slane %v2051, 5
        %v2877 = vsel %vm1259, %v2875, %v2876
        %v2878 = vrot.slane %v2760, 5
        %v2879 = vrot.slane %v2878, 4
        %v2880 = vrot.slane %v2053, 5
        %v2881 = vsel %vm1259, %v2879, %v2880
        %v2882 = vrot.slane %v2880, 4
        %v2883 = vrot.slane %v2054, 5
        %v2884 = vsel %vm1259, %v2882, %v2883
        %v2885 = vrot.slane %v2761, 5
        %v2886 = vrot.slane %v2885, 4
        %v2887 = vrot.slane %v2056, 5
        %v2888 = vsel %vm1259, %v2886, %v2887
        %v2889 = vrot.slane %v2887, 4
        %v2890 = vrot.slane %v2057, 5
        %v2891 = vsel %vm1259, %v2889, %v2890
        %v2892 = vrot.slane %v2762, 5
        %v2893 = vrot.slane %v2892, 4
        %v2894 = vrot.slane %v2059, 5
        %v2895 = vsel %vm1259, %v2893, %v2894
        %v2896 = vrot.slane %v2894, 4
        %v2897 = vrot.slane %v2060, 5
        %v2898 = vsel %vm1259, %v2896, %v2897
        %v2899 = vrot.slane %v2763, 5
        %v2900 = vrot.slane %v2899, 4
        %v2901 = vrot.slane %v2062, 5
        %v2902 = vsel %vm1259, %v2900, %v2901
        %v2903 = vrot.slane %v2901, 4
        %v2904 = vrot.slane %v2063, 5
        %v2905 = vsel %vm1259, %v2903, %v2904
        %v2906 = vrot.slane %v2764, 5
        %v2907 = vrot.slane %v2906, 4
        %v2908 = vrot.slane %v2065, 5
        %v2909 = vsel %vm1259, %v2907, %v2908
        %v2910 = vrot.slane %v2908, 4
        %v2911 = vrot.slane %v2066, 5
        %v2912 = vsel %vm1259, %v2910, %v2911
        %v2913 = vrot.slane %v2765, 5
        %v2914 = vrot.slane %v2913, 4
        %v2915 = vrot.slane %v2068, 5
        %v2916 = vsel %vm1259, %v2914, %v2915
        %v2917 = vrot.slane %v2915, 4
        %v2918 = vrot.slane %v2069, 5
        %v2919 = vsel %vm1259, %v2917, %v2918
        %v2920 = vrot.slane %v2766, 5
        %v2921 = vrot.slane %v2920, 4
        %v2922 = vrot.slane %v2071, 5
        %v2923 = vsel %vm1259, %v2921, %v2922
        %v2924 = vrot.slane %v2922, 4
        %v2925 = vrot.slane %v2072, 5
        %v2926 = vsel %vm1259, %v2924, %v2925
        %s2927 = scalar_lea.vmem [#allocation5], 10
        %v2928 = vld [vmem:[%s2927] sm:$0x3]
        %v2929 = vunpack.c.l.b16 %v2818
        %v2930 = vunpack.c.l.b16 %v2821
        %v2931 = vunpack.c.l.b16 %v2825
        %v2932 = vunpack.c.l.b16 %v2828
        %v2933 = vunpack.c.l.b16 %v2832
        %v2934 = vunpack.c.l.b16 %v2835
        %v2935 = vunpack.c.l.b16 %v2839
        %v2936 = vunpack.c.l.b16 %v2842
        %v2937 = vunpack.c.l.b16 %v2846
        %v2938 = vunpack.c.l.b16 %v2849
        %v2939 = vunpack.c.l.b16 %v2853
        %v2940 = vunpack.c.l.b16 %v2856
        %v2941 = vunpack.c.l.b16 %v2860
        %v2942 = vunpack.c.l.b16 %v2863
        %v2943 = vunpack.c.l.b16 %v2867
        %v2944 = vunpack.c.l.b16 %v2870
        %v2945 = vunpack.c.l.b16 %v2874
        %v2946 = vunpack.c.l.b16 %v2877
        %v2947 = vunpack.c.l.b16 %v2881
        %v2948 = vunpack.c.l.b16 %v2884
        %v2949 = vunpack.c.l.b16 %v2888
        %v2950 = vunpack.c.l.b16 %v2891
        %v2951 = vunpack.c.l.b16 %v2895
        %v2952 = vunpack.c.l.b16 %v2898
        %v2953 = vunpack.c.l.b16 %v2902
        %v2954 = vunpack.c.l.b16 %v2905
        %v2955 = vunpack.c.l.b16 %v2909
        %v2956 = vunpack.c.l.b16 %v2912
        %v2957 = vunpack.c.l.b16 %v2916
        %v2958 = vunpack.c.l.b16 %v2919
        %v2959 = vunpack.c.l.b16 %v2923
        %v2960 = vunpack.c.l.b16 %v2926
        %v2961 = vpack.c.b16 %v2930, %v2929
        %v2962 = vpack.c.b16 %v2932, %v2931
        %v2963 = vpack.c.b16 %v2934, %v2933
        %v2964 = vpack.c.b16 %v2936, %v2935
        %v2965 = vpack.c.b16 %v2938, %v2937
        %v2966 = vpack.c.b16 %v2940, %v2939
        %v2967 = vpack.c.b16 %v2942, %v2941
        %v2968 = vpack.c.b16 %v2944, %v2943
        %v2969 = vpack.c.b16 %v2946, %v2945
        %v2970 = vpack.c.b16 %v2948, %v2947
        %v2971 = vpack.c.b16 %v2950, %v2949
        %v2972 = vpack.c.b16 %v2952, %v2951
        %v2973 = vpack.c.b16 %v2954, %v2953
        %v2974 = vpack.c.b16 %v2956, %v2955
        %v2975 = vpack.c.b16 %v2958, %v2957
        %v2976 = vpack.c.b16 %v2960, %v2959
        %v2978 = vsel %vm703, %v2961, 0
        %v2981 = vsel %vm703, %v2962, 0
        %v2984 = vsel %vm703, %v2963, 0
        %v2987 = vsel %vm703, %v2964, 0
        %v2990 = vsel %vm703, %v2965, 0
        %v2993 = vsel %vm703, %v2966, 0
        %v2996 = vsel %vm703, %v2967, 0
        %v2999 = vsel %vm703, %v2968, 0
        %v3002 = vsel %vm703, %v2969, 0
        %v3005 = vsel %vm703, %v2970, 0
        %v3008 = vsel %vm703, %v2971, 0
        %v3011 = vsel %vm703, %v2972, 0
        %v3014 = vsel %vm703, %v2973, 0
        %v3017 = vsel %vm703, %v2974, 0
        %v3020 = vsel %vm703, %v2975, 0
        %v3023 = vsel %vm703, %v2976, 0
        %v3026 = vsel %vm752, %v2928, 0
        %3028 = vmatprep.subr.bf16.mxu0 0
        %3029 = vmatpush1.bf16.msra.mxu0 %v3026
        %3030 = vmatprep.subr.bf16.mxu0 0
        %3031 = vmatpush1.bf16.msra.mxu0 0
        %3032 = vmatprep.subr.bf16.mxu0 0
        %3033 = vmatpush1.bf16.msra.mxu0 0
        %3034 = vmatprep.subr.bf16.mxu0 0
        %3035 = vmatpush1.bf16.msra.mxu0 0
        %3036 = vmatprep.subr.bf16.mxu0 0
        %3037 = vmatpush1.bf16.msra.mxu0 0
        %3038 = vmatprep.subr.bf16.mxu0 0
        %3039 = vmatpush1.bf16.msra.mxu0 0
        %3040 = vmatprep.subr.bf16.mxu0 0
        %3041 = vmatpush1.bf16.msra.mxu0 0
        %3042 = vmatprep.subr.bf16.mxu0 0
        %3043 = vmatpush1.bf16.msra.mxu0 0
        %3044 = vmatprep.subr.bf16.mxu0 0
        %3045 = vmatpush1.bf16.msra.mxu0 0
        %3046 = vmatprep.subr.bf16.mxu0 0
        %3047 = vmatpush1.bf16.msra.mxu0 0
        %3048 = vmatprep.subr.bf16.mxu0 0
        %3049 = vmatpush1.bf16.msra.mxu0 0
        %3050 = vmatprep.subr.bf16.mxu0 0
        %3051 = vmatpush1.bf16.msra.mxu0 0
        %3052 = vmatprep.subr.bf16.mxu0 0
        %3053 = vmatpush1.bf16.msra.mxu0 0
        %3054 = vmatprep.subr.bf16.mxu0 0
        %3055 = vmatpush1.bf16.msra.mxu0 0
        %3056 = vmatprep.subr.bf16.mxu0 0
        %3057 = vmatpush1.bf16.msra.mxu0 0
        %3058 = vmatprep.subr.bf16.mxu0 0
        %3059 = vmatpush1.bf16.msra.mxu0 0
        %3060 = vmatprep.mubr.bf16.mxu0 0
        %3061 = vmatmul.mubr.bf16.gmra.mrb[0].mxu0 %v2978
        %v3062 = vpop.f32.mrb[0].mxu0
        %v3063 = vadd.f32 0.0, %v3062
        %v3064 = vpop.f32.mrb[0].mxu0
        %v3065 = vpop.f32.mrb[0].mxu0
        %v3066 = vadd.f32 0.0, %v3065
        %v3067 = vpop.f32.mrb[0].mxu0
        %3068 = vmatprep.mubr.bf16.mxu0 0
        %3069 = vmatmul.mubr.bf16.gmra.mrb[0].mxu0 %v2981
        %v3070 = vpop.f32.mrb[0].mxu0
        %v3071 = vadd.f32 0.0, %v3070
        %v3072 = vpop.f32.mrb[0].mxu0
        %v3073 = vpop.f32.mrb[0].mxu0
        %v3074 = vadd.f32 0.0, %v3073
        %v3075 = vpop.f32.mrb[0].mxu0
        %3076 = vmatprep.mubr.bf16.mxu0 0
        %3077 = vmatmul.mubr.bf16.gmra.mrb[0].mxu0 %v2984
        %v3078 = vpop.f32.mrb[0].mxu0
        %v3079 = vadd.f32 0.0, %v3078
        %v3080 = vpop.f32.mrb[0].mxu0
        %v3081 = vpop.f32.mrb[0].mxu0
        %v3082 = vadd.f32 0.0, %v3081
        %v3083 = vpop.f32.mrb[0].mxu0
        %3084 = vmatprep.mubr.bf16.mxu0 0
        %3085 = vmatmul.mubr.bf16.gmra.mrb[0].mxu0 %v2987
        %v3086 = vpop.f32.mrb[0].mxu0
        %v3087 = vadd.f32 0.0, %v3086
        %v3088 = vpop.f32.mrb[0].mxu0
        %v3089 = vpop.f32.mrb[0].mxu0
        %v3090 = vadd.f32 0.0, %v3089
        %v3091 = vpop.f32.mrb[0].mxu0
        %3092 = vmatprep.mubr.bf16.mxu0 0
        %3093 = vmatmul.mubr.bf16.gmra.mrb[0].mxu0 %v2990
        %v3094 = vpop.f32.mrb[0].mxu0
        %v3095 = vadd.f32 0.0, %v3094
        %v3096 = vpop.f32.mrb[0].mxu0
        %v3097 = vpop.f32.mrb[0].mxu0
        %v3098 = vadd.f32 0.0, %v3097
        %v3099 = vpop.f32.mrb[0].mxu0
        %3100 = vmatprep.mubr.bf16.mxu0 0
        %3101 = vmatmul.mubr.bf16.gmra.mrb[0].mxu0 %v2993
        %v3102 = vpop.f32.mrb[0].mxu0
        %v3103 = vadd.f32 0.0, %v3102
        %v3104 = vpop.f32.mrb[0].mxu0
        %v3105 = vpop.f32.mrb[0].mxu0
        %v3106 = vadd.f32 0.0, %v3105
        %v3107 = vpop.f32.mrb[0].mxu0
        %3108 = vmatprep.mubr.bf16.mxu0 0
        %3109 = vmatmul.mubr.bf16.gmra.mrb[0].mxu0 %v2996
        %v3110 = vpop.f32.mrb[0].mxu0
        %v3111 = vadd.f32 0.0, %v3110
        %v3112 = vpop.f32.mrb[0].mxu0
        %v3113 = vpop.f32.mrb[0].mxu0
        %v3114 = vadd.f32 0.0, %v3113
        %v3115 = vpop.f32.mrb[0].mxu0
        %3116 = vmatprep.mubr.bf16.mxu0 0
        %3117 = vmatmul.mubr.bf16.gmra.mrb[0].mxu0 %v2999
        %v3118 = vpop.f32.mrb[0].mxu0
        %v3119 = vadd.f32 0.0, %v3118
        %v3120 = vpop.f32.mrb[0].mxu0
        %v3121 = vpop.f32.mrb[0].mxu0
        %v3122 = vadd.f32 0.0, %v3121
        %v3123 = vpop.f32.mrb[0].mxu0
        %3124 = vmatprep.mubr.bf16.mxu0 0
        %3125 = vmatmul.mubr.bf16.gmra.mrb[0].mxu0 %v3002
        %v3126 = vpop.f32.mrb[0].mxu0
        %v3127 = vadd.f32 0.0, %v3126
        %v3128 = vpop.f32.mrb[0].mxu0
        %v3129 = vpop.f32.mrb[0].mxu0
        %v3130 = vadd.f32 0.0, %v3129
        %v3131 = vpop.f32.mrb[0].mxu0
        %3132 = vmatprep.mubr.bf16.mxu0 0
        %3133 = vmatmul.mubr.bf16.gmra.mrb[0].mxu0 %v3005
        %v3134 = vpop.f32.mrb[0].mxu0
        %v3135 = vadd.f32 0.0, %v3134
        %v3136 = vpop.f32.mrb[0].mxu0
        %v3137 = vpop.f32.mrb[0].mxu0
        %v3138 = vadd.f32 0.0, %v3137
        %v3139 = vpop.f32.mrb[0].mxu0
        %3140 = vmatprep.mubr.bf16.mxu0 0
        %3141 = vmatmul.mubr.bf16.gmra.mrb[0].mxu0 %v3008
        %v3142 = vpop.f32.mrb[0].mxu0
        %v3143 = vadd.f32 0.0, %v3142
        %v3144 = vpop.f32.mrb[0].mxu0
        %v3145 = vpop.f32.mrb[0].mxu0
        %v3146 = vadd.f32 0.0, %v3145
        %v3147 = vpop.f32.mrb[0].mxu0
        %3148 = vmatprep.mubr.bf16.mxu0 0
        %3149 = vmatmul.mubr.bf16.gmra.mrb[0].mxu0 %v3011
        %v3150 = vpop.f32.mrb[0].mxu0
        %v3151 = vadd.f32 0.0, %v3150
        %v3152 = vpop.f32.mrb[0].mxu0
        %v3153 = vpop.f32.mrb[0].mxu0
        %v3154 = vadd.f32 0.0, %v3153
        %v3155 = vpop.f32.mrb[0].mxu0
        %3156 = vmatprep.mubr.bf16.mxu0 0
        %3157 = vmatmul.mubr.bf16.gmra.mrb[0].mxu0 %v3014
        %v3158 = vpop.f32.mrb[0].mxu0
        %v3159 = vadd.f32 0.0, %v3158
        %v3160 = vpop.f32.mrb[0].mxu0
        %v3161 = vpop.f32.mrb[0].mxu0
        %v3162 = vadd.f32 0.0, %v3161
        %v3163 = vpop.f32.mrb[0].mxu0
        %3164 = vmatprep.mubr.bf16.mxu0 0
        %3165 = vmatmul.mubr.bf16.gmra.mrb[0].mxu0 %v3017
        %v3166 = vpop.f32.mrb[0].mxu0
        %v3167 = vadd.f32 0.0, %v3166
        %v3168 = vpop.f32.mrb[0].mxu0
        %v3169 = vpop.f32.mrb[0].mxu0
        %v3170 = vadd.f32 0.0, %v3169
        %v3171 = vpop.f32.mrb[0].mxu0
        %3172 = vmatprep.mubr.bf16.mxu0 0
        %3173 = vmatmul.mubr.bf16.gmra.mrb[0].mxu0 %v3020
        %v3174 = vpop.f32.mrb[0].mxu0
        %v3175 = vadd.f32 0.0, %v3174
        %v3176 = vpop.f32.mrb[0].mxu0
        %v3177 = vpop.f32.mrb[0].mxu0
        %v3178 = vadd.f32 0.0, %v3177
        %v3179 = vpop.f32.mrb[0].mxu0
        %3180 = vmatprep.mubr.bf16.mxu0 0
        %3181 = vmatmul.mubr.bf16.gmra.mrb[0].mxu0 %v3023
        %v3182 = vpop.f32.mrb[0].mxu0
        %v3183 = vadd.f32 0.0, %v3182
        %v3184 = vpop.f32.mrb[0].mxu0
        %v3185 = vpop.f32.mrb[0].mxu0
        %v3186 = vadd.f32 0.0, %v3185
        %v3187 = vpop.f32.mrb[0].mxu0
        %3188 = vdwg.mxu0
        %v3189 = vadd.f32 %v2719, %v3063
        %v3190 = vadd.f32 %v2720, %v3066
        %v3191 = vadd.f32 %v2721, %v3071
        %v3192 = vadd.f32 %v2722, %v3074
        %v3193 = vadd.f32 %v2723, %v3079
        %v3194 = vadd.f32 %v2724, %v3082
        %v3195 = vadd.f32 %v2725, %v3087
        %v3196 = vadd.f32 %v2726, %v3090
        %v3197 = vadd.f32 %v2727, %v3095
        %v3198 = vadd.f32 %v2728, %v3098
        %v3199 = vadd.f32 %v2729, %v3103
        %v3200 = vadd.f32 %v2730, %v3106
        %v3201 = vadd.f32 %v2731, %v3111
        %v3202 = vadd.f32 %v2732, %v3114
        %v3203 = vadd.f32 %v2733, %v3119
        %v3204 = vadd.f32 %v2734, %v3122
        %v3205 = vadd.f32 %v2735, %v3127
        %v3206 = vadd.f32 %v2736, %v3130
        %v3207 = vadd.f32 %v2737, %v3135
        %v3208 = vadd.f32 %v2738, %v3138
        %v3209 = vadd.f32 %v2739, %v3143
        %v3210 = vadd.f32 %v2740, %v3146
        %v3211 = vadd.f32 %v2741, %v3151
        %v3212 = vadd.f32 %v2742, %v3154
        %v3213 = vadd.f32 %v2743, %v3159
        %v3214 = vadd.f32 %v2744, %v3162
        %v3215 = vadd.f32 %v2745, %v3167
        %v3216 = vadd.f32 %v2746, %v3170
        %v3217 = vadd.f32 %v2747, %v3175
        %v3218 = vadd.f32 %v2748, %v3178
        %v3219 = vadd.f32 %v2749, %v3183
        %v3220 = vadd.f32 %v2750, %v3186
        %s3221 = scalar_lea.vmem %s185, 24 [#allocation2]
        %v3222 = vld [vmem:[%s3221] sm:$0xf]
        %v3223 = vld [vmem:[%s3221 + $0x4] sm:$0xf]
        %v3224 = vld [vmem:[%s3221 + $0xc] sm:$0xf]
        %v3225 = vld [vmem:[%s3221 + $0x10] sm:$0xf]
        %v3226 = vld [vmem:[%s3221 + $0x18] sm:$0xf]
        %v3227 = vld [vmem:[%s3221 + $0x1c] sm:$0xf]
        %v3228 = vld [vmem:[%s3221 + $0x24] sm:$0xf]
        %v3229 = vld [vmem:[%s3221 + $0x28] sm:$0xf]
        %v3230 = vld [vmem:[%s3221 + $0x30] sm:$0xf]
        %v3231 = vld [vmem:[%s3221 + $0x34] sm:$0xf]
        %v3232 = vld [vmem:[%s3221 + $0x3c] sm:$0xf]
        %v3233 = vld [vmem:[%s3221 + $0x40] sm:$0xf]
        %v3234 = vld [vmem:[%s3221 + $0x48] sm:$0xf]
        %v3235 = vld [vmem:[%s3221 + $0x4c] sm:$0xf]
        %v3236 = vld [vmem:[%s3221 + $0x54] sm:$0xf]
        %v3237 = vld [vmem:[%s3221 + $0x58] sm:$0xf]
        %v3238 = vld [vmem:[%s3221 + $0x60] sm:$0xf]
        %v3239 = vld [vmem:[%s3221 + $0x64] sm:$0xf]
        %v3240 = vld [vmem:[%s3221 + $0x6c] sm:$0xf]
        %v3241 = vld [vmem:[%s3221 + $0x70] sm:$0xf]
        %v3242 = vld [vmem:[%s3221 + $0x78] sm:$0xf]
        %v3243 = vld [vmem:[%s3221 + $0x7c] sm:$0xf]
        %v3244 = vld [vmem:[%s3221 + $0x84] sm:$0xf]
        %v3245 = vld [vmem:[%s3221 + $0x88] sm:$0xf]
        %v3246 = vld [vmem:[%s3221 + $0x90] sm:$0xf]
        %v3247 = vld [vmem:[%s3221 + $0x94] sm:$0xf]
        %v3248 = vld [vmem:[%s3221 + $0x9c] sm:$0xf]
        %v3249 = vld [vmem:[%s3221 + $0xa0] sm:$0xf]
        %v3250 = vld [vmem:[%s3221 + $0xa8] sm:$0xf]
        %v3251 = vld [vmem:[%s3221 + $0xac] sm:$0xf]
        %v3252 = vld [vmem:[%s3221 + $0xb4] sm:$0xf]
        %v3253 = vld [vmem:[%s3221 + $0xb8] sm:$0xf]
        %s3254 = scalar_lea.vmem [#allocation5], 12
        %v3255 = vld [vmem:[%s3254] sm:$0x3]
        %v3288 = vunpack.c.l.b16 %v3222
        %v3289 = vunpack.c.l.b16 %v3223
        %v3290 = vunpack.c.l.b16 %v3224
        %v3291 = vunpack.c.l.b16 %v3225
        %v3292 = vunpack.c.l.b16 %v3226
        %v3293 = vunpack.c.l.b16 %v3227
        %v3294 = vunpack.c.l.b16 %v3228
        %v3295 = vunpack.c.l.b16 %v3229
        %v3296 = vunpack.c.l.b16 %v3230
        %v3297 = vunpack.c.l.b16 %v3231
        %v3298 = vunpack.c.l.b16 %v3232
        %v3299 = vunpack.c.l.b16 %v3233
        %v3300 = vunpack.c.l.b16 %v3234
        %v3301 = vunpack.c.l.b16 %v3235
        %v3302 = vunpack.c.l.b16 %v3236
        %v3303 = vunpack.c.l.b16 %v3237
        %v3304 = vunpack.c.l.b16 %v3238
        %v3305 = vunpack.c.l.b16 %v3239
        %v3306 = vunpack.c.l.b16 %v3240
        %v3307 = vunpack.c.l.b16 %v3241
        %v3308 = vunpack.c.l.b16 %v3242
        %v3309 = vunpack.c.l.b16 %v3243
        %v3310 = vunpack.c.l.b16 %v3244
        %v3311 = vunpack.c.l.b16 %v3245
        %v3312 = vunpack.c.l.b16 %v3246
        %v3313 = vunpack.c.l.b16 %v3247
        %v3314 = vunpack.c.l.b16 %v3248
        %v3315 = vunpack.c.l.b16 %v3249
        %v3316 = vunpack.c.l.b16 %v3250
        %v3317 = vunpack.c.l.b16 %v3251
        %v3318 = vunpack.c.l.b16 %v3252
        %v3319 = vunpack.c.l.b16 %v3253
        %v3320 = vpack.c.b16 %v3289, %v3288
        %v3321 = vpack.c.b16 %v3291, %v3290
        %v3322 = vpack.c.b16 %v3293, %v3292
        %v3323 = vpack.c.b16 %v3295, %v3294
        %v3324 = vpack.c.b16 %v3297, %v3296
        %v3325 = vpack.c.b16 %v3299, %v3298
        %v3326 = vpack.c.b16 %v3301, %v3300
        %v3327 = vpack.c.b16 %v3303, %v3302
        %v3328 = vpack.c.b16 %v3305, %v3304
        %v3329 = vpack.c.b16 %v3307, %v3306
        %v3330 = vpack.c.b16 %v3309, %v3308
        %v3331 = vpack.c.b16 %v3311, %v3310
        %v3332 = vpack.c.b16 %v3313, %v3312
        %v3333 = vpack.c.b16 %v3315, %v3314
        %v3334 = vpack.c.b16 %v3317, %v3316
        %v3335 = vpack.c.b16 %v3319, %v3318
        %v3337 = vsel %vm703, %v3320, 0
        %v3340 = vsel %vm703, %v3321, 0
        %v3343 = vsel %vm703, %v3322, 0
        %v3346 = vsel %vm703, %v3323, 0
        %v3349 = vsel %vm703, %v3324, 0
        %v3352 = vsel %vm703, %v3325, 0
        %v3355 = vsel %vm703, %v3326, 0
        %v3358 = vsel %vm703, %v3327, 0
        %v3361 = vsel %vm703, %v3328, 0
        %v3364 = vsel %vm703, %v3329, 0
        %v3367 = vsel %vm703, %v3330, 0
        %v3370 = vsel %vm703, %v3331, 0
        %v3373 = vsel %vm703, %v3332, 0
        %v3376 = vsel %vm703, %v3333, 0
        %v3379 = vsel %vm703, %v3334, 0
        %v3382 = vsel %vm703, %v3335, 0
        %v3385 = vsel %vm752, %v3255, 0
        %3387 = vmatprep.subr.bf16.mxu0 0
        %3388 = vmatpush1.bf16.msra.mxu0 %v3385
        %3389 = vmatprep.subr.bf16.mxu0 0
        %3390 = vmatpush1.bf16.msra.mxu0 0
        %3391 = vmatprep.subr.bf16.mxu0 0
        %3392 = vmatpush1.bf16.msra.mxu0 0
        %3393 = vmatprep.subr.bf16.mxu0 0
        %3394 = vmatpush1.bf16.msra.mxu0 0
        %3395 = vmatprep.subr.bf16.mxu0 0
        %3396 = vmatpush1.bf16.msra.mxu0 0
        %3397 = vmatprep.subr.bf16.mxu0 0
        %3398 = vmatpush1.bf16.msra.mxu0 0
        %3399 = vmatprep.subr.bf16.mxu0 0
        %3400 = vmatpush1.bf16.msra.mxu0 0
        %3401 = vmatprep.subr.bf16.mxu0 0
        %3402 = vmatpush1.bf16.msra.mxu0 0
        %3403 = vmatprep.subr.bf16.mxu0 0
        %3404 = vmatpush1.bf16.msra.mxu0 0
        %3405 = vmatprep.subr.bf16.mxu0 0
        %3406 = vmatpush1.bf16.msra.mxu0 0
        %3407 = vmatprep.subr.bf16.mxu0 0
        %3408 = vmatpush1.bf16.msra.mxu0 0
        %3409 = vmatprep.subr.bf16.mxu0 0
        %3410 = vmatpush1.bf16.msra.mxu0 0
        %3411 = vmatprep.subr.bf16.mxu0 0
        %3412 = vmatpush1.bf16.msra.mxu0 0
        %3413 = vmatprep.subr.bf16.mxu0 0
        %3414 = vmatpush1.bf16.msra.mxu0 0
        %3415 = vmatprep.subr.bf16.mxu0 0
        %3416 = vmatpush1.bf16.msra.mxu0 0
        %3417 = vmatprep.subr.bf16.mxu0 0
        %3418 = vmatpush1.bf16.msra.mxu0 0
        %3419 = vmatprep.mubr.bf16.mxu0 0
        %3420 = vmatmul.mubr.bf16.gmra.mrb[0].mxu0 %v3337
        %v3421 = vpop.f32.mrb[0].mxu0
        %v3422 = vadd.f32 0.0, %v3421
        %v3423 = vpop.f32.mrb[0].mxu0
        %v3424 = vpop.f32.mrb[0].mxu0
        %v3425 = vadd.f32 0.0, %v3424
        %v3426 = vpop.f32.mrb[0].mxu0
        %3427 = vmatprep.mubr.bf16.mxu0 0
        %3428 = vmatmul.mubr.bf16.gmra.mrb[0].mxu0 %v3340
        %v3429 = vpop.f32.mrb[0].mxu0
        %v3430 = vadd.f32 0.0, %v3429
        %v3431 = vpop.f32.mrb[0].mxu0
        %v3432 = vpop.f32.mrb[0].mxu0
        %v3433 = vadd.f32 0.0, %v3432
        %v3434 = vpop.f32.mrb[0].mxu0
        %3435 = vmatprep.mubr.bf16.mxu0 0
        %3436 = vmatmul.mubr.bf16.gmra.mrb[0].mxu0 %v3343
        %v3437 = vpop.f32.mrb[0].mxu0
        %v3438 = vadd.f32 0.0, %v3437
        %v3439 = vpop.f32.mrb[0].mxu0
        %v3440 = vpop.f32.mrb[0].mxu0
        %v3441 = vadd.f32 0.0, %v3440
        %v3442 = vpop.f32.mrb[0].mxu0
        %3443 = vmatprep.mubr.bf16.mxu0 0
        %3444 = vmatmul.mubr.bf16.gmra.mrb[0].mxu0 %v3346
        %v3445 = vpop.f32.mrb[0].mxu0
        %v3446 = vadd.f32 0.0, %v3445
        %v3447 = vpop.f32.mrb[0].mxu0
        %v3448 = vpop.f32.mrb[0].mxu0
        %v3449 = vadd.f32 0.0, %v3448
        %v3450 = vpop.f32.mrb[0].mxu0
        %3451 = vmatprep.mubr.bf16.mxu0 0
        %3452 = vmatmul.mubr.bf16.gmra.mrb[0].mxu0 %v3349
        %v3453 = vpop.f32.mrb[0].mxu0
        %v3454 = vadd.f32 0.0, %v3453
        %v3455 = vpop.f32.mrb[0].mxu0
        %v3456 = vpop.f32.mrb[0].mxu0
        %v3457 = vadd.f32 0.0, %v3456
        %v3458 = vpop.f32.mrb[0].mxu0
        %3459 = vmatprep.mubr.bf16.mxu0 0
        %3460 = vmatmul.mubr.bf16.gmra.mrb[0].mxu0 %v3352
        %v3461 = vpop.f32.mrb[0].mxu0
        %v3462 = vadd.f32 0.0, %v3461
        %v3463 = vpop.f32.mrb[0].mxu0
        %v3464 = vpop.f32.mrb[0].mxu0
        %v3465 = vadd.f32 0.0, %v3464
        %v3466 = vpop.f32.mrb[0].mxu0
        %3467 = vmatprep.mubr.bf16.mxu0 0
        %3468 = vmatmul.mubr.bf16.gmra.mrb[0].mxu0 %v3355
        %v3469 = vpop.f32.mrb[0].mxu0
        %v3470 = vadd.f32 0.0, %v3469
        %v3471 = vpop.f32.mrb[0].mxu0
        %v3472 = vpop.f32.mrb[0].mxu0
        %v3473 = vadd.f32 0.0, %v3472
        %v3474 = vpop.f32.mrb[0].mxu0
        %3475 = vmatprep.mubr.bf16.mxu0 0
        %3476 = vmatmul.mubr.bf16.gmra.mrb[0].mxu0 %v3358
        %v3477 = vpop.f32.mrb[0].mxu0
        %v3478 = vadd.f32 0.0, %v3477
        %v3479 = vpop.f32.mrb[0].mxu0
        %v3480 = vpop.f32.mrb[0].mxu0
        %v3481 = vadd.f32 0.0, %v3480
        %v3482 = vpop.f32.mrb[0].mxu0
        %3483 = vmatprep.mubr.bf16.mxu0 0
        %3484 = vmatmul.mubr.bf16.gmra.mrb[0].mxu0 %v3361
        %v3485 = vpop.f32.mrb[0].mxu0
        %v3486 = vadd.f32 0.0, %v3485
        %v3487 = vpop.f32.mrb[0].mxu0
        %v3488 = vpop.f32.mrb[0].mxu0
        %v3489 = vadd.f32 0.0, %v3488
        %v3490 = vpop.f32.mrb[0].mxu0
        %3491 = vmatprep.mubr.bf16.mxu0 0
        %3492 = vmatmul.mubr.bf16.gmra.mrb[0].mxu0 %v3364
        %v3493 = vpop.f32.mrb[0].mxu0
        %v3494 = vadd.f32 0.0, %v3493
        %v3495 = vpop.f32.mrb[0].mxu0
        %v3496 = vpop.f32.mrb[0].mxu0
        %v3497 = vadd.f32 0.0, %v3496
        %v3498 = vpop.f32.mrb[0].mxu0
        %3499 = vmatprep.mubr.bf16.mxu0 0
        %3500 = vmatmul.mubr.bf16.gmra.mrb[0].mxu0 %v3367
        %v3501 = vpop.f32.mrb[0].mxu0
        %v3502 = vadd.f32 0.0, %v3501
        %v3503 = vpop.f32.mrb[0].mxu0
        %v3504 = vpop.f32.mrb[0].mxu0
        %v3505 = vadd.f32 0.0, %v3504
        %v3506 = vpop.f32.mrb[0].mxu0
        %3507 = vmatprep.mubr.bf16.mxu0 0
        %3508 = vmatmul.mubr.bf16.gmra.mrb[0].mxu0 %v3370
        %v3509 = vpop.f32.mrb[0].mxu0
        %v3510 = vadd.f32 0.0, %v3509
        %v3511 = vpop.f32.mrb[0].mxu0
        %v3512 = vpop.f32.mrb[0].mxu0
        %v3513 = vadd.f32 0.0, %v3512
        %v3514 = vpop.f32.mrb[0].mxu0
        %3515 = vmatprep.mubr.bf16.mxu0 0
        %3516 = vmatmul.mubr.bf16.gmra.mrb[0].mxu0 %v3373
        %v3517 = vpop.f32.mrb[0].mxu0
        %v3518 = vadd.f32 0.0, %v3517
        %v3519 = vpop.f32.mrb[0].mxu0
        %v3520 = vpop.f32.mrb[0].mxu0
        %v3521 = vadd.f32 0.0, %v3520
        %v3522 = vpop.f32.mrb[0].mxu0
        %3523 = vmatprep.mubr.bf16.mxu0 0
        %3524 = vmatmul.mubr.bf16.gmra.mrb[0].mxu0 %v3376
        %v3525 = vpop.f32.mrb[0].mxu0
        %v3526 = vadd.f32 0.0, %v3525
        %v3527 = vpop.f32.mrb[0].mxu0
        %v3528 = vpop.f32.mrb[0].mxu0
        %v3529 = vadd.f32 0.0, %v3528
        %v3530 = vpop.f32.mrb[0].mxu0
        %3531 = vmatprep.mubr.bf16.mxu0 0
        %3532 = vmatmul.mubr.bf16.gmra.mrb[0].mxu0 %v3379
        %v3533 = vpop.f32.mrb[0].mxu0
        %v3534 = vadd.f32 0.0, %v3533
        %v3535 = vpop.f32.mrb[0].mxu0
        %v3536 = vpop.f32.mrb[0].mxu0
        %v3537 = vadd.f32 0.0, %v3536
        %v3538 = vpop.f32.mrb[0].mxu0
        %3539 = vmatprep.mubr.bf16.mxu0 0
        %3540 = vmatmul.mubr.bf16.gmra.mrb[0].mxu0 %v3382
        %v3541 = vpop.f32.mrb[0].mxu0
        %v3542 = vadd.f32 0.0, %v3541
        %v3543 = vpop.f32.mrb[0].mxu0
        %v3544 = vpop.f32.mrb[0].mxu0
        %v3545 = vadd.f32 0.0, %v3544
        %v3546 = vpop.f32.mrb[0].mxu0
        %3547 = vdwg.mxu0
        %v3548 = vadd.f32 %v3189, %v3422
        %v3549 = vadd.f32 %v3190, %v3425
        %v3550 = vadd.f32 %v3191, %v3430
        %v3551 = vadd.f32 %v3192, %v3433
        %v3552 = vadd.f32 %v3193, %v3438
        %v3553 = vadd.f32 %v3194, %v3441
        %v3554 = vadd.f32 %v3195, %v3446
        %v3555 = vadd.f32 %v3196, %v3449
        %v3556 = vadd.f32 %v3197, %v3454
        %v3557 = vadd.f32 %v3198, %v3457
        %v3558 = vadd.f32 %v3199, %v3462
        %v3559 = vadd.f32 %v3200, %v3465
        %v3560 = vadd.f32 %v3201, %v3470
        %v3561 = vadd.f32 %v3202, %v3473
        %v3562 = vadd.f32 %v3203, %v3478
        %v3563 = vadd.f32 %v3204, %v3481
        %v3564 = vadd.f32 %v3205, %v3486
        %v3565 = vadd.f32 %v3206, %v3489
        %v3566 = vadd.f32 %v3207, %v3494
        %v3567 = vadd.f32 %v3208, %v3497
        %v3568 = vadd.f32 %v3209, %v3502
        %v3569 = vadd.f32 %v3210, %v3505
        %v3570 = vadd.f32 %v3211, %v3510
        %v3571 = vadd.f32 %v3212, %v3513
        %v3572 = vadd.f32 %v3213, %v3518
        %v3573 = vadd.f32 %v3214, %v3521
        %v3574 = vadd.f32 %v3215, %v3526
        %v3575 = vadd.f32 %v3216, %v3529
        %v3576 = vadd.f32 %v3217, %v3534
        %v3577 = vadd.f32 %v3218, %v3537
        %v3578 = vadd.f32 %v3219, %v3542
        %v3579 = vadd.f32 %v3220, %v3545
        %v3580 = vld [vmem:[%s3221] sm:$0xf]
        %v3581 = vld [vmem:[%s3221 + $0x4] sm:$0xf]
        %v3582 = vld [vmem:[%s3221 + $0x8] sm:$0x1]
        %v3583 = vld [vmem:[%s3221 + $0xc] sm:$0xf]
        %v3584 = vld [vmem:[%s3221 + $0x10] sm:$0xf]
        %v3585 = vld [vmem:[%s3221 + $0x14] sm:$0x1]
        %v3586 = vld [vmem:[%s3221 + $0x18] sm:$0xf]
        %v3587 = vld [vmem:[%s3221 + $0x1c] sm:$0xf]
        %v3588 = vld [vmem:[%s3221 + $0x20] sm:$0x1]
        %v3589 = vld [vmem:[%s3221 + $0x24] sm:$0xf]
        %v3590 = vld [vmem:[%s3221 + $0x28] sm:$0xf]
        %v3591 = vld [vmem:[%s3221 + $0x2c] sm:$0x1]
        %v3592 = vld [vmem:[%s3221 + $0x30] sm:$0xf]
        %v3593 = vld [vmem:[%s3221 + $0x34] sm:$0xf]
        %v3594 = vld [vmem:[%s3221 + $0x38] sm:$0x1]
        %v3595 = vld [vmem:[%s3221 + $0x3c] sm:$0xf]
        %v3596 = vld [vmem:[%s3221 + $0x40] sm:$0xf]
        %v3597 = vld [vmem:[%s3221 + $0x44] sm:$0x1]
        %v3598 = vld [vmem:[%s3221 + $0x48] sm:$0xf]
        %v3599 = vld [vmem:[%s3221 + $0x4c] sm:$0xf]
        %v3600 = vld [vmem:[%s3221 + $0x50] sm:$0x1]
        %v3601 = vld [vmem:[%s3221 + $0x54] sm:$0xf]
        %v3602 = vld [vmem:[%s3221 + $0x58] sm:$0xf]
        %v3603 = vld [vmem:[%s3221 + $0x5c] sm:$0x1]
        %v3604 = vld [vmem:[%s3221 + $0x60] sm:$0xf]
        %v3605 = vld [vmem:[%s3221 + $0x64] sm:$0xf]
        %v3606 = vld [vmem:[%s3221 + $0x68] sm:$0x1]
        %v3607 = vld [vmem:[%s3221 + $0x6c] sm:$0xf]
        %v3608 = vld [vmem:[%s3221 + $0x70] sm:$0xf]
        %v3609 = vld [vmem:[%s3221 + $0x74] sm:$0x1]
        %v3610 = vld [vmem:[%s3221 + $0x78] sm:$0xf]
        %v3611 = vld [vmem:[%s3221 + $0x7c] sm:$0xf]
        %v3612 = vld [vmem:[%s3221 + $0x80] sm:$0x1]
        %v3613 = vld [vmem:[%s3221 + $0x84] sm:$0xf]
        %v3614 = vld [vmem:[%s3221 + $0x88] sm:$0xf]
        %v3615 = vld [vmem:[%s3221 + $0x8c] sm:$0x1]
        %v3616 = vld [vmem:[%s3221 + $0x90] sm:$0xf]
        %v3617 = vld [vmem:[%s3221 + $0x94] sm:$0xf]
        %v3618 = vld [vmem:[%s3221 + $0x98] sm:$0x1]
        %v3619 = vld [vmem:[%s3221 + $0x9c] sm:$0xf]
        %v3620 = vld [vmem:[%s3221 + $0xa0] sm:$0xf]
        %v3621 = vld [vmem:[%s3221 + $0xa4] sm:$0x1]
        %v3622 = vld [vmem:[%s3221 + $0xa8] sm:$0xf]
        %v3623 = vld [vmem:[%s3221 + $0xac] sm:$0xf]
        %v3624 = vld [vmem:[%s3221 + $0xb0] sm:$0x1]
        %v3625 = vld [vmem:[%s3221 + $0xb4] sm:$0xf]
        %v3626 = vld [vmem:[%s3221 + $0xb8] sm:$0xf]
        %v3627 = vld [vmem:[%s3221 + $0xbc] sm:$0x1]
        %v3629 = vshrl.u32 %v3580, 16
        %v3631 = vrot.slane %v3629, 4
        %v3632 = vshll.u32 %v3580, 16
        %v3634 = vrot.slane %v3632, 5
        %v3635 = vor.u32 %v3631, %v3634
        %v3636 = vrot.slane %v3635, 4
        %v3638 = vshll.u32 %v3581, 16
        %v3640 = vrot.slane %v3638, 5
        %v3641 = vsel %vm268, %v3636, %v3640
        %v3642 = vshrl.u32 %v3581, 16
        %v3644 = vrot.slane %v3642, 4
        %v3645 = vor.u32 %v3644, %v3640
        %v3646 = vrot.slane %v3645, 4
        %v3648 = vshll.u32 %v3582, 16
        %v3650 = vrot.slane %v3648, 5
        %v3651 = vsel %vm268, %v3646, %v3650
        %v3653 = vshrl.u32 %v3583, 16
        %v3655 = vrot.slane %v3653, 4
        %v3656 = vshll.u32 %v3583, 16
        %v3658 = vrot.slane %v3656, 5
        %v3659 = vor.u32 %v3655, %v3658
        %v3660 = vrot.slane %v3659, 4
        %v3662 = vshll.u32 %v3584, 16
        %v3664 = vrot.slane %v3662, 5
        %v3665 = vsel %vm268, %v3660, %v3664
        %v3666 = vshrl.u32 %v3584, 16
        %v3668 = vrot.slane %v3666, 4
        %v3669 = vor.u32 %v3668, %v3664
        %v3670 = vrot.slane %v3669, 4
        %v3672 = vshll.u32 %v3585, 16
        %v3674 = vrot.slane %v3672, 5
        %v3675 = vsel %vm268, %v3670, %v3674
        %v3677 = vshrl.u32 %v3586, 16
        %v3679 = vrot.slane %v3677, 4
        %v3680 = vshll.u32 %v3586, 16
        %v3682 = vrot.slane %v3680, 5
        %v3683 = vor.u32 %v3679, %v3682
        %v3684 = vrot.slane %v3683, 4
        %v3686 = vshll.u32 %v3587, 16
        %v3688 = vrot.slane %v3686, 5
        %v3689 = vsel %vm268, %v3684, %v3688
        %v3690 = vshrl.u32 %v3587, 16
        %v3692 = vrot.slane %v3690, 4
        %v3693 = vor.u32 %v3692, %v3688
        %v3694 = vrot.slane %v3693, 4
        %v3696 = vshll.u32 %v3588, 16
        %v3698 = vrot.slane %v3696, 5
        %v3699 = vsel %vm268, %v3694, %v3698
        %v3701 = vshrl.u32 %v3589, 16
        %v3703 = vrot.slane %v3701, 4
        %v3704 = vshll.u32 %v3589, 16
        %v3706 = vrot.slane %v3704, 5
        %v3707 = vor.u32 %v3703, %v3706
        %v3708 = vrot.slane %v3707, 4
        %v3710 = vshll.u32 %v3590, 16
        %v3712 = vrot.slane %v3710, 5
        %v3713 = vsel %vm268, %v3708, %v3712
        %v3714 = vshrl.u32 %v3590, 16
        %v3716 = vrot.slane %v3714, 4
        %v3717 = vor.u32 %v3716, %v3712
        %v3718 = vrot.slane %v3717, 4
        %v3720 = vshll.u32 %v3591, 16
        %v3722 = vrot.slane %v3720, 5
        %v3723 = vsel %vm268, %v3718, %v3722
        %v3725 = vshrl.u32 %v3592, 16
        %v3727 = vrot.slane %v3725, 4
        %v3728 = vshll.u32 %v3592, 16
        %v3730 = vrot.slane %v3728, 5
        %v3731 = vor.u32 %v3727, %v3730
        %v3732 = vrot.slane %v3731, 4
        %v3734 = vshll.u32 %v3593, 16
        %v3736 = vrot.slane %v3734, 5
        %v3737 = vsel %vm268, %v3732, %v3736
        %v3738 = vshrl.u32 %v3593, 16
        %v3740 = vrot.slane %v3738, 4
        %v3741 = vor.u32 %v3740, %v3736
        %v3742 = vrot.slane %v3741, 4
        %v3744 = vshll.u32 %v3594, 16
        %v3746 = vrot.slane %v3744, 5
        %v3747 = vsel %vm268, %v3742, %v3746
        %v3749 = vshrl.u32 %v3595, 16
        %v3751 = vrot.slane %v3749, 4
        %v3752 = vshll.u32 %v3595, 16
        %v3754 = vrot.slane %v3752, 5
        %v3755 = vor.u32 %v3751, %v3754
        %v3756 = vrot.slane %v3755, 4
        %v3758 = vshll.u32 %v3596, 16
        %v3760 = vrot.slane %v3758, 5
        %v3761 = vsel %vm268, %v3756, %v3760
        %v3762 = vshrl.u32 %v3596, 16
        %v3764 = vrot.slane %v3762, 4
        %v3765 = vor.u32 %v3764, %v3760
        %v3766 = vrot.slane %v3765, 4
        %v3768 = vshll.u32 %v3597, 16
        %v3770 = vrot.slane %v3768, 5
        %v3771 = vsel %vm268, %v3766, %v3770
        %v3773 = vshrl.u32 %v3598, 16
        %v3775 = vrot.slane %v3773, 4
        %v3776 = vshll.u32 %v3598, 16
        %v3778 = vrot.slane %v3776, 5
        %v3779 = vor.u32 %v3775, %v3778
        %v3780 = vrot.slane %v3779, 4
        %v3782 = vshll.u32 %v3599, 16
        %v3784 = vrot.slane %v3782, 5
        %v3785 = vsel %vm268, %v3780, %v3784
        %v3786 = vshrl.u32 %v3599, 16
        %v3788 = vrot.slane %v3786, 4
        %v3789 = vor.u32 %v3788, %v3784
        %v3790 = vrot.slane %v3789, 4
        %v3792 = vshll.u32 %v3600, 16
        %v3794 = vrot.slane %v3792, 5
        %v3795 = vsel %vm268, %v3790, %v3794
        %v3797 = vshrl.u32 %v3601, 16
        %v3799 = vrot.slane %v3797, 4
        %v3800 = vshll.u32 %v3601, 16
        %v3802 = vrot.slane %v3800, 5
        %v3803 = vor.u32 %v3799, %v3802
        %v3804 = vrot.slane %v3803, 4
        %v3806 = vshll.u32 %v3602, 16
        %v3808 = vrot.slane %v3806, 5
        %v3809 = vsel %vm268, %v3804, %v3808
        %v3810 = vshrl.u32 %v3602, 16
        %v3812 = vrot.slane %v3810, 4
        %v3813 = vor.u32 %v3812, %v3808
        %v3814 = vrot.slane %v3813, 4
        %v3816 = vshll.u32 %v3603, 16
        %v3818 = vrot.slane %v3816, 5
        %v3819 = vsel %vm268, %v3814, %v3818
        %v3821 = vshrl.u32 %v3604, 16
        %v3823 = vrot.slane %v3821, 4
        %v3824 = vshll.u32 %v3604, 16
        %v3826 = vrot.slane %v3824, 5
        %v3827 = vor.u32 %v3823, %v3826
        %v3828 = vrot.slane %v3827, 4
        %v3830 = vshll.u32 %v3605, 16
        %v3832 = vrot.slane %v3830, 5
        %v3833 = vsel %vm268, %v3828, %v3832
        %v3834 = vshrl.u32 %v3605, 16
        %v3836 = vrot.slane %v3834, 4
        %v3837 = vor.u32 %v3836, %v3832
        %v3838 = vrot.slane %v3837, 4
        %v3840 = vshll.u32 %v3606, 16
        %v3842 = vrot.slane %v3840, 5
        %v3843 = vsel %vm268, %v3838, %v3842
        %v3845 = vshrl.u32 %v3607, 16
        %v3847 = vrot.slane %v3845, 4
        %v3848 = vshll.u32 %v3607, 16
        %v3850 = vrot.slane %v3848, 5
        %v3851 = vor.u32 %v3847, %v3850
        %v3852 = vrot.slane %v3851, 4
        %v3854 = vshll.u32 %v3608, 16
        %v3856 = vrot.slane %v3854, 5
        %v3857 = vsel %vm268, %v3852, %v3856
        %v3858 = vshrl.u32 %v3608, 16
        %v3860 = vrot.slane %v3858, 4
        %v3861 = vor.u32 %v3860, %v3856
        %v3862 = vrot.slane %v3861, 4
        %v3864 = vshll.u32 %v3609, 16
        %v3866 = vrot.slane %v3864, 5
        %v3867 = vsel %vm268, %v3862, %v3866
        %v3869 = vshrl.u32 %v3610, 16
        %v3871 = vrot.slane %v3869, 4
        %v3872 = vshll.u32 %v3610, 16
        %v3874 = vrot.slane %v3872, 5
        %v3875 = vor.u32 %v3871, %v3874
        %v3876 = vrot.slane %v3875, 4
        %v3878 = vshll.u32 %v3611, 16
        %v3880 = vrot.slane %v3878, 5
        %v3881 = vsel %vm268, %v3876, %v3880
        %v3882 = vshrl.u32 %v3611, 16
        %v3884 = vrot.slane %v3882, 4
        %v3885 = vor.u32 %v3884, %v3880
        %v3886 = vrot.slane %v3885, 4
        %v3888 = vshll.u32 %v3612, 16
        %v3890 = vrot.slane %v3888, 5
        %v3891 = vsel %vm268, %v3886, %v3890
        %v3893 = vshrl.u32 %v3613, 16
        %v3895 = vrot.slane %v3893, 4
        %v3896 = vshll.u32 %v3613, 16
        %v3898 = vrot.slane %v3896, 5
        %v3899 = vor.u32 %v3895, %v3898
        %v3900 = vrot.slane %v3899, 4
        %v3902 = vshll.u32 %v3614, 16
        %v3904 = vrot.slane %v3902, 5
        %v3905 = vsel %vm268, %v3900, %v3904
        %v3906 = vshrl.u32 %v3614, 16
        %v3908 = vrot.slane %v3906, 4
        %v3909 = vor.u32 %v3908, %v3904
        %v3910 = vrot.slane %v3909, 4
        %v3912 = vshll.u32 %v3615, 16
        %v3914 = vrot.slane %v3912, 5
        %v3915 = vsel %vm268, %v3910, %v3914
        %v3917 = vshrl.u32 %v3616, 16
        %v3919 = vrot.slane %v3917, 4
        %v3920 = vshll.u32 %v3616, 16
        %v3922 = vrot.slane %v3920, 5
        %v3923 = vor.u32 %v3919, %v3922
        %v3924 = vrot.slane %v3923, 4
        %v3926 = vshll.u32 %v3617, 16
        %v3928 = vrot.slane %v3926, 5
        %v3929 = vsel %vm268, %v3924, %v3928
        %v3930 = vshrl.u32 %v3617, 16
        %v3932 = vrot.slane %v3930, 4
        %v3933 = vor.u32 %v3932, %v3928
        %v3934 = vrot.slane %v3933, 4
        %v3936 = vshll.u32 %v3618, 16
        %v3938 = vrot.slane %v3936, 5
        %v3939 = vsel %vm268, %v3934, %v3938
        %v3941 = vshrl.u32 %v3619, 16
        %v3943 = vrot.slane %v3941, 4
        %v3944 = vshll.u32 %v3619, 16
        %v3946 = vrot.slane %v3944, 5
        %v3947 = vor.u32 %v3943, %v3946
        %v3948 = vrot.slane %v3947, 4
        %v3950 = vshll.u32 %v3620, 16
        %v3952 = vrot.slane %v3950, 5
        %v3953 = vsel %vm268, %v3948, %v3952
        %v3954 = vshrl.u32 %v3620, 16
        %v3956 = vrot.slane %v3954, 4
        %v3957 = vor.u32 %v3956, %v3952
        %v3958 = vrot.slane %v3957, 4
        %v3960 = vshll.u32 %v3621, 16
        %v3962 = vrot.slane %v3960, 5
        %v3963 = vsel %vm268, %v3958, %v3962
        %v3965 = vshrl.u32 %v3622, 16
        %v3967 = vrot.slane %v3965, 4
        %v3968 = vshll.u32 %v3622, 16
        %v3970 = vrot.slane %v3968, 5
        %v3971 = vor.u32 %v3967, %v3970
        %v3972 = vrot.slane %v3971, 4
        %v3974 = vshll.u32 %v3623, 16
        %v3976 = vrot.slane %v3974, 5
        %v3977 = vsel %vm268, %v3972, %v3976
        %v3978 = vshrl.u32 %v3623, 16
        %v3980 = vrot.slane %v3978, 4
        %v3981 = vor.u32 %v3980, %v3976
        %v3982 = vrot.slane %v3981, 4
        %v3984 = vshll.u32 %v3624, 16
        %v3986 = vrot.slane %v3984, 5
        %v3987 = vsel %vm268, %v3982, %v3986
        %v3989 = vshrl.u32 %v3625, 16
        %v3991 = vrot.slane %v3989, 4
        %v3992 = vshll.u32 %v3625, 16
        %v3994 = vrot.slane %v3992, 5
        %v3995 = vor.u32 %v3991, %v3994
        %v3996 = vrot.slane %v3995, 4
        %v3998 = vshll.u32 %v3626, 16
        %v4000 = vrot.slane %v3998, 5
        %v4001 = vsel %vm268, %v3996, %v4000
        %v4002 = vshrl.u32 %v3626, 16
        %v4004 = vrot.slane %v4002, 4
        %v4005 = vor.u32 %v4004, %v4000
        %v4006 = vrot.slane %v4005, 4
        %v4008 = vshll.u32 %v3627, 16
        %v4010 = vrot.slane %v4008, 5
        %v4011 = vsel %vm268, %v4006, %v4010
        %s4012 = scalar_lea.vmem [#allocation5], 14
        %v4013 = vld [vmem:[%s4012] sm:$0x3]
        %v4014 = vunpack.c.l.b16 %v3641
        %v4015 = vunpack.c.l.b16 %v3651
        %v4016 = vunpack.c.l.b16 %v3665
        %v4017 = vunpack.c.l.b16 %v3675
        %v4018 = vunpack.c.l.b16 %v3689
        %v4019 = vunpack.c.l.b16 %v3699
        %v4020 = vunpack.c.l.b16 %v3713
        %v4021 = vunpack.c.l.b16 %v3723
        %v4022 = vunpack.c.l.b16 %v3737
        %v4023 = vunpack.c.l.b16 %v3747
        %v4024 = vunpack.c.l.b16 %v3761
        %v4025 = vunpack.c.l.b16 %v3771
        %v4026 = vunpack.c.l.b16 %v3785
        %v4027 = vunpack.c.l.b16 %v3795
        %v4028 = vunpack.c.l.b16 %v3809
        %v4029 = vunpack.c.l.b16 %v3819
        %v4030 = vunpack.c.l.b16 %v3833
        %v4031 = vunpack.c.l.b16 %v3843
        %v4032 = vunpack.c.l.b16 %v3857
        %v4033 = vunpack.c.l.b16 %v3867
        %v4034 = vunpack.c.l.b16 %v3881
        %v4035 = vunpack.c.l.b16 %v3891
        %v4036 = vunpack.c.l.b16 %v3905
        %v4037 = vunpack.c.l.b16 %v3915
        %v4038 = vunpack.c.l.b16 %v3929
        %v4039 = vunpack.c.l.b16 %v3939
        %v4040 = vunpack.c.l.b16 %v3953
        %v4041 = vunpack.c.l.b16 %v3963
        %v4042 = vunpack.c.l.b16 %v3977
        %v4043 = vunpack.c.l.b16 %v3987
        %v4044 = vunpack.c.l.b16 %v4001
        %v4045 = vunpack.c.l.b16 %v4011
        %v4046 = vpack.c.b16 %v4015, %v4014
        %v4047 = vpack.c.b16 %v4017, %v4016
        %v4048 = vpack.c.b16 %v4019, %v4018
        %v4049 = vpack.c.b16 %v4021, %v4020
        %v4050 = vpack.c.b16 %v4023, %v4022
        %v4051 = vpack.c.b16 %v4025, %v4024
        %v4052 = vpack.c.b16 %v4027, %v4026
        %v4053 = vpack.c.b16 %v4029, %v4028
        %v4054 = vpack.c.b16 %v4031, %v4030
        %v4055 = vpack.c.b16 %v4033, %v4032
        %v4056 = vpack.c.b16 %v4035, %v4034
        %v4057 = vpack.c.b16 %v4037, %v4036
        %v4058 = vpack.c.b16 %v4039, %v4038
        %v4059 = vpack.c.b16 %v4041, %v4040
        %v4060 = vpack.c.b16 %v4043, %v4042
        %v4061 = vpack.c.b16 %v4045, %v4044
        %v4063 = vsel %vm703, %v4046, 0
        %v4066 = vsel %vm703, %v4047, 0
        %v4069 = vsel %vm703, %v4048, 0
        %v4072 = vsel %vm703, %v4049, 0
        %v4075 = vsel %vm703, %v4050, 0
        %v4078 = vsel %vm703, %v4051, 0
        %v4081 = vsel %vm703, %v4052, 0
        %v4084 = vsel %vm703, %v4053, 0
        %v4087 = vsel %vm703, %v4054, 0
        %v4090 = vsel %vm703, %v4055, 0
        %v4093 = vsel %vm703, %v4056, 0
        %v4096 = vsel %vm703, %v4057, 0
        %v4099 = vsel %vm703, %v4058, 0
        %v4102 = vsel %vm703, %v4059, 0
        %v4105 = vsel %vm703, %v4060, 0
        %v4108 = vsel %vm703, %v4061, 0
        %v4111 = vsel %vm752, %v4013, 0
        %4113 = vmatprep.subr.bf16.mxu0 0
        %4114 = vmatpush1.bf16.msra.mxu0 %v4111
        %4115 = vmatprep.subr.bf16.mxu0 0
        %4116 = vmatpush1.bf16.msra.mxu0 0
        %4117 = vmatprep.subr.bf16.mxu0 0
        %4118 = vmatpush1.bf16.msra.mxu0 0
        %4119 = vmatprep.subr.bf16.mxu0 0
        %4120 = vmatpush1.bf16.msra.mxu0 0
        %4121 = vmatprep.subr.bf16.mxu0 0
        %4122 = vmatpush1.bf16.msra.mxu0 0
        %4123 = vmatprep.subr.bf16.mxu0 0
        %4124 = vmatpush1.bf16.msra.mxu0 0
        %4125 = vmatprep.subr.bf16.mxu0 0
        %4126 = vmatpush1.bf16.msra.mxu0 0
        %4127 = vmatprep.subr.bf16.mxu0 0
        %4128 = vmatpush1.bf16.msra.mxu0 0
        %4129 = vmatprep.subr.bf16.mxu0 0
        %4130 = vmatpush1.bf16.msra.mxu0 0
        %4131 = vmatprep.subr.bf16.mxu0 0
        %4132 = vmatpush1.bf16.msra.mxu0 0
        %4133 = vmatprep.subr.bf16.mxu0 0
        %4134 = vmatpush1.bf16.msra.mxu0 0
        %4135 = vmatprep.subr.bf16.mxu0 0
        %4136 = vmatpush1.bf16.msra.mxu0 0
        %4137 = vmatprep.subr.bf16.mxu0 0
        %4138 = vmatpush1.bf16.msra.mxu0 0
        %4139 = vmatprep.subr.bf16.mxu0 0
        %4140 = vmatpush1.bf16.msra.mxu0 0
        %4141 = vmatprep.subr.bf16.mxu0 0
        %4142 = vmatpush1.bf16.msra.mxu0 0
        %4143 = vmatprep.subr.bf16.mxu0 0
        %4144 = vmatpush1.bf16.msra.mxu0 0
        %4145 = vmatprep.mubr.bf16.mxu0 0
        %4146 = vmatmul.mubr.bf16.gmra.mrb[0].mxu0 %v4063
        %v4147 = vpop.f32.mrb[0].mxu0
        %v4148 = vadd.f32 0.0, %v4147
        %v4149 = vpop.f32.mrb[0].mxu0
        %v4150 = vpop.f32.mrb[0].mxu0
        %v4151 = vadd.f32 0.0, %v4150
        %v4152 = vpop.f32.mrb[0].mxu0
        %4153 = vmatprep.mubr.bf16.mxu0 0
        %4154 = vmatmul.mubr.bf16.gmra.mrb[0].mxu0 %v4066
        %v4155 = vpop.f32.mrb[0].mxu0
        %v4156 = vadd.f32 0.0, %v4155
        %v4157 = vpop.f32.mrb[0].mxu0
        %v4158 = vpop.f32.mrb[0].mxu0
        %v4159 = vadd.f32 0.0, %v4158
        %v4160 = vpop.f32.mrb[0].mxu0
        %4161 = vmatprep.mubr.bf16.mxu0 0
        %4162 = vmatmul.mubr.bf16.gmra.mrb[0].mxu0 %v4069
        %v4163 = vpop.f32.mrb[0].mxu0
        %v4164 = vadd.f32 0.0, %v4163
        %v4165 = vpop.f32.mrb[0].mxu0
        %v4166 = vpop.f32.mrb[0].mxu0
        %v4167 = vadd.f32 0.0, %v4166
        %v4168 = vpop.f32.mrb[0].mxu0
        %4169 = vmatprep.mubr.bf16.mxu0 0
        %4170 = vmatmul.mubr.bf16.gmra.mrb[0].mxu0 %v4072
        %v4171 = vpop.f32.mrb[0].mxu0
        %v4172 = vadd.f32 0.0, %v4171
        %v4173 = vpop.f32.mrb[0].mxu0
        %v4174 = vpop.f32.mrb[0].mxu0
        %v4175 = vadd.f32 0.0, %v4174
        %v4176 = vpop.f32.mrb[0].mxu0
        %4177 = vmatprep.mubr.bf16.mxu0 0
        %4178 = vmatmul.mubr.bf16.gmra.mrb[0].mxu0 %v4075
        %v4179 = vpop.f32.mrb[0].mxu0
        %v4180 = vadd.f32 0.0, %v4179
        %v4181 = vpop.f32.mrb[0].mxu0
        %v4182 = vpop.f32.mrb[0].mxu0
        %v4183 = vadd.f32 0.0, %v4182
        %v4184 = vpop.f32.mrb[0].mxu0
        %4185 = vmatprep.mubr.bf16.mxu0 0
        %4186 = vmatmul.mubr.bf16.gmra.mrb[0].mxu0 %v4078
        %v4187 = vpop.f32.mrb[0].mxu0
        %v4188 = vadd.f32 0.0, %v4187
        %v4189 = vpop.f32.mrb[0].mxu0
        %v4190 = vpop.f32.mrb[0].mxu0
        %v4191 = vadd.f32 0.0, %v4190
        %v4192 = vpop.f32.mrb[0].mxu0
        %4193 = vmatprep.mubr.bf16.mxu0 0
        %4194 = vmatmul.mubr.bf16.gmra.mrb[0].mxu0 %v4081
        %v4195 = vpop.f32.mrb[0].mxu0
        %v4196 = vadd.f32 0.0, %v4195
        %v4197 = vpop.f32.mrb[0].mxu0
        %v4198 = vpop.f32.mrb[0].mxu0
        %v4199 = vadd.f32 0.0, %v4198
        %v4200 = vpop.f32.mrb[0].mxu0
        %4201 = vmatprep.mubr.bf16.mxu0 0
        %4202 = vmatmul.mubr.bf16.gmra.mrb[0].mxu0 %v4084
        %v4203 = vpop.f32.mrb[0].mxu0
        %v4204 = vadd.f32 0.0, %v4203
        %v4205 = vpop.f32.mrb[0].mxu0
        %v4206 = vpop.f32.mrb[0].mxu0
        %v4207 = vadd.f32 0.0, %v4206
        %v4208 = vpop.f32.mrb[0].mxu0
        %4209 = vmatprep.mubr.bf16.mxu0 0
        %4210 = vmatmul.mubr.bf16.gmra.mrb[0].mxu0 %v4087
        %v4211 = vpop.f32.mrb[0].mxu0
        %v4212 = vadd.f32 0.0, %v4211
        %v4213 = vpop.f32.mrb[0].mxu0
        %v4214 = vpop.f32.mrb[0].mxu0
        %v4215 = vadd.f32 0.0, %v4214
        %v4216 = vpop.f32.mrb[0].mxu0
        %4217 = vmatprep.mubr.bf16.mxu0 0
        %4218 = vmatmul.mubr.bf16.gmra.mrb[0].mxu0 %v4090
        %v4219 = vpop.f32.mrb[0].mxu0
        %v4220 = vadd.f32 0.0, %v4219
        %v4221 = vpop.f32.mrb[0].mxu0
        %v4222 = vpop.f32.mrb[0].mxu0
        %v4223 = vadd.f32 0.0, %v4222
        %v4224 = vpop.f32.mrb[0].mxu0
        %4225 = vmatprep.mubr.bf16.mxu0 0
        %4226 = vmatmul.mubr.bf16.gmra.mrb[0].mxu0 %v4093
        %v4227 = vpop.f32.mrb[0].mxu0
        %v4228 = vadd.f32 0.0, %v4227
        %v4229 = vpop.f32.mrb[0].mxu0
        %v4230 = vpop.f32.mrb[0].mxu0
        %v4231 = vadd.f32 0.0, %v4230
        %v4232 = vpop.f32.mrb[0].mxu0
        %4233 = vmatprep.mubr.bf16.mxu0 0
        %4234 = vmatmul.mubr.bf16.gmra.mrb[0].mxu0 %v4096
        %v4235 = vpop.f32.mrb[0].mxu0
        %v4236 = vadd.f32 0.0, %v4235
        %v4237 = vpop.f32.mrb[0].mxu0
        %v4238 = vpop.f32.mrb[0].mxu0
        %v4239 = vadd.f32 0.0, %v4238
        %v4240 = vpop.f32.mrb[0].mxu0
        %4241 = vmatprep.mubr.bf16.mxu0 0
        %4242 = vmatmul.mubr.bf16.gmra.mrb[0].mxu0 %v4099
        %v4243 = vpop.f32.mrb[0].mxu0
        %v4244 = vadd.f32 0.0, %v4243
        %v4245 = vpop.f32.mrb[0].mxu0
        %v4246 = vpop.f32.mrb[0].mxu0
        %v4247 = vadd.f32 0.0, %v4246
        %v4248 = vpop.f32.mrb[0].mxu0
        %4249 = vmatprep.mubr.bf16.mxu0 0
        %4250 = vmatmul.mubr.bf16.gmra.mrb[0].mxu0 %v4102
        %v4251 = vpop.f32.mrb[0].mxu0
        %v4252 = vadd.f32 0.0, %v4251
        %v4253 = vpop.f32.mrb[0].mxu0
        %v4254 = vpop.f32.mrb[0].mxu0
        %v4255 = vadd.f32 0.0, %v4254
        %v4256 = vpop.f32.mrb[0].mxu0
        %4257 = vmatprep.mubr.bf16.mxu0 0
        %4258 = vmatmul.mubr.bf16.gmra.mrb[0].mxu0 %v4105
        %v4259 = vpop.f32.mrb[0].mxu0
        %v4260 = vadd.f32 0.0, %v4259
        %v4261 = vpop.f32.mrb[0].mxu0
        %v4262 = vpop.f32.mrb[0].mxu0
        %v4263 = vadd.f32 0.0, %v4262
        %v4264 = vpop.f32.mrb[0].mxu0
        %4265 = vmatprep.mubr.bf16.mxu0 0
        %4266 = vmatmul.mubr.bf16.gmra.mrb[0].mxu0 %v4108
        %v4267 = vpop.f32.mrb[0].mxu0
        %v4268 = vadd.f32 0.0, %v4267
        %v4269 = vpop.f32.mrb[0].mxu0
        %v4270 = vpop.f32.mrb[0].mxu0
        %v4271 = vadd.f32 0.0, %v4270
        %v4272 = vpop.f32.mrb[0].mxu0
        %4273 = vdwg.mxu0
        %v4274 = vadd.f32 %v3548, %v4148
        %v4275 = vadd.f32 %v3549, %v4151
        %v4276 = vadd.f32 %v3550, %v4156
        %v4277 = vadd.f32 %v3551, %v4159
        %v4278 = vadd.f32 %v3552, %v4164
        %v4279 = vadd.f32 %v3553, %v4167
        %v4280 = vadd.f32 %v3554, %v4172
        %v4281 = vadd.f32 %v3555, %v4175
        %v4282 = vadd.f32 %v3556, %v4180
        %v4283 = vadd.f32 %v3557, %v4183
        %v4284 = vadd.f32 %v3558, %v4188
        %v4285 = vadd.f32 %v3559, %v4191
        %v4286 = vadd.f32 %v3560, %v4196
        %v4287 = vadd.f32 %v3561, %v4199
        %v4288 = vadd.f32 %v3562, %v4204
        %v4289 = vadd.f32 %v3563, %v4207
        %v4290 = vadd.f32 %v3564, %v4212
        %v4291 = vadd.f32 %v3565, %v4215
        %v4292 = vadd.f32 %v3566, %v4220
        %v4293 = vadd.f32 %v3567, %v4223
        %v4294 = vadd.f32 %v3568, %v4228
        %v4295 = vadd.f32 %v3569, %v4231
        %v4296 = vadd.f32 %v3570, %v4236
        %v4297 = vadd.f32 %v3571, %v4239
        %v4298 = vadd.f32 %v3572, %v4244
        %v4299 = vadd.f32 %v3573, %v4247
        %v4300 = vadd.f32 %v3574, %v4252
        %v4301 = vadd.f32 %v3575, %v4255
        %v4302 = vadd.f32 %v3576, %v4260
        %v4303 = vadd.f32 %v3577, %v4263
        %v4304 = vadd.f32 %v3578, %v4268
        %v4305 = vadd.f32 %v3579, %v4271
        %v4306 = vld [vmem:[%s3221] sm:$0xe]
        %v4307 = vld [vmem:[%s3221 + $0xc] sm:$0xe]
        %v4308 = vld [vmem:[%s3221 + $0x18] sm:$0xe]
        %v4309 = vld [vmem:[%s3221 + $0x24] sm:$0xe]
        %v4310 = vld [vmem:[%s3221 + $0x30] sm:$0xe]
        %v4311 = vld [vmem:[%s3221 + $0x3c] sm:$0xe]
        %v4312 = vld [vmem:[%s3221 + $0x48] sm:$0xe]
        %v4313 = vld [vmem:[%s3221 + $0x54] sm:$0xe]
        %v4314 = vld [vmem:[%s3221 + $0x60] sm:$0xe]
        %v4315 = vld [vmem:[%s3221 + $0x6c] sm:$0xe]
        %v4316 = vld [vmem:[%s3221 + $0x78] sm:$0xe]
        %v4317 = vld [vmem:[%s3221 + $0x84] sm:$0xe]
        %v4318 = vld [vmem:[%s3221 + $0x90] sm:$0xe]
        %v4319 = vld [vmem:[%s3221 + $0x9c] sm:$0xe]
        %v4320 = vld [vmem:[%s3221 + $0xa8] sm:$0xe]
        %v4321 = vld [vmem:[%s3221 + $0xb4] sm:$0xe]
        %v4370 = vrot.slane %v4306, 5
        %v4371 = vrot.slane %v4370, 4
        %v4372 = vrot.slane %v3581, 5
        %v4373 = vsel %vm1259, %v4371, %v4372
        %v4374 = vrot.slane %v4372, 4
        %v4375 = vrot.slane %v3582, 5
        %v4376 = vsel %vm1259, %v4374, %v4375
        %v4377 = vrot.slane %v4307, 5
        %v4378 = vrot.slane %v4377, 4
        %v4379 = vrot.slane %v3584, 5
        %v4380 = vsel %vm1259, %v4378, %v4379
        %v4381 = vrot.slane %v4379, 4
        %v4382 = vrot.slane %v3585, 5
        %v4383 = vsel %vm1259, %v4381, %v4382
        %v4384 = vrot.slane %v4308, 5
        %v4385 = vrot.slane %v4384, 4
        %v4386 = vrot.slane %v3587, 5
        %v4387 = vsel %vm1259, %v4385, %v4386
        %v4388 = vrot.slane %v4386, 4
        %v4389 = vrot.slane %v3588, 5
        %v4390 = vsel %vm1259, %v4388, %v4389
        %v4391 = vrot.slane %v4309, 5
        %v4392 = vrot.slane %v4391, 4
        %v4393 = vrot.slane %v3590, 5
        %v4394 = vsel %vm1259, %v4392, %v4393
        %v4395 = vrot.slane %v4393, 4
        %v4396 = vrot.slane %v3591, 5
        %v4397 = vsel %vm1259, %v4395, %v4396
        %v4398 = vrot.slane %v4310, 5
        %v4399 = vrot.slane %v4398, 4
        %v4400 = vrot.slane %v3593, 5
        %v4401 = vsel %vm1259, %v4399, %v4400
        %v4402 = vrot.slane %v4400, 4
        %v4403 = vrot.slane %v3594, 5
        %v4404 = vsel %vm1259, %v4402, %v4403
        %v4405 = vrot.slane %v4311, 5
        %v4406 = vrot.slane %v4405, 4
        %v4407 = vrot.slane %v3596, 5
        %v4408 = vsel %vm1259, %v4406, %v4407
        %v4409 = vrot.slane %v4407, 4
        %v4410 = vrot.slane %v3597, 5
        %v4411 = vsel %vm1259, %v4409, %v4410
        %v4412 = vrot.slane %v4312, 5
        %v4413 = vrot.slane %v4412, 4
        %v4414 = vrot.slane %v3599, 5
        %v4415 = vsel %vm1259, %v4413, %v4414
        %v4416 = vrot.slane %v4414, 4
        %v4417 = vrot.slane %v3600, 5
        %v4418 = vsel %vm1259, %v4416, %v4417
        %v4419 = vrot.slane %v4313, 5
        %v4420 = vrot.slane %v4419, 4
        %v4421 = vrot.slane %v3602, 5
        %v4422 = vsel %vm1259, %v4420, %v4421
        %v4423 = vrot.slane %v4421, 4
        %v4424 = vrot.slane %v3603, 5
        %v4425 = vsel %vm1259, %v4423, %v4424
        %v4426 = vrot.slane %v4314, 5
        %v4427 = vrot.slane %v4426, 4
        %v4428 = vrot.slane %v3605, 5
        %v4429 = vsel %vm1259, %v4427, %v4428
        %v4430 = vrot.slane %v4428, 4
        %v4431 = vrot.slane %v3606, 5
        %v4432 = vsel %vm1259, %v4430, %v4431
        %v4433 = vrot.slane %v4315, 5
        %v4434 = vrot.slane %v4433, 4
        %v4435 = vrot.slane %v3608, 5
        %v4436 = vsel %vm1259, %v4434, %v4435
        %v4437 = vrot.slane %v4435, 4
        %v4438 = vrot.slane %v3609, 5
        %v4439 = vsel %vm1259, %v4437, %v4438
        %v4440 = vrot.slane %v4316, 5
        %v4441 = vrot.slane %v4440, 4
        %v4442 = vrot.slane %v3611, 5
        %v4443 = vsel %vm1259, %v4441, %v4442
        %v4444 = vrot.slane %v4442, 4
        %v4445 = vrot.slane %v3612, 5
        %v4446 = vsel %vm1259, %v4444, %v4445
        %v4447 = vrot.slane %v4317, 5
        %v4448 = vrot.slane %v4447, 4
        %v4449 = vrot.slane %v3614, 5
        %v4450 = vsel %vm1259, %v4448, %v4449
        %v4451 = vrot.slane %v4449, 4
        %v4452 = vrot.slane %v3615, 5
        %v4453 = vsel %vm1259, %v4451, %v4452
        %v4454 = vrot.slane %v4318, 5
        %v4455 = vrot.slane %v4454, 4
        %v4456 = vrot.slane %v3617, 5
        %v4457 = vsel %vm1259, %v4455, %v4456
        %v4458 = vrot.slane %v4456, 4
        %v4459 = vrot.slane %v3618, 5
        %v4460 = vsel %vm1259, %v4458, %v4459
        %v4461 = vrot.slane %v4319, 5
        %v4462 = vrot.slane %v4461, 4
        %v4463 = vrot.slane %v3620, 5
        %v4464 = vsel %vm1259, %v4462, %v4463
        %v4465 = vrot.slane %v4463, 4
        %v4466 = vrot.slane %v3621, 5
        %v4467 = vsel %vm1259, %v4465, %v4466
        %v4468 = vrot.slane %v4320, 5
        %v4469 = vrot.slane %v4468, 4
        %v4470 = vrot.slane %v3623, 5
        %v4471 = vsel %vm1259, %v4469, %v4470
        %v4472 = vrot.slane %v4470, 4
        %v4473 = vrot.slane %v3624, 5
        %v4474 = vsel %vm1259, %v4472, %v4473
        %v4475 = vrot.slane %v4321, 5
        %v4476 = vrot.slane %v4475, 4
        %v4477 = vrot.slane %v3626, 5
        %v4478 = vsel %vm1259, %v4476, %v4477
        %v4479 = vrot.slane %v4477, 4
        %v4480 = vrot.slane %v3627, 5
        %v4481 = vsel %vm1259, %v4479, %v4480
        %s4482 = scalar_lea.vmem [#allocation5], 16
        %v4483 = vld [vmem:[%s4482] sm:$0x3]
        %v4484 = vunpack.c.l.b16 %v4373
        %v4485 = vunpack.c.l.b16 %v4376
        %v4486 = vunpack.c.l.b16 %v4380
        %v4487 = vunpack.c.l.b16 %v4383
        %v4488 = vunpack.c.l.b16 %v4387
        %v4489 = vunpack.c.l.b16 %v4390
        %v4490 = vunpack.c.l.b16 %v4394
        %v4491 = vunpack.c.l.b16 %v4397
        %v4492 = vunpack.c.l.b16 %v4401
        %v4493 = vunpack.c.l.b16 %v4404
        %v4494 = vunpack.c.l.b16 %v4408
        %v4495 = vunpack.c.l.b16 %v4411
        %v4496 = vunpack.c.l.b16 %v4415
        %v4497 = vunpack.c.l.b16 %v4418
        %v4498 = vunpack.c.l.b16 %v4422
        %v4499 = vunpack.c.l.b16 %v4425
        %v4500 = vunpack.c.l.b16 %v4429
        %v4501 = vunpack.c.l.b16 %v4432
        %v4502 = vunpack.c.l.b16 %v4436
        %v4503 = vunpack.c.l.b16 %v4439
        %v4504 = vunpack.c.l.b16 %v4443
        %v4505 = vunpack.c.l.b16 %v4446
        %v4506 = vunpack.c.l.b16 %v4450
        %v4507 = vunpack.c.l.b16 %v4453
        %v4508 = vunpack.c.l.b16 %v4457
        %v4509 = vunpack.c.l.b16 %v4460
        %v4510 = vunpack.c.l.b16 %v4464
        %v4511 = vunpack.c.l.b16 %v4467
        %v4512 = vunpack.c.l.b16 %v4471
        %v4513 = vunpack.c.l.b16 %v4474
        %v4514 = vunpack.c.l.b16 %v4478
        %v4515 = vunpack.c.l.b16 %v4481
        %v4516 = vpack.c.b16 %v4485, %v4484
        %v4517 = vpack.c.b16 %v4487, %v4486
        %v4518 = vpack.c.b16 %v4489, %v4488
        %v4519 = vpack.c.b16 %v4491, %v4490
        %v4520 = vpack.c.b16 %v4493, %v4492
        %v4521 = vpack.c.b16 %v4495, %v4494
        %v4522 = vpack.c.b16 %v4497, %v4496
        %v4523 = vpack.c.b16 %v4499, %v4498
        %v4524 = vpack.c.b16 %v4501, %v4500
        %v4525 = vpack.c.b16 %v4503, %v4502
        %v4526 = vpack.c.b16 %v4505, %v4504
        %v4527 = vpack.c.b16 %v4507, %v4506
        %v4528 = vpack.c.b16 %v4509, %v4508
        %v4529 = vpack.c.b16 %v4511, %v4510
        %v4530 = vpack.c.b16 %v4513, %v4512
        %v4531 = vpack.c.b16 %v4515, %v4514
        %v4533 = vsel %vm703, %v4516, 0
        %v4536 = vsel %vm703, %v4517, 0
        %v4539 = vsel %vm703, %v4518, 0
        %v4542 = vsel %vm703, %v4519, 0
        %v4545 = vsel %vm703, %v4520, 0
        %v4548 = vsel %vm703, %v4521, 0
        %v4551 = vsel %vm703, %v4522, 0
        %v4554 = vsel %vm703, %v4523, 0
        %v4557 = vsel %vm703, %v4524, 0
        %v4560 = vsel %vm703, %v4525, 0
        %v4563 = vsel %vm703, %v4526, 0
        %v4566 = vsel %vm703, %v4527, 0
        %v4569 = vsel %vm703, %v4528, 0
        %v4572 = vsel %vm703, %v4529, 0
        %v4575 = vsel %vm703, %v4530, 0
        %v4578 = vsel %vm703, %v4531, 0
        %v4581 = vsel %vm752, %v4483, 0
        %4583 = vmatprep.subr.bf16.mxu0 0
        %4584 = vmatpush1.bf16.msra.mxu0 %v4581
        %4585 = vmatprep.subr.bf16.mxu0 0
        %4586 = vmatpush1.bf16.msra.mxu0 0
        %4587 = vmatprep.subr.bf16.mxu0 0
        %4588 = vmatpush1.bf16.msra.mxu0 0
        %4589 = vmatprep.subr.bf16.mxu0 0
        %4590 = vmatpush1.bf16.msra.mxu0 0
        %4591 = vmatprep.subr.bf16.mxu0 0
        %4592 = vmatpush1.bf16.msra.mxu0 0
        %4593 = vmatprep.subr.bf16.mxu0 0
        %4594 = vmatpush1.bf16.msra.mxu0 0
        %4595 = vmatprep.subr.bf16.mxu0 0
        %4596 = vmatpush1.bf16.msra.mxu0 0
        %4597 = vmatprep.subr.bf16.mxu0 0
        %4598 = vmatpush1.bf16.msra.mxu0 0
        %4599 = vmatprep.subr.bf16.mxu0 0
        %4600 = vmatpush1.bf16.msra.mxu0 0
        %4601 = vmatprep.subr.bf16.mxu0 0
        %4602 = vmatpush1.bf16.msra.mxu0 0
        %4603 = vmatprep.subr.bf16.mxu0 0
        %4604 = vmatpush1.bf16.msra.mxu0 0
        %4605 = vmatprep.subr.bf16.mxu0 0
        %4606 = vmatpush1.bf16.msra.mxu0 0
        %4607 = vmatprep.subr.bf16.mxu0 0
        %4608 = vmatpush1.bf16.msra.mxu0 0
        %4609 = vmatprep.subr.bf16.mxu0 0
        %4610 = vmatpush1.bf16.msra.mxu0 0
        %4611 = vmatprep.subr.bf16.mxu0 0
        %4612 = vmatpush1.bf16.msra.mxu0 0
        %4613 = vmatprep.subr.bf16.mxu0 0
        %4614 = vmatpush1.bf16.msra.mxu0 0
        %4615 = vmatprep.mubr.bf16.mxu0 0
        %4616 = vmatmul.mubr.bf16.gmra.mrb[0].mxu0 %v4533
        %v4617 = vpop.f32.mrb[0].mxu0
        %v4618 = vadd.f32 0.0, %v4617
        %v4619 = vpop.f32.mrb[0].mxu0
        %v4620 = vpop.f32.mrb[0].mxu0
        %v4621 = vadd.f32 0.0, %v4620
        %v4622 = vpop.f32.mrb[0].mxu0
        %4623 = vmatprep.mubr.bf16.mxu0 0
        %4624 = vmatmul.mubr.bf16.gmra.mrb[0].mxu0 %v4536
        %v4625 = vpop.f32.mrb[0].mxu0
        %v4626 = vadd.f32 0.0, %v4625
        %v4627 = vpop.f32.mrb[0].mxu0
        %v4628 = vpop.f32.mrb[0].mxu0
        %v4629 = vadd.f32 0.0, %v4628
        %v4630 = vpop.f32.mrb[0].mxu0
        %4631 = vmatprep.mubr.bf16.mxu0 0
        %4632 = vmatmul.mubr.bf16.gmra.mrb[0].mxu0 %v4539
        %v4633 = vpop.f32.mrb[0].mxu0
        %v4634 = vadd.f32 0.0, %v4633
        %v4635 = vpop.f32.mrb[0].mxu0
        %v4636 = vpop.f32.mrb[0].mxu0
        %v4637 = vadd.f32 0.0, %v4636
        %v4638 = vpop.f32.mrb[0].mxu0
        %4639 = vmatprep.mubr.bf16.mxu0 0
        %4640 = vmatmul.mubr.bf16.gmra.mrb[0].mxu0 %v4542
        %v4641 = vpop.f32.mrb[0].mxu0
        %v4642 = vadd.f32 0.0, %v4641
        %v4643 = vpop.f32.mrb[0].mxu0
        %v4644 = vpop.f32.mrb[0].mxu0
        %v4645 = vadd.f32 0.0, %v4644
        %v4646 = vpop.f32.mrb[0].mxu0
        %4647 = vmatprep.mubr.bf16.mxu0 0
        %4648 = vmatmul.mubr.bf16.gmra.mrb[0].mxu0 %v4545
        %v4649 = vpop.f32.mrb[0].mxu0
        %v4650 = vadd.f32 0.0, %v4649
        %v4651 = vpop.f32.mrb[0].mxu0
        %v4652 = vpop.f32.mrb[0].mxu0
        %v4653 = vadd.f32 0.0, %v4652
        %v4654 = vpop.f32.mrb[0].mxu0
        %4655 = vmatprep.mubr.bf16.mxu0 0
        %4656 = vmatmul.mubr.bf16.gmra.mrb[0].mxu0 %v4548
        %v4657 = vpop.f32.mrb[0].mxu0
        %v4658 = vadd.f32 0.0, %v4657
        %v4659 = vpop.f32.mrb[0].mxu0
        %v4660 = vpop.f32.mrb[0].mxu0
        %v4661 = vadd.f32 0.0, %v4660
        %v4662 = vpop.f32.mrb[0].mxu0
        %4663 = vmatprep.mubr.bf16.mxu0 0
        %4664 = vmatmul.mubr.bf16.gmra.mrb[0].mxu0 %v4551
        %v4665 = vpop.f32.mrb[0].mxu0
        %v4666 = vadd.f32 0.0, %v4665
        %v4667 = vpop.f32.mrb[0].mxu0
        %v4668 = vpop.f32.mrb[0].mxu0
        %v4669 = vadd.f32 0.0, %v4668
        %v4670 = vpop.f32.mrb[0].mxu0
        %4671 = vmatprep.mubr.bf16.mxu0 0
        %4672 = vmatmul.mubr.bf16.gmra.mrb[0].mxu0 %v4554
        %v4673 = vpop.f32.mrb[0].mxu0
        %v4674 = vadd.f32 0.0, %v4673
        %v4675 = vpop.f32.mrb[0].mxu0
        %v4676 = vpop.f32.mrb[0].mxu0
        %v4677 = vadd.f32 0.0, %v4676
        %v4678 = vpop.f32.mrb[0].mxu0
        %4679 = vmatprep.mubr.bf16.mxu0 0
        %4680 = vmatmul.mubr.bf16.gmra.mrb[0].mxu0 %v4557
        %v4681 = vpop.f32.mrb[0].mxu0
        %v4682 = vadd.f32 0.0, %v4681
        %v4683 = vpop.f32.mrb[0].mxu0
        %v4684 = vpop.f32.mrb[0].mxu0
        %v4685 = vadd.f32 0.0, %v4684
        %v4686 = vpop.f32.mrb[0].mxu0
        %4687 = vmatprep.mubr.bf16.mxu0 0
        %4688 = vmatmul.mubr.bf16.gmra.mrb[0].mxu0 %v4560
        %v4689 = vpop.f32.mrb[0].mxu0
        %v4690 = vadd.f32 0.0, %v4689
        %v4691 = vpop.f32.mrb[0].mxu0
        %v4692 = vpop.f32.mrb[0].mxu0
        %v4693 = vadd.f32 0.0, %v4692
        %v4694 = vpop.f32.mrb[0].mxu0
        %4695 = vmatprep.mubr.bf16.mxu0 0
        %4696 = vmatmul.mubr.bf16.gmra.mrb[0].mxu0 %v4563
        %v4697 = vpop.f32.mrb[0].mxu0
        %v4698 = vadd.f32 0.0, %v4697
        %v4699 = vpop.f32.mrb[0].mxu0
        %v4700 = vpop.f32.mrb[0].mxu0
        %v4701 = vadd.f32 0.0, %v4700
        %v4702 = vpop.f32.mrb[0].mxu0
        %4703 = vmatprep.mubr.bf16.mxu0 0
        %4704 = vmatmul.mubr.bf16.gmra.mrb[0].mxu0 %v4566
        %v4705 = vpop.f32.mrb[0].mxu0
        %v4706 = vadd.f32 0.0, %v4705
        %v4707 = vpop.f32.mrb[0].mxu0
        %v4708 = vpop.f32.mrb[0].mxu0
        %v4709 = vadd.f32 0.0, %v4708
        %v4710 = vpop.f32.mrb[0].mxu0
        %4711 = vmatprep.mubr.bf16.mxu0 0
        %4712 = vmatmul.mubr.bf16.gmra.mrb[0].mxu0 %v4569
        %v4713 = vpop.f32.mrb[0].mxu0
        %v4714 = vadd.f32 0.0, %v4713
        %v4715 = vpop.f32.mrb[0].mxu0
        %v4716 = vpop.f32.mrb[0].mxu0
        %v4717 = vadd.f32 0.0, %v4716
        %v4718 = vpop.f32.mrb[0].mxu0
        %4719 = vmatprep.mubr.bf16.mxu0 0
        %4720 = vmatmul.mubr.bf16.gmra.mrb[0].mxu0 %v4572
        %v4721 = vpop.f32.mrb[0].mxu0
        %v4722 = vadd.f32 0.0, %v4721
        %v4723 = vpop.f32.mrb[0].mxu0
        %v4724 = vpop.f32.mrb[0].mxu0
        %v4725 = vadd.f32 0.0, %v4724
        %v4726 = vpop.f32.mrb[0].mxu0
        %4727 = vmatprep.mubr.bf16.mxu0 0
        %4728 = vmatmul.mubr.bf16.gmra.mrb[0].mxu0 %v4575
        %v4729 = vpop.f32.mrb[0].mxu0
        %v4730 = vadd.f32 0.0, %v4729
        %v4731 = vpop.f32.mrb[0].mxu0
        %v4732 = vpop.f32.mrb[0].mxu0
        %v4733 = vadd.f32 0.0, %v4732
        %v4734 = vpop.f32.mrb[0].mxu0
        %4735 = vmatprep.mubr.bf16.mxu0 0
        %4736 = vmatmul.mubr.bf16.gmra.mrb[0].mxu0 %v4578
        %v4737 = vpop.f32.mrb[0].mxu0
        %v4738 = vadd.f32 0.0, %v4737
        %v4739 = vpop.f32.mrb[0].mxu0
        %v4740 = vpop.f32.mrb[0].mxu0
        %v4741 = vadd.f32 0.0, %v4740
        %v4742 = vpop.f32.mrb[0].mxu0
        %4743 = vdwg.mxu0
        %v4744 = vadd.f32 %v4274, %v4618
        %v4745 = vadd.f32 %v4275, %v4621
        %v4746 = vadd.f32 %v4276, %v4626
        %v4747 = vadd.f32 %v4277, %v4629
        %v4748 = vadd.f32 %v4278, %v4634
        %v4749 = vadd.f32 %v4279, %v4637
        %v4750 = vadd.f32 %v4280, %v4642
        %v4751 = vadd.f32 %v4281, %v4645
        %v4752 = vadd.f32 %v4282, %v4650
        %v4753 = vadd.f32 %v4283, %v4653
        %v4754 = vadd.f32 %v4284, %v4658
        %v4755 = vadd.f32 %v4285, %v4661
        %v4756 = vadd.f32 %v4286, %v4666
        %v4757 = vadd.f32 %v4287, %v4669
        %v4758 = vadd.f32 %v4288, %v4674
        %v4759 = vadd.f32 %v4289, %v4677
        %v4760 = vadd.f32 %v4290, %v4682
        %v4761 = vadd.f32 %v4291, %v4685
        %v4762 = vadd.f32 %v4292, %v4690
        %v4763 = vadd.f32 %v4293, %v4693
        %v4764 = vadd.f32 %v4294, %v4698
        %v4765 = vadd.f32 %v4295, %v4701
        %v4766 = vadd.f32 %v4296, %v4706
        %v4767 = vadd.f32 %v4297, %v4709
        %v4768 = vadd.f32 %v4298, %v4714
        %v4769 = vadd.f32 %v4299, %v4717
        %v4770 = vadd.f32 %v4300, %v4722
        %v4771 = vadd.f32 %v4301, %v4725
        %v4772 = vadd.f32 %v4302, %v4730
        %v4773 = vadd.f32 %v4303, %v4733
        %v4774 = vadd.f32 %v4304, %v4738
        %v4775 = vadd.f32 %v4305, %v4741
        %v4776 = vld [vmem:[#allocation7] sm:$0x1]
        %v4778 = vlaneseq
        %v4779 = vshrl.u32 %v4778, 7
        %v4780 = vsub.s32 0, %v4779
        %v4781 = vrot.slane %v4776, %v4780
        %v4783 = vadd.f32 %v4744, %v4781
        %v4784 = vadd.f32 %v4745, %v4781
        %v4785 = vadd.f32 %v4746, %v4781
        %v4786 = vadd.f32 %v4747, %v4781
        %v4787 = vadd.f32 %v4748, %v4781
        %v4788 = vadd.f32 %v4749, %v4781
        %v4789 = vadd.f32 %v4750, %v4781
        %v4790 = vadd.f32 %v4751, %v4781
        %v4791 = vadd.f32 %v4752, %v4781
        %v4792 = vadd.f32 %v4753, %v4781
        %v4793 = vadd.f32 %v4754, %v4781
        %v4794 = vadd.f32 %v4755, %v4781
        %v4795 = vadd.f32 %v4756, %v4781
        %v4796 = vadd.f32 %v4757, %v4781
        %v4797 = vadd.f32 %v4758, %v4781
        %v4798 = vadd.f32 %v4759, %v4781
        %v4799 = vadd.f32 %v4760, %v4781
        %v4800 = vadd.f32 %v4761, %v4781
        %v4801 = vadd.f32 %v4762, %v4781
        %v4802 = vadd.f32 %v4763, %v4781
        %v4803 = vadd.f32 %v4764, %v4781
        %v4804 = vadd.f32 %v4765, %v4781
        %v4805 = vadd.f32 %v4766, %v4781
        %v4806 = vadd.f32 %v4767, %v4781
        %v4807 = vadd.f32 %v4768, %v4781
        %v4808 = vadd.f32 %v4769, %v4781
        %v4809 = vadd.f32 %v4770, %v4781
        %v4810 = vadd.f32 %v4771, %v4781
        %v4811 = vadd.f32 %v4772, %v4781
        %v4812 = vadd.f32 %v4773, %v4781
        %v4813 = vadd.f32 %v4774, %v4781
        %v4814 = vadd.f32 %v4775, %v4781
        %v4815 = vmax.f32 %v4783, 0.0
        %v4816 = vmax.f32 %v4784, 0.0
        %v4817 = vmax.f32 %v4785, 0.0
        %v4818 = vmax.f32 %v4786, 0.0
        %v4819 = vmax.f32 %v4787, 0.0
        %v4820 = vmax.f32 %v4788, 0.0
        %v4821 = vmax.f32 %v4789, 0.0
        %v4822 = vmax.f32 %v4790, 0.0
        %v4823 = vmax.f32 %v4791, 0.0
        %v4824 = vmax.f32 %v4792, 0.0
        %v4825 = vmax.f32 %v4793, 0.0
        %v4826 = vmax.f32 %v4794, 0.0
        %v4827 = vmax.f32 %v4795, 0.0
        %v4828 = vmax.f32 %v4796, 0.0
        %v4829 = vmax.f32 %v4797, 0.0
        %v4830 = vmax.f32 %v4798, 0.0
        %v4831 = vmax.f32 %v4799, 0.0
        %v4832 = vmax.f32 %v4800, 0.0
        %v4833 = vmax.f32 %v4801, 0.0
        %v4834 = vmax.f32 %v4802, 0.0
        %v4835 = vmax.f32 %v4803, 0.0
        %v4836 = vmax.f32 %v4804, 0.0
        %v4837 = vmax.f32 %v4805, 0.0
        %v4838 = vmax.f32 %v4806, 0.0
        %v4839 = vmax.f32 %v4807, 0.0
        %v4840 = vmax.f32 %v4808, 0.0
        %v4841 = vmax.f32 %v4809, 0.0
        %v4842 = vmax.f32 %v4810, 0.0
        %v4843 = vmax.f32 %v4811, 0.0
        %v4844 = vmax.f32 %v4812, 0.0
        %v4845 = vmax.f32 %v4813, 0.0
        %v4846 = vmax.f32 %v4814, 0.0
        %4847 = vxpose.xlu0.b32.start [1/16] %v4815, 128
        %4848 = vxpose.xlu0.b32.cont [2/16] %v4816, 128
        %4849 = vxpose.xlu0.b32.cont [3/16] %v4817, 128
        %4850 = vxpose.xlu0.b32.cont [4/16] %v4818, 128
        %4851 = vxpose.xlu0.b32.cont [5/16] %v4819, 128
        %4852 = vxpose.xlu0.b32.cont [6/16] %v4820, 128
        %4853 = vxpose.xlu0.b32.cont [7/16] %v4821, 128
        %4854 = vxpose.xlu0.b32.cont [8/16] %v4822, 128
        %4855 = vxpose.xlu0.b32.cont [9/16] %v4823, 128
        %4856 = vxpose.xlu0.b32.cont [10/16] %v4824, 128
        %4857 = vxpose.xlu0.b32.cont [11/16] %v4825, 128
        %4858 = vxpose.xlu0.b32.cont [12/16] %v4826, 128
        %4859 = vxpose.xlu0.b32.cont [13/16] %v4827, 128
        %4860 = vxpose.xlu0.b32.cont [14/16] %v4828, 128
        %4861 = vxpose.xlu0.b32.cont [15/16] %v4829, 128
        %4862 = vxpose.xlu0.b32.end [16/16] %v4830, 128
        %v4863 = vpop.trf.xlu0
        %v4864 = vpop.trf.xlu0
        %v4865 = vpop.trf.xlu0
        %v4866 = vpop.trf.xlu0
        %v4867 = vpop.trf.xlu0
        %v4868 = vpop.trf.xlu0
        %v4869 = vpop.trf.xlu0
        %v4870 = vpop.trf.xlu0
        %v4871 = vpop.trf.xlu0
        %v4872 = vpop.trf.xlu0
        %v4873 = vpop.trf.xlu0
        %v4874 = vpop.trf.xlu0
        %v4875 = vpop.trf.xlu0
        %v4876 = vpop.trf.xlu0
        %v4877 = vpop.trf.xlu0
        %v4878 = vpop.trf.xlu0
        %4879 = vxpose.xlu0.b32.start [1/16] %v4831, 128
        %4880 = vxpose.xlu0.b32.cont [2/16] %v4832, 128
        %4881 = vxpose.xlu0.b32.cont [3/16] %v4833, 128
        %4882 = vxpose.xlu0.b32.cont [4/16] %v4834, 128
        %4883 = vxpose.xlu0.b32.cont [5/16] %v4835, 128
        %4884 = vxpose.xlu0.b32.cont [6/16] %v4836, 128
        %4885 = vxpose.xlu0.b32.cont [7/16] %v4837, 128
        %4886 = vxpose.xlu0.b32.cont [8/16] %v4838, 128
        %4887 = vxpose.xlu0.b32.cont [9/16] %v4839, 128
        %4888 = vxpose.xlu0.b32.cont [10/16] %v4840, 128
        %4889 = vxpose.xlu0.b32.cont [11/16] %v4841, 128
        %4890 = vxpose.xlu0.b32.cont [12/16] %v4842, 128
        %4891 = vxpose.xlu0.b32.cont [13/16] %v4843, 128
        %4892 = vxpose.xlu0.b32.cont [14/16] %v4844, 128
        %4893 = vxpose.xlu0.b32.cont [15/16] %v4845, 128
        %4894 = vxpose.xlu0.b32.end [16/16] %v4846, 128
        %v4895 = vpop.trf.xlu0
        %v4896 = vpop.trf.xlu0
        %v4897 = vpop.trf.xlu0
        %v4898 = vpop.trf.xlu0
        %v4899 = vpop.trf.xlu0
        %v4900 = vpop.trf.xlu0
        %v4901 = vpop.trf.xlu0
        %v4902 = vpop.trf.xlu0
        %v4903 = vpop.trf.xlu0
        %v4904 = vpop.trf.xlu0
        %v4905 = vpop.trf.xlu0
        %v4906 = vpop.trf.xlu0
        %v4907 = vpop.trf.xlu0
        %v4908 = vpop.trf.xlu0
        %v4909 = vpop.trf.xlu0
        %v4910 = vpop.trf.xlu0
        %4911 = vst [vmem:[%s215] sm:$0xff] %v4863
        %4912 = vst [vmem:[%s215 + $0x8] sm:$0xff] %v4895
        %4913 = vst [vmem:[%s215 + $0x10] sm:$0xff] %v4864
        %4914 = vst [vmem:[%s215 + $0x18] sm:$0xff] %v4896
        %4915 = vst [vmem:[%s215 + $0x20] sm:$0xff] %v4865
        %4916 = vst [vmem:[%s215 + $0x28] sm:$0xff] %v4897
        %4917 = vst [vmem:[%s215 + $0x30] sm:$0xff] %v4866
        %4918 = vst [vmem:[%s215 + $0x38] sm:$0xff] %v4898
        %4919 = vst [vmem:[%s215 + $0x40] sm:$0xff] %v4867
        %4920 = vst [vmem:[%s215 + $0x48] sm:$0xff] %v4899
        %4921 = vst [vmem:[%s215 + $0x50] sm:$0xff] %v4868
        %4922 = vst [vmem:[%s215 + $0x58] sm:$0xff] %v4900
        %4923 = vst [vmem:[%s215 + $0x60] sm:$0xff] %v4869
        %4924 = vst [vmem:[%s215 + $0x68] sm:$0xff] %v4901
        %4925 = vst [vmem:[%s215 + $0x70] sm:$0xff] %v4870
        %4926 = vst [vmem:[%s215 + $0x78] sm:$0xff] %v4902
        %4927 = vst [vmem:[%s215 + $0x80] sm:$0xff] %v4871
        %4928 = vst [vmem:[%s215 + $0x88] sm:$0xff] %v4903
        %4929 = vst [vmem:[%s215 + $0x90] sm:$0xff] %v4872
        %4930 = vst [vmem:[%s215 + $0x98] sm:$0xff] %v4904
        %4931 = vst [vmem:[%s215 + $0xa0] sm:$0xff] %v4873
        %4932 = vst [vmem:[%s215 + $0xa8] sm:$0xff] %v4905
        %4933 = vst [vmem:[%s215 + $0xb0] sm:$0xff] %v4874
        %4934 = vst [vmem:[%s215 + $0xb8] sm:$0xff] %v4906
        %4935 = vst [vmem:[%s215 + $0xc0] sm:$0xff] %v4875
        %4936 = vst [vmem:[%s215 + $0xc8] sm:$0xff] %v4907
        %4937 = vst [vmem:[%s215 + $0xd0] sm:$0xff] %v4876
        %4938 = vst [vmem:[%s215 + $0xd8] sm:$0xff] %v4908
        %4939 = vst [vmem:[%s215 + $0xe0] sm:$0xff] %v4877
        %4940 = vst [vmem:[%s215 + $0xe8] sm:$0xff] %v4909
        %4941 = vst [vmem:[%s215 + $0xf0] sm:$0xff] %v4878
        %4942 = vst [vmem:[%s215 + $0xf8] sm:$0xff] %v4910
        %s4943 = sand.u32 %s97, 1
        %s4944 = scalar_lea.sflag [#allocation4], %s4943
        %s4945 = sand.u32 %s97, 1
        %s4946 = smul.addr %s4945, 256
        %s4947 = scalar_lea.vmem [#allocation8], %s4946
        // Predicated region
        $region45: #{basic_conv2d.1} parent=31 // pred_check
          %p4948 = pneg %p107
        $region46: #{basic_conv2d.1} parent=31 // pred_check_branch
          %4950 = sbr.rel (%p4948) target = $region48
        $region47: #{basic_conv2d.1} parent=31 // pred_region
          %s4952 = ssub.s32 4096, 4096
          %4953 = vsyncadd %s4944, %s4952
          %s4954 = smul.addr %s21, 32
          %s4955 = smul.addr %s4954, 128
          %s4956 = scalar_lea.hbm %s3, %s4955
          %s4957 = sshll.u32 %s4947, 4
          %s4958 = int_to_ptr.vmem [resolvable:$true] %s4957
          %4963 = dma.vmem_to_hbm [thread:$0]  %s4958, 4096, %s4956, %s4944, 256, 256, 16
        $region48: #{basic_conv2d.1} parent=31 // pred_fallthru
          _
      $region32: #{basic_conv2d.1} parent=5 // pred_fallthru
        _
      %p4964 = scmp.le.s32.totalorder 2, %s16
      // Predicated region
      $region49: #{basic_conv2d.1} parent=5 // pred_check
        %p4965 = pneg %p4964
      $region50: #{basic_conv2d.1} parent=5 // pred_check_branch
        %4967 = sbr.rel (%p4965) target = $region52
      $region51: #{basic_conv2d.1} parent=5 // pred_region
        %s4968 = ssub.s32 %s16, 2
        // Predicated region
        $region53: #{basic_conv2d.1} parent=51 // pred_check
          %p4969 = pneg %p113
        $region54: #{basic_conv2d.1} parent=51 // pred_check_branch
          %4971 = sbr.rel (%p4969) target = $region56
        $region55: #{basic_conv2d.1} parent=51 // pred_region
          %s4972 = sand.u32 %s98, 1
          %s4973 = scalar_lea.sflag [#allocation4], %s4972
          %s4974 = sand.u32 %s98, 1
          %s4975 = smul.addr %s4974, 256
          %s4976 = scalar_lea.vmem [#allocation8], %s4975
          %4977 = dma.done %s4973, 4096
        $region56: #{basic_conv2d.1} parent=51 // pred_fallthru
          _
      $region52: #{basic_conv2d.1} parent=5 // pred_fallthru
        _
    $region6: #{basic_conv2d.1} parent=1 // loop_footer
      %s20 = sadd.s32 1, %s16
    $region7: #{basic_conv2d.1} parent=1 // loop_footer_branch
      %15 = sbr.rel target = $region3
    $region8: #{basic_conv2d.1} parent=1 // loop_exit
      _
    %4978 = vsyncpa [#allocation3], 1
    %s4979 = scalar_lea.sflag [#allocation3], 1
    %4980 = vsyncpa %s4979, 1
    %4981 = vsyncpa [#allocation6], 1
    %4982 = vsyncpa [#allocation4], 1
    %s4983 = scalar_lea.sflag [#allocation4], 1
    %4984 = vsyncpa %s4983, 1

</llo_original>
